<compile_context>
chip_gen: v6e
topology: v6e:2x2x1
jax: 0.10.0
libtpu: 0.0.40
codegen_flags: <defaults>
</compile_context>

<pallas_src>
import jax
import jax.numpy as jnp
from jax.experimental import pallas as pl
from jax.experimental.pallas import tpu as pltpu

IN_FEATURES = 8192
HIDDEN = 100
OUT_FEATURES = 10
LANE = 128  # TPU vreg lane width; narrow feature dims are padded up to this


def _round_up(x, m):
    return ((x + m - 1) // m) * m


def _q_kernel(x_ref, w1_ref, b1_ref, w2_ref, b2_ref, o_ref):
    """Fused MLP on one M-tile.

    x_ref : (TM, 8192) native dtype   w1_ref: (8192, 128) bf16   b1_ref: (1, 128) f32
    w2_ref: (128, 128) bf16           b2_ref: (1, 128) f32       o_ref : (TM, 128) f32
    """
    # In-VMEM cast of the x tile to bf16 (VPU op, no extra HBM traffic) so both
    # matmuls run the fast bf16 MXU path; accumulation stays f32.
    xb = x_ref[...].astype(jnp.bfloat16)
    h = jnp.dot(xb, w1_ref[...], preferred_element_type=jnp.float32)
    h = jnp.maximum(h + b1_ref[...], 0.0)                      # bias + ReLU in f32
    o = jnp.dot(h.astype(jnp.bfloat16), w2_ref[...],
                preferred_element_type=jnp.float32)
    o_ref[...] = (o + b2_ref[...]).astype(o_ref.dtype)


def prepare_q_params(w1, b1, w2, b2):
    """One-time (model-load) weight prep.  Cache the result and reuse it across
    q_forward calls.  PyTorch layout in: w1 (100, 8192), b1 (100,), w2 (10, 100),
    b2 (10,).  Returns lane-dense, transposed, bf16 weights (biases stay f32)."""
    w1_p = jnp.zeros((IN_FEATURES, LANE), jnp.bfloat16).at[:, :HIDDEN].set(
        w1.T.astype(jnp.bfloat16))
    b1_p = jnp.zeros((1, LANE), jnp.float32).at[0, :HIDDEN].set(
        b1.astype(jnp.float32))
    w2_p = jnp.zeros((LANE, LANE), jnp.bfloat16).at[:HIDDEN, :OUT_FEATURES].set(
        w2.T.astype(jnp.bfloat16))
    b2_p = jnp.zeros((1, LANE), jnp.float32).at[0, :OUT_FEATURES].set(
        b2.astype(jnp.float32))
    return w1_p, b1_p, w2_p, b2_p


def _vmem_capacity_bytes():
    try:
        cap = getattr(pltpu.get_tpu_info(), "vmem_capacity_bytes", None)
        if cap:
            return int(cap)
    except Exception:
        pass
    return 64 * 1024 * 1024  # conservative default = v7x per-TC VMEM


def q_forward(x, params, *, tm=None):
    """Q.forward.  `params` = prepare_q_params(w1, b1, w2, b2) (computed once)."""
    w1_p, b1_p, w2_p, b2_p = params
    x2 = x.reshape(-1, IN_FEATURES)          # stream x as-is: no wrapper-side cast
    m = x2.shape[0]
    if m == 0:
        return jnp.zeros((0, OUT_FEATURES), jnp.float32)

    # ---- generation-aware M tile / VMEM budget ----
    x_item = x2.dtype.itemsize
    if _vmem_capacity_bytes() >= 100 * 1024 * 1024:   # v5e / v6e: 128 MiB VMEM
        tm_cap = 2048 if x_item <= 2 else 1024
        vmem_limit = 96 * 1024 * 1024
    else:                                             # v7x: 64 MiB per TensorCore
        tm_cap = 1024 if x_item <= 2 else 512
        vmem_limit = 56 * 1024 * 1024

    m8 = _round_up(m, 8)
    tm_eff = tm_cap if tm is None else min(tm, tm_cap)
    if m8 > 8:
        # >=2 grid steps so the "parallel" axis has work for both v7x TensorCores
        tm_eff = min(tm_eff, _round_up(pl.cdiv(m8, 2), 8))
    tm_eff = max(8, min(_round_up(tm_eff, 8), m8))

    grid = pl.cdiv(m, tm_eff)  # ragged last block: OOB rows masked on store,
                               # no zero-padded copy of x is ever materialized.

    out = pl.pallas_call(
        _q_kernel,
        out_shape=jax.ShapeDtypeStruct((m, LANE), jnp.float32),
        grid_spec=pltpu.PrefetchScalarGridSpec(
            num_scalar_prefetch=0,
            grid=(grid,),
            in_specs=[
                pl.BlockSpec((tm_eff, IN_FEATURES), lambda i: (i, 0)),  # x tile
                pl.BlockSpec((IN_FEATURES, LANE), lambda i: (0, 0)),    # w1 (resident)
                pl.BlockSpec((1, LANE), lambda i: (0, 0)),              # b1
                pl.BlockSpec((LANE, LANE), lambda i: (0, 0)),           # w2
                pl.BlockSpec((1, LANE), lambda i: (0, 0)),              # b2
            ],
            out_specs=pl.BlockSpec((tm_eff, LANE), lambda i: (i, 0)),
        ),
        compiler_params=pltpu.CompilerParams(
            dimension_semantics=("parallel",),   # rows split across TCs on v7x
            vmem_limit_bytes=vmem_limit,
        ),
    )(x2, w1_p, b1_p, w2_p, b2_p)

    # drop the lane padding of the 10-wide output (padded rows never stored)
    return out[:, :OUT_FEATURES]


if __name__ == "__main__":
    key = jax.random.PRNGKey(0)
    kx, k1, kb1, k2, kb2 = jax.random.split(key, 5)

    w1 = 0.02 * jax.random.normal(k1, (HIDDEN, IN_FEATURES), dtype=jnp.float32)
    b1 = 0.02 * jax.random.normal(kb1, (HIDDEN,), dtype=jnp.float32)
    w2 = 0.02 * jax.random.normal(k2, (OUT_FEATURES, HIDDEN), dtype=jnp.float32)
    b2 = 0.02 * jax.random.normal(kb2, (OUT_FEATURES,), dtype=jnp.float32)

    # Weight prep done ONCE (model load), reused for every forward call.
    params = jax.tree_util.tree_map(jax.block_until_ready,
                                    prepare_q_params(w1, b1, w2, b2))

    def ref_fn(xin):
        x2 = xin.reshape(-1, IN_FEATURES)
        return jnp.maximum(x2 @ w1.T + b1, 0.0) @ w2.T + b2

    ok = True

    # Canonical Q-head input: flattened (N, 512, 4, 4) trunk features -> (N, 8192)
    N = 2
    x = jax.random.normal(kx, (N, 512, 4, 4), dtype=jnp.float32)
    out = jax.block_until_ready(q_forward(x, params))
    ref = ref_fn(x)
    ok &= out.shape == (N, OUT_FEATURES)
    ok &= bool(jnp.allclose(out, ref, atol=2e-2, rtol=2e-2))

    # Larger batch: exercises the multi-step grid + ragged last block path.
    N2 = 24
    x_big = jax.random.normal(kx, (N2, 512, 4, 4), dtype=jnp.float32)
    out_big = jax.block_until_ready(q_forward(x_big, params))
    ref_big = ref_fn(x_big)
    ok &= out_big.shape == (N2, OUT_FEATURES)
    ok &= bool(jnp.allclose(out_big, ref_big, atol=2e-2, rtol=2e-2))

    assert ok, (float(jnp.max(jnp.abs(out - ref))),
                float(jnp.max(jnp.abs(out_big - ref_big))))
    print("KERNEL_OK")
</pallas_src>

<mosaic_0001>
module attributes {stable_mosaic.version = 11 : i64} {
  func.func @_q_kernel(%arg0: i32, %arg1: memref<8x8192xf32, #tpu.memory_space<vmem>>, %arg2: memref<8192x128xbf16, #tpu.memory_space<vmem>>, %arg3: memref<1x128xf32, #tpu.memory_space<vmem>>, %arg4: memref<128x128xbf16, #tpu.memory_space<vmem>>, %arg5: memref<1x128xf32, #tpu.memory_space<vmem>>, %arg6: memref<8x128xf32, #tpu.memory_space<vmem>>) attributes {dimension_semantics = [#tpu.dimension_semantics<parallel>], iteration_bounds = array<i64: 1>, scalar_prefetch = 0 : i64, scratch_operands = 0 : i64, tpu.core_type = #tpu.core_type<tc>, window_params = [{transform_indices = @transform_0, window_bounds = array<i64: 8, 8192>}, {pipeline_mode = #tpu.pipeline_mode<synchronous>, transform_indices = @transform_1, window_bounds = array<i64: 8192, 128>}, {pipeline_mode = #tpu.pipeline_mode<synchronous>, transform_indices = @transform_2, window_bounds = array<i64: 1, 128>}, {pipeline_mode = #tpu.pipeline_mode<synchronous>, transform_indices = @transform_3, window_bounds = array<i64: 128, 128>}, {pipeline_mode = #tpu.pipeline_mode<synchronous>, transform_indices = @transform_4, window_bounds = array<i64: 1, 128>}, {transform_indices = @transform_5, window_bounds = array<i64: 8, 128>}]} {
    %c0 = arith.constant 0 : index
    %c0_0 = arith.constant 0 : index
    %0 = vector.load %arg1[%c0, %c0_0] : memref<8x8192xf32, #tpu.memory_space<vmem>>, vector<8x8192xf32>
    %1 = arith.truncf %0 : vector<8x8192xf32> to vector<8x8192xbf16>
    %c0_1 = arith.constant 0 : index
    %c0_2 = arith.constant 0 : index
    %2 = vector.load %arg2[%c0_1, %c0_2] : memref<8192x128xbf16, #tpu.memory_space<vmem>>, vector<8192x128xbf16>
    %cst = arith.constant dense<0.000000e+00> : vector<8x128xf32>
    %3 = tpu.matmul %1, %2, %cst {dimension_numbers = #tpu.dot_dimension_numbers<[1], [0], [0], [1], [0, 0, 1, 1], [], []>} : vector<8x8192xbf16>, vector<8192x128xbf16>, vector<8x128xf32> -> vector<8x128xf32>
    %c0_3 = arith.constant 0 : index
    %c0_4 = arith.constant 0 : index
    %4 = vector.load %arg3[%c0_3, %c0_4] : memref<1x128xf32, #tpu.memory_space<vmem>>, vector<1x128xf32>
    %5 = vector.broadcast %4 : vector<1x128xf32> to vector<8x128xf32>
    %6 = arith.addf %3, %5 : vector<8x128xf32>
    %cst_5 = arith.constant 0.000000e+00 : f32
    %7 = vector.broadcast %cst_5 : f32 to vector<8x128xf32>
    %8 = arith.maximumf %6, %7 : vector<8x128xf32>
    %9 = arith.truncf %8 : vector<8x128xf32> to vector<8x128xbf16>
    %c0_6 = arith.constant 0 : index
    %c0_7 = arith.constant 0 : index
    %10 = vector.load %arg4[%c0_6, %c0_7] : memref<128x128xbf16, #tpu.memory_space<vmem>>, vector<128x128xbf16>
    %cst_8 = arith.constant dense<0.000000e+00> : vector<8x128xf32>
    %11 = tpu.matmul %9, %10, %cst_8 {dimension_numbers = #tpu.dot_dimension_numbers<[1], [0], [0], [1], [0, 0, 1, 1], [], []>} : vector<8x128xbf16>, vector<128x128xbf16>, vector<8x128xf32> -> vector<8x128xf32>
    %c0_9 = arith.constant 0 : index
    %c0_10 = arith.constant 0 : index
    %12 = vector.load %arg5[%c0_9, %c0_10] : memref<1x128xf32, #tpu.memory_space<vmem>>, vector<1x128xf32>
    %13 = vector.broadcast %12 : vector<1x128xf32> to vector<8x128xf32>
    %14 = arith.addf %11, %13 : vector<8x128xf32>
    %c0_11 = arith.constant 0 : index
    %c0_12 = arith.constant 0 : index
    %15 = vector.load %arg6[%c0_11, %c0_12] : memref<8x128xf32, #tpu.memory_space<vmem>>, vector<8x128xf32>
    tpu.vector_store %arg6[%c0_11, %c0_12], %14 {strides = array<i32>} : memref<8x128xf32, #tpu.memory_space<vmem>>, vector<8x128xf32>,
    return
  }
  func.func @transform_0(%arg0: i32) -> (i32, i32) {
    %c0_i32 = arith.constant 0 : i32
    %c0_i32_0 = arith.constant 0 : i32
    return %arg0, %c0_i32 : i32, i32
  }
  func.func @transform_1(%arg0: i32) -> (i32, i32) {
    %c0_i32 = arith.constant 0 : i32
    %c0_i32_0 = arith.constant 0 : i32
    %c0_i32_1 = arith.constant 0 : i32
    return %c0_i32, %c0_i32_0 : i32, i32
  }
  func.func @transform_2(%arg0: i32) -> (i32, i32) {
    %c0_i32 = arith.constant 0 : i32
    %c0_i32_0 = arith.constant 0 : i32
    %c0_i32_1 = arith.constant 0 : i32
    return %c0_i32, %c0_i32_0 : i32, i32
  }
  func.func @transform_3(%arg0: i32) -> (i32, i32) {
    %c0_i32 = arith.constant 0 : i32
    %c0_i32_0 = arith.constant 0 : i32
    %c0_i32_1 = arith.constant 0 : i32
    return %c0_i32, %c0_i32_0 : i32, i32
  }
  func.func @transform_4(%arg0: i32) -> (i32, i32) {
    %c0_i32 = arith.constant 0 : i32
    %c0_i32_0 = arith.constant 0 : i32
    %c0_i32_1 = arith.constant 0 : i32
    return %c0_i32, %c0_i32_0 : i32, i32
  }
  func.func @transform_5(%arg0: i32) -> (i32, i32) {
    %c0_i32 = arith.constant 0 : i32
    %c0_i32_0 = arith.constant 0 : i32
    return %arg0, %c0_i32 : i32, i32
  }
}

</mosaic_0001>

<llo_original>
// kernel: tpu_custom_call.1
$region0: #{tpu_custom_call.1}
  #allocation0 [shape = 'u32[]', space=smem, size = 0x4, offset = 0x4, fixed_abs, tag = 'smem constant byte address 0x4 - core index']
  #allocation1 [shape = 'u32[144,128]{1,0:T(1,128)}', space=vmem, size = 0x12000, scoped, tag = 'internal scratch']
  %s0 = inlined_call_operand.hbm [shape: f32[2,8192], index: 0, kind: input, shape index: {}]
  %s1 = inlined_call_operand.hbm [shape: bf16[8192,128], index: 1, kind: input, shape index: {}]
  %s2 = inlined_call_operand.hbm [shape: f32[1,128], index: 2, kind: input, shape index: {}]
  %s3 = inlined_call_operand.hbm [shape: bf16[128,128], index: 3, kind: input, shape index: {}]
  %s4 = inlined_call_operand.hbm [shape: f32[1,128], index: 4, kind: input, shape index: {}]
  %s5 = inlined_call_operand.hbm [shape: f32[2,128], index: 5, kind: output, shape index: {}]
  %s6 = sld [smem:[#allocation0]]
  $region50: #{tpu_custom_call.1} parent=0
    _
  %s8 = ssub.s32 1, %s6
  %s9 = scalar_select 0, %s8, %s6
  $region1: #{tpu_custom_call.1} parent=0
    #allocation2 [shape = 'u8[262144]{0}', space=vmem, size = 0x40000, scoped, tag = 'input window, operand 0, single buffered']
    #allocation3 [shape = 's32[1]{0}', space=sflag, size = 0x4, scoped, tag = 'scoped memory for tpu_custom_call.1']
    #allocation4 [shape = 's32[1]{0}', space=sflag, size = 0x4, scoped, tag = 'scoped memory for tpu_custom_call.1']
    #allocation5 [shape = 'u8[2097152]{0}', space=vmem, size = 0x200000, scoped, tag = 'input window, operand 1, single buffered']
    #allocation6 [shape = 's32[1]{0}', space=sflag, size = 0x4, scoped, tag = 'scoped memory for tpu_custom_call.1']
    #allocation7 [shape = 'u8[512]{0}', space=vmem, size = 0x400, scoped, tag = 'input window, operand 2, single buffered']
    #allocation8 [shape = 'u8[32768]{0}', space=vmem, size = 0x8000, scoped, tag = 'input window, operand 3, single buffered']
    #allocation9 [shape = 's32[1]{0}', space=sflag, size = 0x4, scoped, tag = 'scoped memory for tpu_custom_call.1']
    #allocation10 [shape = 'u8[512]{0}', space=vmem, size = 0x400, scoped, tag = 'input window, operand 4, single buffered']
    #allocation11 [shape = 'u8[4096]{0}', space=vmem, size = 0x1000, scoped, tag = 'output window, operand 0, single buffered']
    %10 = vsyncpa [#allocation3], 0
    %11 = vsyncpa [#allocation6], 0
    %12 = vsyncpa [#allocation9], 0
    %13 = vsyncpa [#allocation4], 0
    // Predicated region
    $region2: #{tpu_custom_call.1} parent=1 // pred_check
      _
    $region3: #{tpu_custom_call.1} parent=1 // pred_check_branch
      %15 = sbr.rel (0) target = $region5
    $region4: #{tpu_custom_call.1} parent=1 // pred_region
      %s17 = ssub.s32 8192, 2048
      %18 = vsyncadd [#allocation3], %s17
      %s19 = sshll.u32 [#allocation2], 4
      %s20 = int_to_ptr.vmem [resolvable:$true] %s19
      %25 = dma.hbm_to_vmem [thread:$0]  %s0, 2048, %s20, [#allocation3], 2048, 2048, 128
    $region5: #{tpu_custom_call.1} parent=1 // pred_fallthru
      _
    // Predicated region
    $region6: #{tpu_custom_call.1} parent=1 // pred_check
      _
    $region7: #{tpu_custom_call.1} parent=1 // pred_check_branch
      %27 = sbr.rel (0) target = $region9
    $region8: #{tpu_custom_call.1} parent=1 // pred_region
      %s29 = ssub.s32 65536, 65536
      %30 = vsyncadd [#allocation6], %s29
      %s31 = sshll.u32 [#allocation5], 4
      %s32 = int_to_ptr.vmem [resolvable:$true] %s31
      %37 = dma.hbm_to_vmem [thread:$0]  %s1, 65536, %s32, [#allocation6], 64, 64, 4
    $region9: #{tpu_custom_call.1} parent=1 // pred_fallthru
      _
    // Predicated region
    $region10: #{tpu_custom_call.1} parent=1 // pred_check
      _
    $region11: #{tpu_custom_call.1} parent=1 // pred_check_branch
      %39 = sbr.rel (0) target = $region13
    $region12: #{tpu_custom_call.1} parent=1 // pred_region
      %s41 = ssub.s32 16, 16
      %42 = vsyncadd [#allocation6], %s41
      %s44 = sshll.u32 [#allocation7], 4
      %s45 = int_to_ptr.vmem [resolvable:$true] %s44
      %47 = dma.hbm_to_vmem [thread:$0]  %s2, 16, %s45, [#allocation6]
    $region13: #{tpu_custom_call.1} parent=1 // pred_fallthru
      _
    // Predicated region
    $region14: #{tpu_custom_call.1} parent=1 // pred_check
      _
    $region15: #{tpu_custom_call.1} parent=1 // pred_check_branch
      %49 = sbr.rel (0) target = $region17
    $region16: #{tpu_custom_call.1} parent=1 // pred_region
      %s51 = ssub.s32 1024, 1024
      %52 = vsyncadd [#allocation9], %s51
      %s53 = sshll.u32 [#allocation8], 4
      %s54 = int_to_ptr.vmem [resolvable:$true] %s53
      %59 = dma.hbm_to_vmem [thread:$0]  %s3, 1024, %s54, [#allocation9], 64, 64, 4
    $region17: #{tpu_custom_call.1} parent=1 // pred_fallthru
      _
    // Predicated region
    $region18: #{tpu_custom_call.1} parent=1 // pred_check
      _
    $region19: #{tpu_custom_call.1} parent=1 // pred_check_branch
      %61 = sbr.rel (0) target = $region21
    $region20: #{tpu_custom_call.1} parent=1 // pred_region
      %s63 = ssub.s32 16, 16
      %64 = vsyncadd [#allocation9], %s63
      %s66 = sshll.u32 [#allocation10], 4
      %s67 = int_to_ptr.vmem [resolvable:$true] %s66
      %69 = dma.hbm_to_vmem [thread:$0]  %s4, 16, %s67, [#allocation9]
    $region21: #{tpu_custom_call.1} parent=1 // pred_fallthru
      _
    // Predicated region
    $region22: #{tpu_custom_call.1} parent=1 // pred_check
      _
    $region23: #{tpu_custom_call.1} parent=1 // pred_check_branch
      %71 = sbr.rel (0) target = $region25
    $region24: #{tpu_custom_call.1} parent=1 // pred_region
      %72 = dma.done [#allocation3], 8192
    $region25: #{tpu_custom_call.1} parent=1 // pred_fallthru
      _
    // Predicated region
    $region26: #{tpu_custom_call.1} parent=1 // pred_check
      _
    $region27: #{tpu_custom_call.1} parent=1 // pred_check_branch
      %74 = sbr.rel (0) target = $region29
    $region28: #{tpu_custom_call.1} parent=1 // pred_region
      %75 = dma.done [#allocation6], 65536
    $region29: #{tpu_custom_call.1} parent=1 // pred_fallthru
      _
    // Predicated region
    $region30: #{tpu_custom_call.1} parent=1 // pred_check
      _
    $region31: #{tpu_custom_call.1} parent=1 // pred_check_branch
      %77 = sbr.rel (0) target = $region33
    $region32: #{tpu_custom_call.1} parent=1 // pred_region
      %78 = dma.done [#allocation6], 16
    $region33: #{tpu_custom_call.1} parent=1 // pred_fallthru
      _
    // Predicated region
    $region34: #{tpu_custom_call.1} parent=1 // pred_check
      _
    $region35: #{tpu_custom_call.1} parent=1 // pred_check_branch
      %80 = sbr.rel (0) target = $region37
    $region36: #{tpu_custom_call.1} parent=1 // pred_region
      %81 = dma.done [#allocation9], 1024
    $region37: #{tpu_custom_call.1} parent=1 // pred_fallthru
      _
    // Predicated region
    $region38: #{tpu_custom_call.1} parent=1 // pred_check
      _
    $region39: #{tpu_custom_call.1} parent=1 // pred_check_branch
      %83 = sbr.rel (0) target = $region41
    $region40: #{tpu_custom_call.1} parent=1 // pred_region
      %84 = dma.done [#allocation9], 16
    $region41: #{tpu_custom_call.1} parent=1 // pred_fallthru
      _
    %v86 = vld [vmem:[#allocation2] sm:$0xff]
    %v87 = vld [vmem:[#allocation2 + $0x8] sm:$0xff]
    %v88 = vld [vmem:[#allocation2 + $0x10] sm:$0xff]
    %v89 = vld [vmem:[#allocation2 + $0x18] sm:$0xff]
    %v90 = vld [vmem:[#allocation2 + $0x20] sm:$0xff]
    %v91 = vld [vmem:[#allocation2 + $0x28] sm:$0xff]
    %v92 = vld [vmem:[#allocation2 + $0x30] sm:$0xff]
    %v93 = vld [vmem:[#allocation2 + $0x38] sm:$0xff]
    %v94 = vld [vmem:[#allocation2 + $0x40] sm:$0xff]
    %v95 = vld [vmem:[#allocation2 + $0x48] sm:$0xff]
    %v96 = vld [vmem:[#allocation2 + $0x50] sm:$0xff]
    %v97 = vld [vmem:[#allocation2 + $0x58] sm:$0xff]
    %v98 = vld [vmem:[#allocation2 + $0x60] sm:$0xff]
    %v99 = vld [vmem:[#allocation2 + $0x68] sm:$0xff]
    %v100 = vld [vmem:[#allocation2 + $0x70] sm:$0xff]
    %v101 = vld [vmem:[#allocation2 + $0x78] sm:$0xff]
    %v102 = vld [vmem:[#allocation2 + $0x80] sm:$0xff]
    %v103 = vld [vmem:[#allocation2 + $0x88] sm:$0xff]
    %v104 = vld [vmem:[#allocation2 + $0x90] sm:$0xff]
    %v105 = vld [vmem:[#allocation2 + $0x98] sm:$0xff]
    %v106 = vld [vmem:[#allocation2 + $0xa0] sm:$0xff]
    %v107 = vld [vmem:[#allocation2 + $0xa8] sm:$0xff]
    %v108 = vld [vmem:[#allocation2 + $0xb0] sm:$0xff]
    %v109 = vld [vmem:[#allocation2 + $0xb8] sm:$0xff]
    %v110 = vld [vmem:[#allocation2 + $0xc0] sm:$0xff]
    %v111 = vld [vmem:[#allocation2 + $0xc8] sm:$0xff]
    %v112 = vld [vmem:[#allocation2 + $0xd0] sm:$0xff]
    %v113 = vld [vmem:[#allocation2 + $0xd8] sm:$0xff]
    %v114 = vld [vmem:[#allocation2 + $0xe0] sm:$0xff]
    %v115 = vld [vmem:[#allocation2 + $0xe8] sm:$0xff]
    %v116 = vld [vmem:[#allocation2 + $0xf0] sm:$0xff]
    %v117 = vld [vmem:[#allocation2 + $0xf8] sm:$0xff]
    %v118 = vld [vmem:[#allocation2 + $0x100] sm:$0xff]
    %v119 = vld [vmem:[#allocation2 + $0x108] sm:$0xff]
    %v120 = vld [vmem:[#allocation2 + $0x110] sm:$0xff]
    %v121 = vld [vmem:[#allocation2 + $0x118] sm:$0xff]
    %v122 = vld [vmem:[#allocation2 + $0x120] sm:$0xff]
    %v123 = vld [vmem:[#allocation2 + $0x128] sm:$0xff]
    %v124 = vld [vmem:[#allocation2 + $0x130] sm:$0xff]
    %v125 = vld [vmem:[#allocation2 + $0x138] sm:$0xff]
    %v126 = vld [vmem:[#allocation2 + $0x140] sm:$0xff]
    %v127 = vld [vmem:[#allocation2 + $0x148] sm:$0xff]
    %v128 = vld [vmem:[#allocation2 + $0x150] sm:$0xff]
    %v129 = vld [vmem:[#allocation2 + $0x158] sm:$0xff]
    %v130 = vld [vmem:[#allocation2 + $0x160] sm:$0xff]
    %v131 = vld [vmem:[#allocation2 + $0x168] sm:$0xff]
    %v132 = vld [vmem:[#allocation2 + $0x170] sm:$0xff]
    %v133 = vld [vmem:[#allocation2 + $0x178] sm:$0xff]
    %v134 = vld [vmem:[#allocation2 + $0x180] sm:$0xff]
    %v135 = vld [vmem:[#allocation2 + $0x188] sm:$0xff]
    %v136 = vld [vmem:[#allocation2 + $0x190] sm:$0xff]
    %v137 = vld [vmem:[#allocation2 + $0x198] sm:$0xff]
    %v138 = vld [vmem:[#allocation2 + $0x1a0] sm:$0xff]
    %v139 = vld [vmem:[#allocation2 + $0x1a8] sm:$0xff]
    %v140 = vld [vmem:[#allocation2 + $0x1b0] sm:$0xff]
    %v141 = vld [vmem:[#allocation2 + $0x1b8] sm:$0xff]
    %v142 = vld [vmem:[#allocation2 + $0x1c0] sm:$0xff]
    %v143 = vld [vmem:[#allocation2 + $0x1c8] sm:$0xff]
    %v144 = vld [vmem:[#allocation2 + $0x1d0] sm:$0xff]
    %v145 = vld [vmem:[#allocation2 + $0x1d8] sm:$0xff]
    %v146 = vld [vmem:[#allocation2 + $0x1e0] sm:$0xff]
    %v147 = vld [vmem:[#allocation2 + $0x1e8] sm:$0xff]
    %v148 = vld [vmem:[#allocation2 + $0x1f0] sm:$0xff]
    %v149 = vld [vmem:[#allocation2 + $0x1f8] sm:$0xff]
    %v214 = vcombine.low %v86, %v102
    %v215 = vcombine.high %v86, %v102
    %v216 = vcombine.low %v118, %v134
    %v217 = vcombine.high %v118, %v134
    %v219 = vunpack.c.l.s4 1983009808
    %v220 = vunpack.c.0.s8 %v219
    %v221 = vlaneseq
    %v222 = vshrl.u32 %v221, 7
    %v223 = vsub.s32 %v220, %v222
    %v224 = vrot.slane %v214, %v223
    %v226 = vunpack.c.l.s4 1983009808
    %v227 = vunpack.c.0.s8 %v226
    %v228 = vlaneseq
    %v229 = vshrl.u32 %v228, 7
    %v230 = vsub.s32 %v227, %v229
    %v231 = vrot.slane %v215, %v230
    %v233 = vunpack.c.l.s4 1983009808
    %v234 = vunpack.c.0.s8 %v233
    %v235 = vlaneseq
    %v236 = vshrl.u32 %v235, 7
    %v237 = vsub.s32 %v234, %v236
    %v238 = vrot.slane %v216, %v237
    %v240 = vunpack.c.l.s4 1983009808
    %v241 = vunpack.c.0.s8 %v240
    %v242 = vlaneseq
    %v243 = vshrl.u32 %v242, 7
    %v244 = vsub.s32 %v241, %v243
    %v245 = vrot.slane %v217, %v244
    %v246 = vcombine.low %v224, %v238
    %v247 = vcombine.high %v224, %v238
    %v248 = vcombine.low %v231, %v245
    %v249 = vcombine.high %v231, %v245
    %v250 = vcombine.low %v87, %v103
    %v251 = vcombine.high %v87, %v103
    %v252 = vcombine.low %v119, %v135
    %v253 = vcombine.high %v119, %v135
    %v255 = vunpack.c.l.s4 1983009808
    %v256 = vunpack.c.0.s8 %v255
    %v257 = vlaneseq
    %v258 = vshrl.u32 %v257, 7
    %v259 = vsub.s32 %v256, %v258
    %v260 = vrot.slane %v250, %v259
    %v262 = vunpack.c.l.s4 1983009808
    %v263 = vunpack.c.0.s8 %v262
    %v264 = vlaneseq
    %v265 = vshrl.u32 %v264, 7
    %v266 = vsub.s32 %v263, %v265
    %v267 = vrot.slane %v251, %v266
    %v269 = vunpack.c.l.s4 1983009808
    %v270 = vunpack.c.0.s8 %v269
    %v271 = vlaneseq
    %v272 = vshrl.u32 %v271, 7
    %v273 = vsub.s32 %v270, %v272
    %v274 = vrot.slane %v252, %v273
    %v276 = vunpack.c.l.s4 1983009808
    %v277 = vunpack.c.0.s8 %v276
    %v278 = vlaneseq
    %v279 = vshrl.u32 %v278, 7
    %v280 = vsub.s32 %v277, %v279
    %v281 = vrot.slane %v253, %v280
    %v282 = vcombine.low %v260, %v274
    %v283 = vcombine.high %v260, %v274
    %v284 = vcombine.low %v267, %v281
    %v285 = vcombine.high %v267, %v281
    %v286 = vcombine.low %v88, %v104
    %v287 = vcombine.high %v88, %v104
    %v288 = vcombine.low %v120, %v136
    %v289 = vcombine.high %v120, %v136
    %v291 = vunpack.c.l.s4 1983009808
    %v292 = vunpack.c.0.s8 %v291
    %v293 = vlaneseq
    %v294 = vshrl.u32 %v293, 7
    %v295 = vsub.s32 %v292, %v294
    %v296 = vrot.slane %v286, %v295
    %v298 = vunpack.c.l.s4 1983009808
    %v299 = vunpack.c.0.s8 %v298
    %v300 = vlaneseq
    %v301 = vshrl.u32 %v300, 7
    %v302 = vsub.s32 %v299, %v301
    %v303 = vrot.slane %v287, %v302
    %v305 = vunpack.c.l.s4 1983009808
    %v306 = vunpack.c.0.s8 %v305
    %v307 = vlaneseq
    %v308 = vshrl.u32 %v307, 7
    %v309 = vsub.s32 %v306, %v308
    %v310 = vrot.slane %v288, %v309
    %v312 = vunpack.c.l.s4 1983009808
    %v313 = vunpack.c.0.s8 %v312
    %v314 = vlaneseq
    %v315 = vshrl.u32 %v314, 7
    %v316 = vsub.s32 %v313, %v315
    %v317 = vrot.slane %v289, %v316
    %v318 = vcombine.low %v296, %v310
    %v319 = vcombine.high %v296, %v310
    %v320 = vcombine.low %v303, %v317
    %v321 = vcombine.high %v303, %v317
    %v322 = vcombine.low %v89, %v105
    %v323 = vcombine.high %v89, %v105
    %v324 = vcombine.low %v121, %v137
    %v325 = vcombine.high %v121, %v137
    %v327 = vunpack.c.l.s4 1983009808
    %v328 = vunpack.c.0.s8 %v327
    %v329 = vlaneseq
    %v330 = vshrl.u32 %v329, 7
    %v331 = vsub.s32 %v328, %v330
    %v332 = vrot.slane %v322, %v331
    %v334 = vunpack.c.l.s4 1983009808
    %v335 = vunpack.c.0.s8 %v334
    %v336 = vlaneseq
    %v337 = vshrl.u32 %v336, 7
    %v338 = vsub.s32 %v335, %v337
    %v339 = vrot.slane %v323, %v338
    %v341 = vunpack.c.l.s4 1983009808
    %v342 = vunpack.c.0.s8 %v341
    %v343 = vlaneseq
    %v344 = vshrl.u32 %v343, 7
    %v345 = vsub.s32 %v342, %v344
    %v346 = vrot.slane %v324, %v345
    %v348 = vunpack.c.l.s4 1983009808
    %v349 = vunpack.c.0.s8 %v348
    %v350 = vlaneseq
    %v351 = vshrl.u32 %v350, 7
    %v352 = vsub.s32 %v349, %v351
    %v353 = vrot.slane %v325, %v352
    %v354 = vcombine.low %v332, %v346
    %v355 = vcombine.high %v332, %v346
    %v356 = vcombine.low %v339, %v353
    %v357 = vcombine.high %v339, %v353
    %v358 = vcombine.low %v90, %v106
    %v359 = vcombine.high %v90, %v106
    %v360 = vcombine.low %v122, %v138
    %v361 = vcombine.high %v122, %v138
    %v363 = vunpack.c.l.s4 1983009808
    %v364 = vunpack.c.0.s8 %v363
    %v365 = vlaneseq
    %v366 = vshrl.u32 %v365, 7
    %v367 = vsub.s32 %v364, %v366
    %v368 = vrot.slane %v358, %v367
    %v370 = vunpack.c.l.s4 1983009808
    %v371 = vunpack.c.0.s8 %v370
    %v372 = vlaneseq
    %v373 = vshrl.u32 %v372, 7
    %v374 = vsub.s32 %v371, %v373
    %v375 = vrot.slane %v359, %v374
    %v377 = vunpack.c.l.s4 1983009808
    %v378 = vunpack.c.0.s8 %v377
    %v379 = vlaneseq
    %v380 = vshrl.u32 %v379, 7
    %v381 = vsub.s32 %v378, %v380
    %v382 = vrot.slane %v360, %v381
    %v384 = vunpack.c.l.s4 1983009808
    %v385 = vunpack.c.0.s8 %v384
    %v386 = vlaneseq
    %v387 = vshrl.u32 %v386, 7
    %v388 = vsub.s32 %v385, %v387
    %v389 = vrot.slane %v361, %v388
    %v390 = vcombine.low %v368, %v382
    %v391 = vcombine.high %v368, %v382
    %v392 = vcombine.low %v375, %v389
    %v393 = vcombine.high %v375, %v389
    %v394 = vcombine.low %v91, %v107
    %v395 = vcombine.high %v91, %v107
    %v396 = vcombine.low %v123, %v139
    %v397 = vcombine.high %v123, %v139
    %v399 = vunpack.c.l.s4 1983009808
    %v400 = vunpack.c.0.s8 %v399
    %v401 = vlaneseq
    %v402 = vshrl.u32 %v401, 7
    %v403 = vsub.s32 %v400, %v402
    %v404 = vrot.slane %v394, %v403
    %v406 = vunpack.c.l.s4 1983009808
    %v407 = vunpack.c.0.s8 %v406
    %v408 = vlaneseq
    %v409 = vshrl.u32 %v408, 7
    %v410 = vsub.s32 %v407, %v409
    %v411 = vrot.slane %v395, %v410
    %v413 = vunpack.c.l.s4 1983009808
    %v414 = vunpack.c.0.s8 %v413
    %v415 = vlaneseq
    %v416 = vshrl.u32 %v415, 7
    %v417 = vsub.s32 %v414, %v416
    %v418 = vrot.slane %v396, %v417
    %v420 = vunpack.c.l.s4 1983009808
    %v421 = vunpack.c.0.s8 %v420
    %v422 = vlaneseq
    %v423 = vshrl.u32 %v422, 7
    %v424 = vsub.s32 %v421, %v423
    %v425 = vrot.slane %v397, %v424
    %v426 = vcombine.low %v404, %v418
    %v427 = vcombine.high %v404, %v418
    %v428 = vcombine.low %v411, %v425
    %v429 = vcombine.high %v411, %v425
    %v430 = vcombine.low %v92, %v108
    %v431 = vcombine.high %v92, %v108
    %v432 = vcombine.low %v124, %v140
    %v433 = vcombine.high %v124, %v140
    %v435 = vunpack.c.l.s4 1983009808
    %v436 = vunpack.c.0.s8 %v435
    %v437 = vlaneseq
    %v438 = vshrl.u32 %v437, 7
    %v439 = vsub.s32 %v436, %v438
    %v440 = vrot.slane %v430, %v439
    %v442 = vunpack.c.l.s4 1983009808
    %v443 = vunpack.c.0.s8 %v442
    %v444 = vlaneseq
    %v445 = vshrl.u32 %v444, 7
    %v446 = vsub.s32 %v443, %v445
    %v447 = vrot.slane %v431, %v446
    %v449 = vunpack.c.l.s4 1983009808
    %v450 = vunpack.c.0.s8 %v449
    %v451 = vlaneseq
    %v452 = vshrl.u32 %v451, 7
    %v453 = vsub.s32 %v450, %v452
    %v454 = vrot.slane %v432, %v453
    %v456 = vunpack.c.l.s4 1983009808
    %v457 = vunpack.c.0.s8 %v456
    %v458 = vlaneseq
    %v459 = vshrl.u32 %v458, 7
    %v460 = vsub.s32 %v457, %v459
    %v461 = vrot.slane %v433, %v460
    %v462 = vcombine.low %v440, %v454
    %v463 = vcombine.high %v440, %v454
    %v464 = vcombine.low %v447, %v461
    %v465 = vcombine.high %v447, %v461
    %v466 = vcombine.low %v93, %v109
    %v467 = vcombine.high %v93, %v109
    %v468 = vcombine.low %v125, %v141
    %v469 = vcombine.high %v125, %v141
    %v471 = vunpack.c.l.s4 1983009808
    %v472 = vunpack.c.0.s8 %v471
    %v473 = vlaneseq
    %v474 = vshrl.u32 %v473, 7
    %v475 = vsub.s32 %v472, %v474
    %v476 = vrot.slane %v466, %v475
    %v478 = vunpack.c.l.s4 1983009808
    %v479 = vunpack.c.0.s8 %v478
    %v480 = vlaneseq
    %v481 = vshrl.u32 %v480, 7
    %v482 = vsub.s32 %v479, %v481
    %v483 = vrot.slane %v467, %v482
    %v485 = vunpack.c.l.s4 1983009808
    %v486 = vunpack.c.0.s8 %v485
    %v487 = vlaneseq
    %v488 = vshrl.u32 %v487, 7
    %v489 = vsub.s32 %v486, %v488
    %v490 = vrot.slane %v468, %v489
    %v492 = vunpack.c.l.s4 1983009808
    %v493 = vunpack.c.0.s8 %v492
    %v494 = vlaneseq
    %v495 = vshrl.u32 %v494, 7
    %v496 = vsub.s32 %v493, %v495
    %v497 = vrot.slane %v469, %v496
    %v498 = vcombine.low %v476, %v490
    %v499 = vcombine.high %v476, %v490
    %v500 = vcombine.low %v483, %v497
    %v501 = vcombine.high %v483, %v497
    %v502 = vcombine.low %v94, %v110
    %v503 = vcombine.high %v94, %v110
    %v504 = vcombine.low %v126, %v142
    %v505 = vcombine.high %v126, %v142
    %v507 = vunpack.c.l.s4 1983009808
    %v508 = vunpack.c.0.s8 %v507
    %v509 = vlaneseq
    %v510 = vshrl.u32 %v509, 7
    %v511 = vsub.s32 %v508, %v510
    %v512 = vrot.slane %v502, %v511
    %v514 = vunpack.c.l.s4 1983009808
    %v515 = vunpack.c.0.s8 %v514
    %v516 = vlaneseq
    %v517 = vshrl.u32 %v516, 7
    %v518 = vsub.s32 %v515, %v517
    %v519 = vrot.slane %v503, %v518
    %v521 = vunpack.c.l.s4 1983009808
    %v522 = vunpack.c.0.s8 %v521
    %v523 = vlaneseq
    %v524 = vshrl.u32 %v523, 7
    %v525 = vsub.s32 %v522, %v524
    %v526 = vrot.slane %v504, %v525
    %v528 = vunpack.c.l.s4 1983009808
    %v529 = vunpack.c.0.s8 %v528
    %v530 = vlaneseq
    %v531 = vshrl.u32 %v530, 7
    %v532 = vsub.s32 %v529, %v531
    %v533 = vrot.slane %v505, %v532
    %v534 = vcombine.low %v512, %v526
    %v535 = vcombine.high %v512, %v526
    %v536 = vcombine.low %v519, %v533
    %v537 = vcombine.high %v519, %v533
    %v538 = vcombine.low %v95, %v111
    %v539 = vcombine.high %v95, %v111
    %v540 = vcombine.low %v127, %v143
    %v541 = vcombine.high %v127, %v143
    %v543 = vunpack.c.l.s4 1983009808
    %v544 = vunpack.c.0.s8 %v543
    %v545 = vlaneseq
    %v546 = vshrl.u32 %v545, 7
    %v547 = vsub.s32 %v544, %v546
    %v548 = vrot.slane %v538, %v547
    %v550 = vunpack.c.l.s4 1983009808
    %v551 = vunpack.c.0.s8 %v550
    %v552 = vlaneseq
    %v553 = vshrl.u32 %v552, 7
    %v554 = vsub.s32 %v551, %v553
    %v555 = vrot.slane %v539, %v554
    %v557 = vunpack.c.l.s4 1983009808
    %v558 = vunpack.c.0.s8 %v557
    %v559 = vlaneseq
    %v560 = vshrl.u32 %v559, 7
    %v561 = vsub.s32 %v558, %v560
    %v562 = vrot.slane %v540, %v561
    %v564 = vunpack.c.l.s4 1983009808
    %v565 = vunpack.c.0.s8 %v564
    %v566 = vlaneseq
    %v567 = vshrl.u32 %v566, 7
    %v568 = vsub.s32 %v565, %v567
    %v569 = vrot.slane %v541, %v568
    %v570 = vcombine.low %v548, %v562
    %v571 = vcombine.high %v548, %v562
    %v572 = vcombine.low %v555, %v569
    %v573 = vcombine.high %v555, %v569
    %v574 = vcombine.low %v96, %v112
    %v575 = vcombine.high %v96, %v112
    %v576 = vcombine.low %v128, %v144
    %v577 = vcombine.high %v128, %v144
    %v579 = vunpack.c.l.s4 1983009808
    %v580 = vunpack.c.0.s8 %v579
    %v581 = vlaneseq
    %v582 = vshrl.u32 %v581, 7
    %v583 = vsub.s32 %v580, %v582
    %v584 = vrot.slane %v574, %v583
    %v586 = vunpack.c.l.s4 1983009808
    %v587 = vunpack.c.0.s8 %v586
    %v588 = vlaneseq
    %v589 = vshrl.u32 %v588, 7
    %v590 = vsub.s32 %v587, %v589
    %v591 = vrot.slane %v575, %v590
    %v593 = vunpack.c.l.s4 1983009808
    %v594 = vunpack.c.0.s8 %v593
    %v595 = vlaneseq
    %v596 = vshrl.u32 %v595, 7
    %v597 = vsub.s32 %v594, %v596
    %v598 = vrot.slane %v576, %v597
    %v600 = vunpack.c.l.s4 1983009808
    %v601 = vunpack.c.0.s8 %v600
    %v602 = vlaneseq
    %v603 = vshrl.u32 %v602, 7
    %v604 = vsub.s32 %v601, %v603
    %v605 = vrot.slane %v577, %v604
    %v606 = vcombine.low %v584, %v598
    %v607 = vcombine.high %v584, %v598
    %v608 = vcombine.low %v591, %v605
    %v609 = vcombine.high %v591, %v605
    %v610 = vcombine.low %v97, %v113
    %v611 = vcombine.high %v97, %v113
    %v612 = vcombine.low %v129, %v145
    %v613 = vcombine.high %v129, %v145
    %v615 = vunpack.c.l.s4 1983009808
    %v616 = vunpack.c.0.s8 %v615
    %v617 = vlaneseq
    %v618 = vshrl.u32 %v617, 7
    %v619 = vsub.s32 %v616, %v618
    %v620 = vrot.slane %v610, %v619
    %v622 = vunpack.c.l.s4 1983009808
    %v623 = vunpack.c.0.s8 %v622
    %v624 = vlaneseq
    %v625 = vshrl.u32 %v624, 7
    %v626 = vsub.s32 %v623, %v625
    %v627 = vrot.slane %v611, %v626
    %v629 = vunpack.c.l.s4 1983009808
    %v630 = vunpack.c.0.s8 %v629
    %v631 = vlaneseq
    %v632 = vshrl.u32 %v631, 7
    %v633 = vsub.s32 %v630, %v632
    %v634 = vrot.slane %v612, %v633
    %v636 = vunpack.c.l.s4 1983009808
    %v637 = vunpack.c.0.s8 %v636
    %v638 = vlaneseq
    %v639 = vshrl.u32 %v638, 7
    %v640 = vsub.s32 %v637, %v639
    %v641 = vrot.slane %v613, %v640
    %v642 = vcombine.low %v620, %v634
    %v643 = vcombine.high %v620, %v634
    %v644 = vcombine.low %v627, %v641
    %v645 = vcombine.high %v627, %v641
    %v646 = vcombine.low %v98, %v114
    %v647 = vcombine.high %v98, %v114
    %v648 = vcombine.low %v130, %v146
    %v649 = vcombine.high %v130, %v146
    %v651 = vunpack.c.l.s4 1983009808
    %v652 = vunpack.c.0.s8 %v651
    %v653 = vlaneseq
    %v654 = vshrl.u32 %v653, 7
    %v655 = vsub.s32 %v652, %v654
    %v656 = vrot.slane %v646, %v655
    %v658 = vunpack.c.l.s4 1983009808
    %v659 = vunpack.c.0.s8 %v658
    %v660 = vlaneseq
    %v661 = vshrl.u32 %v660, 7
    %v662 = vsub.s32 %v659, %v661
    %v663 = vrot.slane %v647, %v662
    %v665 = vunpack.c.l.s4 1983009808
    %v666 = vunpack.c.0.s8 %v665
    %v667 = vlaneseq
    %v668 = vshrl.u32 %v667, 7
    %v669 = vsub.s32 %v666, %v668
    %v670 = vrot.slane %v648, %v669
    %v672 = vunpack.c.l.s4 1983009808
    %v673 = vunpack.c.0.s8 %v672
    %v674 = vlaneseq
    %v675 = vshrl.u32 %v674, 7
    %v676 = vsub.s32 %v673, %v675
    %v677 = vrot.slane %v649, %v676
    %v678 = vcombine.low %v656, %v670
    %v679 = vcombine.high %v656, %v670
    %v680 = vcombine.low %v663, %v677
    %v681 = vcombine.high %v663, %v677
    %v682 = vcombine.low %v99, %v115
    %v683 = vcombine.high %v99, %v115
    %v684 = vcombine.low %v131, %v147
    %v685 = vcombine.high %v131, %v147
    %v687 = vunpack.c.l.s4 1983009808
    %v688 = vunpack.c.0.s8 %v687
    %v689 = vlaneseq
    %v690 = vshrl.u32 %v689, 7
    %v691 = vsub.s32 %v688, %v690
    %v692 = vrot.slane %v682, %v691
    %v694 = vunpack.c.l.s4 1983009808
    %v695 = vunpack.c.0.s8 %v694
    %v696 = vlaneseq
    %v697 = vshrl.u32 %v696, 7
    %v698 = vsub.s32 %v695, %v697
    %v699 = vrot.slane %v683, %v698
    %v701 = vunpack.c.l.s4 1983009808
    %v702 = vunpack.c.0.s8 %v701
    %v703 = vlaneseq
    %v704 = vshrl.u32 %v703, 7
    %v705 = vsub.s32 %v702, %v704
    %v706 = vrot.slane %v684, %v705
    %v708 = vunpack.c.l.s4 1983009808
    %v709 = vunpack.c.0.s8 %v708
    %v710 = vlaneseq
    %v711 = vshrl.u32 %v710, 7
    %v712 = vsub.s32 %v709, %v711
    %v713 = vrot.slane %v685, %v712
    %v714 = vcombine.low %v692, %v706
    %v715 = vcombine.high %v692, %v706
    %v716 = vcombine.low %v699, %v713
    %v717 = vcombine.high %v699, %v713
    %v718 = vcombine.low %v100, %v116
    %v719 = vcombine.high %v100, %v116
    %v720 = vcombine.low %v132, %v148
    %v721 = vcombine.high %v132, %v148
    %v723 = vunpack.c.l.s4 1983009808
    %v724 = vunpack.c.0.s8 %v723
    %v725 = vlaneseq
    %v726 = vshrl.u32 %v725, 7
    %v727 = vsub.s32 %v724, %v726
    %v728 = vrot.slane %v718, %v727
    %v730 = vunpack.c.l.s4 1983009808
    %v731 = vunpack.c.0.s8 %v730
    %v732 = vlaneseq
    %v733 = vshrl.u32 %v732, 7
    %v734 = vsub.s32 %v731, %v733
    %v735 = vrot.slane %v719, %v734
    %v737 = vunpack.c.l.s4 1983009808
    %v738 = vunpack.c.0.s8 %v737
    %v739 = vlaneseq
    %v740 = vshrl.u32 %v739, 7
    %v741 = vsub.s32 %v738, %v740
    %v742 = vrot.slane %v720, %v741
    %v744 = vunpack.c.l.s4 1983009808
    %v745 = vunpack.c.0.s8 %v744
    %v746 = vlaneseq
    %v747 = vshrl.u32 %v746, 7
    %v748 = vsub.s32 %v745, %v747
    %v749 = vrot.slane %v721, %v748
    %v750 = vcombine.low %v728, %v742
    %v751 = vcombine.high %v728, %v742
    %v752 = vcombine.low %v735, %v749
    %v753 = vcombine.high %v735, %v749
    %v754 = vcombine.low %v101, %v117
    %v755 = vcombine.high %v101, %v117
    %v756 = vcombine.low %v133, %v149
    %v757 = vcombine.high %v133, %v149
    %v759 = vunpack.c.l.s4 1983009808
    %v760 = vunpack.c.0.s8 %v759
    %v761 = vlaneseq
    %v762 = vshrl.u32 %v761, 7
    %v763 = vsub.s32 %v760, %v762
    %v764 = vrot.slane %v754, %v763
    %v766 = vunpack.c.l.s4 1983009808
    %v767 = vunpack.c.0.s8 %v766
    %v768 = vlaneseq
    %v769 = vshrl.u32 %v768, 7
    %v770 = vsub.s32 %v767, %v769
    %v771 = vrot.slane %v755, %v770
    %v773 = vunpack.c.l.s4 1983009808
    %v774 = vunpack.c.0.s8 %v773
    %v775 = vlaneseq
    %v776 = vshrl.u32 %v775, 7
    %v777 = vsub.s32 %v774, %v776
    %v778 = vrot.slane %v756, %v777
    %v780 = vunpack.c.l.s4 1983009808
    %v781 = vunpack.c.0.s8 %v780
    %v782 = vlaneseq
    %v783 = vshrl.u32 %v782, 7
    %v784 = vsub.s32 %v781, %v783
    %v785 = vrot.slane %v757, %v784
    %v786 = vcombine.low %v764, %v778
    %v787 = vcombine.high %v764, %v778
    %v788 = vcombine.low %v771, %v785
    %v789 = vcombine.high %v771, %v785
    %v854 = vpack.c.bf16 %v246, %v246
    %v855 = vpack.c.bf16 %v247, %v247
    %v856 = vpack.c.bf16 %v248, %v248
    %v857 = vpack.c.bf16 %v249, %v249
    %v858 = vpack.c.bf16 %v282, %v282
    %v859 = vpack.c.bf16 %v283, %v283
    %v860 = vpack.c.bf16 %v284, %v284
    %v861 = vpack.c.bf16 %v285, %v285
    %v862 = vpack.c.bf16 %v318, %v318
    %v863 = vpack.c.bf16 %v319, %v319
    %v864 = vpack.c.bf16 %v320, %v320
    %v865 = vpack.c.bf16 %v321, %v321
    %v866 = vpack.c.bf16 %v354, %v354
    %v867 = vpack.c.bf16 %v355, %v355
    %v868 = vpack.c.bf16 %v356, %v356
    %v869 = vpack.c.bf16 %v357, %v357
    %v870 = vpack.c.bf16 %v390, %v390
    %v871 = vpack.c.bf16 %v391, %v391
    %v872 = vpack.c.bf16 %v392, %v392
    %v873 = vpack.c.bf16 %v393, %v393
    %v874 = vpack.c.bf16 %v426, %v426
    %v875 = vpack.c.bf16 %v427, %v427
    %v876 = vpack.c.bf16 %v428, %v428
    %v877 = vpack.c.bf16 %v429, %v429
    %v878 = vpack.c.bf16 %v462, %v462
    %v879 = vpack.c.bf16 %v463, %v463
    %v880 = vpack.c.bf16 %v464, %v464
    %v881 = vpack.c.bf16 %v465, %v465
    %v882 = vpack.c.bf16 %v498, %v498
    %v883 = vpack.c.bf16 %v499, %v499
    %v884 = vpack.c.bf16 %v500, %v500
    %v885 = vpack.c.bf16 %v501, %v501
    %v886 = vpack.c.bf16 %v534, %v534
    %v887 = vpack.c.bf16 %v535, %v535
    %v888 = vpack.c.bf16 %v536, %v536
    %v889 = vpack.c.bf16 %v537, %v537
    %v890 = vpack.c.bf16 %v570, %v570
    %v891 = vpack.c.bf16 %v571, %v571
    %v892 = vpack.c.bf16 %v572, %v572
    %v893 = vpack.c.bf16 %v573, %v573
    %v894 = vpack.c.bf16 %v606, %v606
    %v895 = vpack.c.bf16 %v607, %v607
    %v896 = vpack.c.bf16 %v608, %v608
    %v897 = vpack.c.bf16 %v609, %v609
    %v898 = vpack.c.bf16 %v642, %v642
    %v899 = vpack.c.bf16 %v643, %v643
    %v900 = vpack.c.bf16 %v644, %v644
    %v901 = vpack.c.bf16 %v645, %v645
    %v902 = vpack.c.bf16 %v678, %v678
    %v903 = vpack.c.bf16 %v679, %v679
    %v904 = vpack.c.bf16 %v680, %v680
    %v905 = vpack.c.bf16 %v681, %v681
    %v906 = vpack.c.bf16 %v714, %v714
    %v907 = vpack.c.bf16 %v715, %v715
    %v908 = vpack.c.bf16 %v716, %v716
    %v909 = vpack.c.bf16 %v717, %v717
    %v910 = vpack.c.bf16 %v750, %v750
    %v911 = vpack.c.bf16 %v751, %v751
    %v912 = vpack.c.bf16 %v752, %v752
    %v913 = vpack.c.bf16 %v753, %v753
    %v914 = vpack.c.bf16 %v786, %v786
    %v915 = vpack.c.bf16 %v787, %v787
    %v916 = vpack.c.bf16 %v788, %v788
    %v917 = vpack.c.bf16 %v789, %v789
    %v918 = vld [vmem:[#allocation5] sm:$0xf]
    %v919 = vld [vmem:[#allocation5 + $0x4] sm:$0xf]
    %v920 = vld [vmem:[#allocation5 + $0x8] sm:$0xf]
    %v921 = vld [vmem:[#allocation5 + $0xc] sm:$0xf]
    %v922 = vld [vmem:[#allocation5 + $0x10] sm:$0xf]
    %v923 = vld [vmem:[#allocation5 + $0x14] sm:$0xf]
    %v924 = vld [vmem:[#allocation5 + $0x18] sm:$0xf]
    %v925 = vld [vmem:[#allocation5 + $0x1c] sm:$0xf]
    %v926 = vld [vmem:[#allocation5 + $0x20] sm:$0xf]
    %v927 = vld [vmem:[#allocation5 + $0x24] sm:$0xf]
    %v928 = vld [vmem:[#allocation5 + $0x28] sm:$0xf]
    %v929 = vld [vmem:[#allocation5 + $0x2c] sm:$0xf]
    %v930 = vld [vmem:[#allocation5 + $0x30] sm:$0xf]
    %v931 = vld [vmem:[#allocation5 + $0x34] sm:$0xf]
    %v932 = vld [vmem:[#allocation5 + $0x38] sm:$0xf]
    %v933 = vld [vmem:[#allocation5 + $0x3c] sm:$0xf]
    %v934 = vld [vmem:[#allocation5 + $0x40] sm:$0xf]
    %v935 = vld [vmem:[#allocation5 + $0x44] sm:$0xf]
    %v936 = vld [vmem:[#allocation5 + $0x48] sm:$0xf]
    %v937 = vld [vmem:[#allocation5 + $0x4c] sm:$0xf]
    %v938 = vld [vmem:[#allocation5 + $0x50] sm:$0xf]
    %v939 = vld [vmem:[#allocation5 + $0x54] sm:$0xf]
    %v940 = vld [vmem:[#allocation5 + $0x58] sm:$0xf]
    %v941 = vld [vmem:[#allocation5 + $0x5c] sm:$0xf]
    %v942 = vld [vmem:[#allocation5 + $0x60] sm:$0xf]
    %v943 = vld [vmem:[#allocation5 + $0x64] sm:$0xf]
    %v944 = vld [vmem:[#allocation5 + $0x68] sm:$0xf]
    %v945 = vld [vmem:[#allocation5 + $0x6c] sm:$0xf]
    %v946 = vld [vmem:[#allocation5 + $0x70] sm:$0xf]
    %v947 = vld [vmem:[#allocation5 + $0x74] sm:$0xf]
    %v948 = vld [vmem:[#allocation5 + $0x78] sm:$0xf]
    %v949 = vld [vmem:[#allocation5 + $0x7c] sm:$0xf]
    %v950 = vld [vmem:[#allocation5 + $0x80] sm:$0xf]
    %v951 = vld [vmem:[#allocation5 + $0x84] sm:$0xf]
    %v952 = vld [vmem:[#allocation5 + $0x88] sm:$0xf]
    %v953 = vld [vmem:[#allocation5 + $0x8c] sm:$0xf]
    %v954 = vld [vmem:[#allocation5 + $0x90] sm:$0xf]
    %v955 = vld [vmem:[#allocation5 + $0x94] sm:$0xf]
    %v956 = vld [vmem:[#allocation5 + $0x98] sm:$0xf]
    %v957 = vld [vmem:[#allocation5 + $0x9c] sm:$0xf]
    %v958 = vld [vmem:[#allocation5 + $0xa0] sm:$0xf]
    %v959 = vld [vmem:[#allocation5 + $0xa4] sm:$0xf]
    %v960 = vld [vmem:[#allocation5 + $0xa8] sm:$0xf]
    %v961 = vld [vmem:[#allocation5 + $0xac] sm:$0xf]
    %v962 = vld [vmem:[#allocation5 + $0xb0] sm:$0xf]
    %v963 = vld [vmem:[#allocation5 + $0xb4] sm:$0xf]
    %v964 = vld [vmem:[#allocation5 + $0xb8] sm:$0xf]
    %v965 = vld [vmem:[#allocation5 + $0xbc] sm:$0xf]
    %v966 = vld [vmem:[#allocation5 + $0xc0] sm:$0xf]
    %v967 = vld [vmem:[#allocation5 + $0xc4] sm:$0xf]
    %v968 = vld [vmem:[#allocation5 + $0xc8] sm:$0xf]
    %v969 = vld [vmem:[#allocation5 + $0xcc] sm:$0xf]
    %v970 = vld [vmem:[#allocation5 + $0xd0] sm:$0xf]
    %v971 = vld [vmem:[#allocation5 + $0xd4] sm:$0xf]
    %v972 = vld [vmem:[#allocation5 + $0xd8] sm:$0xf]
    %v973 = vld [vmem:[#allocation5 + $0xdc] sm:$0xf]
    %v974 = vld [vmem:[#allocation5 + $0xe0] sm:$0xf]
    %v975 = vld [vmem:[#allocation5 + $0xe4] sm:$0xf]
    %v976 = vld [vmem:[#allocation5 + $0xe8] sm:$0xf]
    %v977 = vld [vmem:[#allocation5 + $0xec] sm:$0xf]
    %v978 = vld [vmem:[#allocation5 + $0xf0] sm:$0xf]
    %v979 = vld [vmem:[#allocation5 + $0xf4] sm:$0xf]
    %v980 = vld [vmem:[#allocation5 + $0xf8] sm:$0xf]
    %v981 = vld [vmem:[#allocation5 + $0xfc] sm:$0xf]
    %v982 = vld [vmem:[#allocation5 + $0x100] sm:$0xf]
    %v983 = vld [vmem:[#allocation5 + $0x104] sm:$0xf]
    %v984 = vld [vmem:[#allocation5 + $0x108] sm:$0xf]
    %v985 = vld [vmem:[#allocation5 + $0x10c] sm:$0xf]
    %v986 = vld [vmem:[#allocation5 + $0x110] sm:$0xf]
    %v987 = vld [vmem:[#allocation5 + $0x114] sm:$0xf]
    %v988 = vld [vmem:[#allocation5 + $0x118] sm:$0xf]
    %v989 = vld [vmem:[#allocation5 + $0x11c] sm:$0xf]
    %v990 = vld [vmem:[#allocation5 + $0x120] sm:$0xf]
    %v991 = vld [vmem:[#allocation5 + $0x124] sm:$0xf]
    %v992 = vld [vmem:[#allocation5 + $0x128] sm:$0xf]
    %v993 = vld [vmem:[#allocation5 + $0x12c] sm:$0xf]
    %v994 = vld [vmem:[#allocation5 + $0x130] sm:$0xf]
    %v995 = vld [vmem:[#allocation5 + $0x134] sm:$0xf]
    %v996 = vld [vmem:[#allocation5 + $0x138] sm:$0xf]
    %v997 = vld [vmem:[#allocation5 + $0x13c] sm:$0xf]
    %v998 = vld [vmem:[#allocation5 + $0x140] sm:$0xf]
    %v999 = vld [vmem:[#allocation5 + $0x144] sm:$0xf]
    %v1000 = vld [vmem:[#allocation5 + $0x148] sm:$0xf]
    %v1001 = vld [vmem:[#allocation5 + $0x14c] sm:$0xf]
    %v1002 = vld [vmem:[#allocation5 + $0x150] sm:$0xf]
    %v1003 = vld [vmem:[#allocation5 + $0x154] sm:$0xf]
    %v1004 = vld [vmem:[#allocation5 + $0x158] sm:$0xf]
    %v1005 = vld [vmem:[#allocation5 + $0x15c] sm:$0xf]
    %v1006 = vld [vmem:[#allocation5 + $0x160] sm:$0xf]
    %v1007 = vld [vmem:[#allocation5 + $0x164] sm:$0xf]
    %v1008 = vld [vmem:[#allocation5 + $0x168] sm:$0xf]
    %v1009 = vld [vmem:[#allocation5 + $0x16c] sm:$0xf]
    %v1010 = vld [vmem:[#allocation5 + $0x170] sm:$0xf]
    %v1011 = vld [vmem:[#allocation5 + $0x174] sm:$0xf]
    %v1012 = vld [vmem:[#allocation5 + $0x178] sm:$0xf]
    %v1013 = vld [vmem:[#allocation5 + $0x17c] sm:$0xf]
    %v1014 = vld [vmem:[#allocation5 + $0x180] sm:$0xf]
    %v1015 = vld [vmem:[#allocation5 + $0x184] sm:$0xf]
    %v1016 = vld [vmem:[#allocation5 + $0x188] sm:$0xf]
    %v1017 = vld [vmem:[#allocation5 + $0x18c] sm:$0xf]
    %v1018 = vld [vmem:[#allocation5 + $0x190] sm:$0xf]
    %v1019 = vld [vmem:[#allocation5 + $0x194] sm:$0xf]
    %v1020 = vld [vmem:[#allocation5 + $0x198] sm:$0xf]
    %v1021 = vld [vmem:[#allocation5 + $0x19c] sm:$0xf]
    %v1022 = vld [vmem:[#allocation5 + $0x1a0] sm:$0xf]
    %v1023 = vld [vmem:[#allocation5 + $0x1a4] sm:$0xf]
    %v1024 = vld [vmem:[#allocation5 + $0x1a8] sm:$0xf]
    %v1025 = vld [vmem:[#allocation5 + $0x1ac] sm:$0xf]
    %v1026 = vld [vmem:[#allocation5 + $0x1b0] sm:$0xf]
    %v1027 = vld [vmem:[#allocation5 + $0x1b4] sm:$0xf]
    %v1028 = vld [vmem:[#allocation5 + $0x1b8] sm:$0xf]
    %v1029 = vld [vmem:[#allocation5 + $0x1bc] sm:$0xf]
    %v1030 = vld [vmem:[#allocation5 + $0x1c0] sm:$0xf]
    %v1031 = vld [vmem:[#allocation5 + $0x1c4] sm:$0xf]
    %v1032 = vld [vmem:[#allocation5 + $0x1c8] sm:$0xf]
    %v1033 = vld [vmem:[#allocation5 + $0x1cc] sm:$0xf]
    %v1034 = vld [vmem:[#allocation5 + $0x1d0] sm:$0xf]
    %v1035 = vld [vmem:[#allocation5 + $0x1d4] sm:$0xf]
    %v1036 = vld [vmem:[#allocation5 + $0x1d8] sm:$0xf]
    %v1037 = vld [vmem:[#allocation5 + $0x1dc] sm:$0xf]
    %v1038 = vld [vmem:[#allocation5 + $0x1e0] sm:$0xf]
    %v1039 = vld [vmem:[#allocation5 + $0x1e4] sm:$0xf]
    %v1040 = vld [vmem:[#allocation5 + $0x1e8] sm:$0xf]
    %v1041 = vld [vmem:[#allocation5 + $0x1ec] sm:$0xf]
    %v1042 = vld [vmem:[#allocation5 + $0x1f0] sm:$0xf]
    %v1043 = vld [vmem:[#allocation5 + $0x1f4] sm:$0xf]
    %v1044 = vld [vmem:[#allocation5 + $0x1f8] sm:$0xf]
    %v1045 = vld [vmem:[#allocation5 + $0x1fc] sm:$0xf]
    %v1046 = vld [vmem:[#allocation5 + $0x200] sm:$0xf]
    %v1047 = vld [vmem:[#allocation5 + $0x204] sm:$0xf]
    %v1048 = vld [vmem:[#allocation5 + $0x208] sm:$0xf]
    %v1049 = vld [vmem:[#allocation5 + $0x20c] sm:$0xf]
    %v1050 = vld [vmem:[#allocation5 + $0x210] sm:$0xf]
    %v1051 = vld [vmem:[#allocation5 + $0x214] sm:$0xf]
    %v1052 = vld [vmem:[#allocation5 + $0x218] sm:$0xf]
    %v1053 = vld [vmem:[#allocation5 + $0x21c] sm:$0xf]
    %v1054 = vld [vmem:[#allocation5 + $0x220] sm:$0xf]
    %v1055 = vld [vmem:[#allocation5 + $0x224] sm:$0xf]
    %v1056 = vld [vmem:[#allocation5 + $0x228] sm:$0xf]
    %v1057 = vld [vmem:[#allocation5 + $0x22c] sm:$0xf]
    %v1058 = vld [vmem:[#allocation5 + $0x230] sm:$0xf]
    %v1059 = vld [vmem:[#allocation5 + $0x234] sm:$0xf]
    %v1060 = vld [vmem:[#allocation5 + $0x238] sm:$0xf]
    %v1061 = vld [vmem:[#allocation5 + $0x23c] sm:$0xf]
    %v1062 = vld [vmem:[#allocation5 + $0x240] sm:$0xf]
    %v1063 = vld [vmem:[#allocation5 + $0x244] sm:$0xf]
    %v1064 = vld [vmem:[#allocation5 + $0x248] sm:$0xf]
    %v1065 = vld [vmem:[#allocation5 + $0x24c] sm:$0xf]
    %v1066 = vld [vmem:[#allocation5 + $0x250] sm:$0xf]
    %v1067 = vld [vmem:[#allocation5 + $0x254] sm:$0xf]
    %v1068 = vld [vmem:[#allocation5 + $0x258] sm:$0xf]
    %v1069 = vld [vmem:[#allocation5 + $0x25c] sm:$0xf]
    %v1070 = vld [vmem:[#allocation5 + $0x260] sm:$0xf]
    %v1071 = vld [vmem:[#allocation5 + $0x264] sm:$0xf]
    %v1072 = vld [vmem:[#allocation5 + $0x268] sm:$0xf]
    %v1073 = vld [vmem:[#allocation5 + $0x26c] sm:$0xf]
    %v1074 = vld [vmem:[#allocation5 + $0x270] sm:$0xf]
    %v1075 = vld [vmem:[#allocation5 + $0x274] sm:$0xf]
    %v1076 = vld [vmem:[#allocation5 + $0x278] sm:$0xf]
    %v1077 = vld [vmem:[#allocation5 + $0x27c] sm:$0xf]
    %v1078 = vld [vmem:[#allocation5 + $0x280] sm:$0xf]
    %v1079 = vld [vmem:[#allocation5 + $0x284] sm:$0xf]
    %v1080 = vld [vmem:[#allocation5 + $0x288] sm:$0xf]
    %v1081 = vld [vmem:[#allocation5 + $0x28c] sm:$0xf]
    %v1082 = vld [vmem:[#allocation5 + $0x290] sm:$0xf]
    %v1083 = vld [vmem:[#allocation5 + $0x294] sm:$0xf]
    %v1084 = vld [vmem:[#allocation5 + $0x298] sm:$0xf]
    %v1085 = vld [vmem:[#allocation5 + $0x29c] sm:$0xf]
    %v1086 = vld [vmem:[#allocation5 + $0x2a0] sm:$0xf]
    %v1087 = vld [vmem:[#allocation5 + $0x2a4] sm:$0xf]
    %v1088 = vld [vmem:[#allocation5 + $0x2a8] sm:$0xf]
    %v1089 = vld [vmem:[#allocation5 + $0x2ac] sm:$0xf]
    %v1090 = vld [vmem:[#allocation5 + $0x2b0] sm:$0xf]
    %v1091 = vld [vmem:[#allocation5 + $0x2b4] sm:$0xf]
    %v1092 = vld [vmem:[#allocation5 + $0x2b8] sm:$0xf]
    %v1093 = vld [vmem:[#allocation5 + $0x2bc] sm:$0xf]
    %v1094 = vld [vmem:[#allocation5 + $0x2c0] sm:$0xf]
    %v1095 = vld [vmem:[#allocation5 + $0x2c4] sm:$0xf]
    %v1096 = vld [vmem:[#allocation5 + $0x2c8] sm:$0xf]
    %v1097 = vld [vmem:[#allocation5 + $0x2cc] sm:$0xf]
    %v1098 = vld [vmem:[#allocation5 + $0x2d0] sm:$0xf]
    %v1099 = vld [vmem:[#allocation5 + $0x2d4] sm:$0xf]
    %v1100 = vld [vmem:[#allocation5 + $0x2d8] sm:$0xf]
    %v1101 = vld [vmem:[#allocation5 + $0x2dc] sm:$0xf]
    %v1102 = vld [vmem:[#allocation5 + $0x2e0] sm:$0xf]
    %v1103 = vld [vmem:[#allocation5 + $0x2e4] sm:$0xf]
    %v1104 = vld [vmem:[#allocation5 + $0x2e8] sm:$0xf]
    %v1105 = vld [vmem:[#allocation5 + $0x2ec] sm:$0xf]
    %v1106 = vld [vmem:[#allocation5 + $0x2f0] sm:$0xf]
    %v1107 = vld [vmem:[#allocation5 + $0x2f4] sm:$0xf]
    %v1108 = vld [vmem:[#allocation5 + $0x2f8] sm:$0xf]
    %v1109 = vld [vmem:[#allocation5 + $0x2fc] sm:$0xf]
    %v1110 = vld [vmem:[#allocation5 + $0x300] sm:$0xf]
    %v1111 = vld [vmem:[#allocation5 + $0x304] sm:$0xf]
    %v1112 = vld [vmem:[#allocation5 + $0x308] sm:$0xf]
    %v1113 = vld [vmem:[#allocation5 + $0x30c] sm:$0xf]
    %v1114 = vld [vmem:[#allocation5 + $0x310] sm:$0xf]
    %v1115 = vld [vmem:[#allocation5 + $0x314] sm:$0xf]
    %v1116 = vld [vmem:[#allocation5 + $0x318] sm:$0xf]
    %v1117 = vld [vmem:[#allocation5 + $0x31c] sm:$0xf]
    %v1118 = vld [vmem:[#allocation5 + $0x320] sm:$0xf]
    %v1119 = vld [vmem:[#allocation5 + $0x324] sm:$0xf]
    %v1120 = vld [vmem:[#allocation5 + $0x328] sm:$0xf]
    %v1121 = vld [vmem:[#allocation5 + $0x32c] sm:$0xf]
    %v1122 = vld [vmem:[#allocation5 + $0x330] sm:$0xf]
    %v1123 = vld [vmem:[#allocation5 + $0x334] sm:$0xf]
    %v1124 = vld [vmem:[#allocation5 + $0x338] sm:$0xf]
    %v1125 = vld [vmem:[#allocation5 + $0x33c] sm:$0xf]
    %v1126 = vld [vmem:[#allocation5 + $0x340] sm:$0xf]
    %v1127 = vld [vmem:[#allocation5 + $0x344] sm:$0xf]
    %v1128 = vld [vmem:[#allocation5 + $0x348] sm:$0xf]
    %v1129 = vld [vmem:[#allocation5 + $0x34c] sm:$0xf]
    %v1130 = vld [vmem:[#allocation5 + $0x350] sm:$0xf]
    %v1131 = vld [vmem:[#allocation5 + $0x354] sm:$0xf]
    %v1132 = vld [vmem:[#allocation5 + $0x358] sm:$0xf]
    %v1133 = vld [vmem:[#allocation5 + $0x35c] sm:$0xf]
    %v1134 = vld [vmem:[#allocation5 + $0x360] sm:$0xf]
    %v1135 = vld [vmem:[#allocation5 + $0x364] sm:$0xf]
    %v1136 = vld [vmem:[#allocation5 + $0x368] sm:$0xf]
    %v1137 = vld [vmem:[#allocation5 + $0x36c] sm:$0xf]
    %v1138 = vld [vmem:[#allocation5 + $0x370] sm:$0xf]
    %v1139 = vld [vmem:[#allocation5 + $0x374] sm:$0xf]
    %v1140 = vld [vmem:[#allocation5 + $0x378] sm:$0xf]
    %v1141 = vld [vmem:[#allocation5 + $0x37c] sm:$0xf]
    %v1142 = vld [vmem:[#allocation5 + $0x380] sm:$0xf]
    %v1143 = vld [vmem:[#allocation5 + $0x384] sm:$0xf]
    %v1144 = vld [vmem:[#allocation5 + $0x388] sm:$0xf]
    %v1145 = vld [vmem:[#allocation5 + $0x38c] sm:$0xf]
    %v1146 = vld [vmem:[#allocation5 + $0x390] sm:$0xf]
    %v1147 = vld [vmem:[#allocation5 + $0x394] sm:$0xf]
    %v1148 = vld [vmem:[#allocation5 + $0x398] sm:$0xf]
    %v1149 = vld [vmem:[#allocation5 + $0x39c] sm:$0xf]
    %v1150 = vld [vmem:[#allocation5 + $0x3a0] sm:$0xf]
    %v1151 = vld [vmem:[#allocation5 + $0x3a4] sm:$0xf]
    %v1152 = vld [vmem:[#allocation5 + $0x3a8] sm:$0xf]
    %v1153 = vld [vmem:[#allocation5 + $0x3ac] sm:$0xf]
    %v1154 = vld [vmem:[#allocation5 + $0x3b0] sm:$0xf]
    %v1155 = vld [vmem:[#allocation5 + $0x3b4] sm:$0xf]
    %v1156 = vld [vmem:[#allocation5 + $0x3b8] sm:$0xf]
    %v1157 = vld [vmem:[#allocation5 + $0x3bc] sm:$0xf]
    %v1158 = vld [vmem:[#allocation5 + $0x3c0] sm:$0xf]
    %v1159 = vld [vmem:[#allocation5 + $0x3c4] sm:$0xf]
    %v1160 = vld [vmem:[#allocation5 + $0x3c8] sm:$0xf]
    %v1161 = vld [vmem:[#allocation5 + $0x3cc] sm:$0xf]
    %v1162 = vld [vmem:[#allocation5 + $0x3d0] sm:$0xf]
    %v1163 = vld [vmem:[#allocation5 + $0x3d4] sm:$0xf]
    %v1164 = vld [vmem:[#allocation5 + $0x3d8] sm:$0xf]
    %v1165 = vld [vmem:[#allocation5 + $0x3dc] sm:$0xf]
    %v1166 = vld [vmem:[#allocation5 + $0x3e0] sm:$0xf]
    %v1167 = vld [vmem:[#allocation5 + $0x3e4] sm:$0xf]
    %v1168 = vld [vmem:[#allocation5 + $0x3e8] sm:$0xf]
    %v1169 = vld [vmem:[#allocation5 + $0x3ec] sm:$0xf]
    %v1170 = vld [vmem:[#allocation5 + $0x3f0] sm:$0xf]
    %v1171 = vld [vmem:[#allocation5 + $0x3f4] sm:$0xf]
    %v1172 = vld [vmem:[#allocation5 + $0x3f8] sm:$0xf]
    %v1173 = vld [vmem:[#allocation5 + $0x3fc] sm:$0xf]
    %v1174 = vld [vmem:[#allocation5 + $0x400] sm:$0xf]
    %v1175 = vld [vmem:[#allocation5 + $0x404] sm:$0xf]
    %v1176 = vld [vmem:[#allocation5 + $0x408] sm:$0xf]
    %v1177 = vld [vmem:[#allocation5 + $0x40c] sm:$0xf]
    %v1178 = vld [vmem:[#allocation5 + $0x410] sm:$0xf]
    %v1179 = vld [vmem:[#allocation5 + $0x414] sm:$0xf]
    %v1180 = vld [vmem:[#allocation5 + $0x418] sm:$0xf]
    %v1181 = vld [vmem:[#allocation5 + $0x41c] sm:$0xf]
    %v1182 = vld [vmem:[#allocation5 + $0x420] sm:$0xf]
    %v1183 = vld [vmem:[#allocation5 + $0x424] sm:$0xf]
    %v1184 = vld [vmem:[#allocation5 + $0x428] sm:$0xf]
    %v1185 = vld [vmem:[#allocation5 + $0x42c] sm:$0xf]
    %v1186 = vld [vmem:[#allocation5 + $0x430] sm:$0xf]
    %v1187 = vld [vmem:[#allocation5 + $0x434] sm:$0xf]
    %v1188 = vld [vmem:[#allocation5 + $0x438] sm:$0xf]
    %v1189 = vld [vmem:[#allocation5 + $0x43c] sm:$0xf]
    %v1190 = vld [vmem:[#allocation5 + $0x440] sm:$0xf]
    %v1191 = vld [vmem:[#allocation5 + $0x444] sm:$0xf]
    %v1192 = vld [vmem:[#allocation5 + $0x448] sm:$0xf]
    %v1193 = vld [vmem:[#allocation5 + $0x44c] sm:$0xf]
    %v1194 = vld [vmem:[#allocation5 + $0x450] sm:$0xf]
    %v1195 = vld [vmem:[#allocation5 + $0x454] sm:$0xf]
    %v1196 = vld [vmem:[#allocation5 + $0x458] sm:$0xf]
    %v1197 = vld [vmem:[#allocation5 + $0x45c] sm:$0xf]
    %v1198 = vld [vmem:[#allocation5 + $0x460] sm:$0xf]
    %v1199 = vld [vmem:[#allocation5 + $0x464] sm:$0xf]
    %v1200 = vld [vmem:[#allocation5 + $0x468] sm:$0xf]
    %v1201 = vld [vmem:[#allocation5 + $0x46c] sm:$0xf]
    %v1202 = vld [vmem:[#allocation5 + $0x470] sm:$0xf]
    %v1203 = vld [vmem:[#allocation5 + $0x474] sm:$0xf]
    %v1204 = vld [vmem:[#allocation5 + $0x478] sm:$0xf]
    %v1205 = vld [vmem:[#allocation5 + $0x47c] sm:$0xf]
    %v1206 = vld [vmem:[#allocation5 + $0x480] sm:$0xf]
    %v1207 = vld [vmem:[#allocation5 + $0x484] sm:$0xf]
    %v1208 = vld [vmem:[#allocation5 + $0x488] sm:$0xf]
    %v1209 = vld [vmem:[#allocation5 + $0x48c] sm:$0xf]
    %v1210 = vld [vmem:[#allocation5 + $0x490] sm:$0xf]
    %v1211 = vld [vmem:[#allocation5 + $0x494] sm:$0xf]
    %v1212 = vld [vmem:[#allocation5 + $0x498] sm:$0xf]
    %v1213 = vld [vmem:[#allocation5 + $0x49c] sm:$0xf]
    %v1214 = vld [vmem:[#allocation5 + $0x4a0] sm:$0xf]
    %v1215 = vld [vmem:[#allocation5 + $0x4a4] sm:$0xf]
    %v1216 = vld [vmem:[#allocation5 + $0x4a8] sm:$0xf]
    %v1217 = vld [vmem:[#allocation5 + $0x4ac] sm:$0xf]
    %v1218 = vld [vmem:[#allocation5 + $0x4b0] sm:$0xf]
    %v1219 = vld [vmem:[#allocation5 + $0x4b4] sm:$0xf]
    %v1220 = vld [vmem:[#allocation5 + $0x4b8] sm:$0xf]
    %v1221 = vld [vmem:[#allocation5 + $0x4bc] sm:$0xf]
    %v1222 = vld [vmem:[#allocation5 + $0x4c0] sm:$0xf]
    %v1223 = vld [vmem:[#allocation5 + $0x4c4] sm:$0xf]
    %v1224 = vld [vmem:[#allocation5 + $0x4c8] sm:$0xf]
    %v1225 = vld [vmem:[#allocation5 + $0x4cc] sm:$0xf]
    %v1226 = vld [vmem:[#allocation5 + $0x4d0] sm:$0xf]
    %v1227 = vld [vmem:[#allocation5 + $0x4d4] sm:$0xf]
    %v1228 = vld [vmem:[#allocation5 + $0x4d8] sm:$0xf]
    %v1229 = vld [vmem:[#allocation5 + $0x4dc] sm:$0xf]
    %v1230 = vld [vmem:[#allocation5 + $0x4e0] sm:$0xf]
    %v1231 = vld [vmem:[#allocation5 + $0x4e4] sm:$0xf]
    %v1232 = vld [vmem:[#allocation5 + $0x4e8] sm:$0xf]
    %v1233 = vld [vmem:[#allocation5 + $0x4ec] sm:$0xf]
    %v1234 = vld [vmem:[#allocation5 + $0x4f0] sm:$0xf]
    %v1235 = vld [vmem:[#allocation5 + $0x4f4] sm:$0xf]
    %v1236 = vld [vmem:[#allocation5 + $0x4f8] sm:$0xf]
    %v1237 = vld [vmem:[#allocation5 + $0x4fc] sm:$0xf]
    %v1238 = vld [vmem:[#allocation5 + $0x500] sm:$0xf]
    %v1239 = vld [vmem:[#allocation5 + $0x504] sm:$0xf]
    %v1240 = vld [vmem:[#allocation5 + $0x508] sm:$0xf]
    %v1241 = vld [vmem:[#allocation5 + $0x50c] sm:$0xf]
    %v1242 = vld [vmem:[#allocation5 + $0x510] sm:$0xf]
    %v1243 = vld [vmem:[#allocation5 + $0x514] sm:$0xf]
    %v1244 = vld [vmem:[#allocation5 + $0x518] sm:$0xf]
    %v1245 = vld [vmem:[#allocation5 + $0x51c] sm:$0xf]
    %v1246 = vld [vmem:[#allocation5 + $0x520] sm:$0xf]
    %v1247 = vld [vmem:[#allocation5 + $0x524] sm:$0xf]
    %v1248 = vld [vmem:[#allocation5 + $0x528] sm:$0xf]
    %v1249 = vld [vmem:[#allocation5 + $0x52c] sm:$0xf]
    %v1250 = vld [vmem:[#allocation5 + $0x530] sm:$0xf]
    %v1251 = vld [vmem:[#allocation5 + $0x534] sm:$0xf]
    %v1252 = vld [vmem:[#allocation5 + $0x538] sm:$0xf]
    %v1253 = vld [vmem:[#allocation5 + $0x53c] sm:$0xf]
    %v1254 = vld [vmem:[#allocation5 + $0x540] sm:$0xf]
    %v1255 = vld [vmem:[#allocation5 + $0x544] sm:$0xf]
    %v1256 = vld [vmem:[#allocation5 + $0x548] sm:$0xf]
    %v1257 = vld [vmem:[#allocation5 + $0x54c] sm:$0xf]
    %v1258 = vld [vmem:[#allocation5 + $0x550] sm:$0xf]
    %v1259 = vld [vmem:[#allocation5 + $0x554] sm:$0xf]
    %v1260 = vld [vmem:[#allocation5 + $0x558] sm:$0xf]
    %v1261 = vld [vmem:[#allocation5 + $0x55c] sm:$0xf]
    %v1262 = vld [vmem:[#allocation5 + $0x560] sm:$0xf]
    %v1263 = vld [vmem:[#allocation5 + $0x564] sm:$0xf]
    %v1264 = vld [vmem:[#allocation5 + $0x568] sm:$0xf]
    %v1265 = vld [vmem:[#allocation5 + $0x56c] sm:$0xf]
    %v1266 = vld [vmem:[#allocation5 + $0x570] sm:$0xf]
    %v1267 = vld [vmem:[#allocation5 + $0x574] sm:$0xf]
    %v1268 = vld [vmem:[#allocation5 + $0x578] sm:$0xf]
    %v1269 = vld [vmem:[#allocation5 + $0x57c] sm:$0xf]
    %v1270 = vld [vmem:[#allocation5 + $0x580] sm:$0xf]
    %v1271 = vld [vmem:[#allocation5 + $0x584] sm:$0xf]
    %v1272 = vld [vmem:[#allocation5 + $0x588] sm:$0xf]
    %v1273 = vld [vmem:[#allocation5 + $0x58c] sm:$0xf]
    %v1274 = vld [vmem:[#allocation5 + $0x590] sm:$0xf]
    %v1275 = vld [vmem:[#allocation5 + $0x594] sm:$0xf]
    %v1276 = vld [vmem:[#allocation5 + $0x598] sm:$0xf]
    %v1277 = vld [vmem:[#allocation5 + $0x59c] sm:$0xf]
    %v1278 = vld [vmem:[#allocation5 + $0x5a0] sm:$0xf]
    %v1279 = vld [vmem:[#allocation5 + $0x5a4] sm:$0xf]
    %v1280 = vld [vmem:[#allocation5 + $0x5a8] sm:$0xf]
    %v1281 = vld [vmem:[#allocation5 + $0x5ac] sm:$0xf]
    %v1282 = vld [vmem:[#allocation5 + $0x5b0] sm:$0xf]
    %v1283 = vld [vmem:[#allocation5 + $0x5b4] sm:$0xf]
    %v1284 = vld [vmem:[#allocation5 + $0x5b8] sm:$0xf]
    %v1285 = vld [vmem:[#allocation5 + $0x5bc] sm:$0xf]
    %v1286 = vld [vmem:[#allocation5 + $0x5c0] sm:$0xf]
    %v1287 = vld [vmem:[#allocation5 + $0x5c4] sm:$0xf]
    %v1288 = vld [vmem:[#allocation5 + $0x5c8] sm:$0xf]
    %v1289 = vld [vmem:[#allocation5 + $0x5cc] sm:$0xf]
    %v1290 = vld [vmem:[#allocation5 + $0x5d0] sm:$0xf]
    %v1291 = vld [vmem:[#allocation5 + $0x5d4] sm:$0xf]
    %v1292 = vld [vmem:[#allocation5 + $0x5d8] sm:$0xf]
    %v1293 = vld [vmem:[#allocation5 + $0x5dc] sm:$0xf]
    %v1294 = vld [vmem:[#allocation5 + $0x5e0] sm:$0xf]
    %v1295 = vld [vmem:[#allocation5 + $0x5e4] sm:$0xf]
    %v1296 = vld [vmem:[#allocation5 + $0x5e8] sm:$0xf]
    %v1297 = vld [vmem:[#allocation5 + $0x5ec] sm:$0xf]
    %v1298 = vld [vmem:[#allocation5 + $0x5f0] sm:$0xf]
    %v1299 = vld [vmem:[#allocation5 + $0x5f4] sm:$0xf]
    %v1300 = vld [vmem:[#allocation5 + $0x5f8] sm:$0xf]
    %v1301 = vld [vmem:[#allocation5 + $0x5fc] sm:$0xf]
    %v1302 = vld [vmem:[#allocation5 + $0x600] sm:$0xf]
    %v1303 = vld [vmem:[#allocation5 + $0x604] sm:$0xf]
    %v1304 = vld [vmem:[#allocation5 + $0x608] sm:$0xf]
    %v1305 = vld [vmem:[#allocation5 + $0x60c] sm:$0xf]
    %v1306 = vld [vmem:[#allocation5 + $0x610] sm:$0xf]
    %v1307 = vld [vmem:[#allocation5 + $0x614] sm:$0xf]
    %v1308 = vld [vmem:[#allocation5 + $0x618] sm:$0xf]
    %v1309 = vld [vmem:[#allocation5 + $0x61c] sm:$0xf]
    %v1310 = vld [vmem:[#allocation5 + $0x620] sm:$0xf]
    %v1311 = vld [vmem:[#allocation5 + $0x624] sm:$0xf]
    %v1312 = vld [vmem:[#allocation5 + $0x628] sm:$0xf]
    %v1313 = vld [vmem:[#allocation5 + $0x62c] sm:$0xf]
    %v1314 = vld [vmem:[#allocation5 + $0x630] sm:$0xf]
    %v1315 = vld [vmem:[#allocation5 + $0x634] sm:$0xf]
    %v1316 = vld [vmem:[#allocation5 + $0x638] sm:$0xf]
    %v1317 = vld [vmem:[#allocation5 + $0x63c] sm:$0xf]
    %v1318 = vld [vmem:[#allocation5 + $0x640] sm:$0xf]
    %v1319 = vld [vmem:[#allocation5 + $0x644] sm:$0xf]
    %v1320 = vld [vmem:[#allocation5 + $0x648] sm:$0xf]
    %v1321 = vld [vmem:[#allocation5 + $0x64c] sm:$0xf]
    %v1322 = vld [vmem:[#allocation5 + $0x650] sm:$0xf]
    %v1323 = vld [vmem:[#allocation5 + $0x654] sm:$0xf]
    %v1324 = vld [vmem:[#allocation5 + $0x658] sm:$0xf]
    %v1325 = vld [vmem:[#allocation5 + $0x65c] sm:$0xf]
    %v1326 = vld [vmem:[#allocation5 + $0x660] sm:$0xf]
    %v1327 = vld [vmem:[#allocation5 + $0x664] sm:$0xf]
    %v1328 = vld [vmem:[#allocation5 + $0x668] sm:$0xf]
    %v1329 = vld [vmem:[#allocation5 + $0x66c] sm:$0xf]
    %v1330 = vld [vmem:[#allocation5 + $0x670] sm:$0xf]
    %v1331 = vld [vmem:[#allocation5 + $0x674] sm:$0xf]
    %v1332 = vld [vmem:[#allocation5 + $0x678] sm:$0xf]
    %v1333 = vld [vmem:[#allocation5 + $0x67c] sm:$0xf]
    %v1334 = vld [vmem:[#allocation5 + $0x680] sm:$0xf]
    %v1335 = vld [vmem:[#allocation5 + $0x684] sm:$0xf]
    %v1336 = vld [vmem:[#allocation5 + $0x688] sm:$0xf]
    %v1337 = vld [vmem:[#allocation5 + $0x68c] sm:$0xf]
    %v1338 = vld [vmem:[#allocation5 + $0x690] sm:$0xf]
    %v1339 = vld [vmem:[#allocation5 + $0x694] sm:$0xf]
    %v1340 = vld [vmem:[#allocation5 + $0x698] sm:$0xf]
    %v1341 = vld [vmem:[#allocation5 + $0x69c] sm:$0xf]
    %v1342 = vld [vmem:[#allocation5 + $0x6a0] sm:$0xf]
    %v1343 = vld [vmem:[#allocation5 + $0x6a4] sm:$0xf]
    %v1344 = vld [vmem:[#allocation5 + $0x6a8] sm:$0xf]
    %v1345 = vld [vmem:[#allocation5 + $0x6ac] sm:$0xf]
    %v1346 = vld [vmem:[#allocation5 + $0x6b0] sm:$0xf]
    %v1347 = vld [vmem:[#allocation5 + $0x6b4] sm:$0xf]
    %v1348 = vld [vmem:[#allocation5 + $0x6b8] sm:$0xf]
    %v1349 = vld [vmem:[#allocation5 + $0x6bc] sm:$0xf]
    %v1350 = vld [vmem:[#allocation5 + $0x6c0] sm:$0xf]
    %v1351 = vld [vmem:[#allocation5 + $0x6c4] sm:$0xf]
    %v1352 = vld [vmem:[#allocation5 + $0x6c8] sm:$0xf]
    %v1353 = vld [vmem:[#allocation5 + $0x6cc] sm:$0xf]
    %v1354 = vld [vmem:[#allocation5 + $0x6d0] sm:$0xf]
    %v1355 = vld [vmem:[#allocation5 + $0x6d4] sm:$0xf]
    %v1356 = vld [vmem:[#allocation5 + $0x6d8] sm:$0xf]
    %v1357 = vld [vmem:[#allocation5 + $0x6dc] sm:$0xf]
    %v1358 = vld [vmem:[#allocation5 + $0x6e0] sm:$0xf]
    %v1359 = vld [vmem:[#allocation5 + $0x6e4] sm:$0xf]
    %v1360 = vld [vmem:[#allocation5 + $0x6e8] sm:$0xf]
    %v1361 = vld [vmem:[#allocation5 + $0x6ec] sm:$0xf]
    %v1362 = vld [vmem:[#allocation5 + $0x6f0] sm:$0xf]
    %v1363 = vld [vmem:[#allocation5 + $0x6f4] sm:$0xf]
    %v1364 = vld [vmem:[#allocation5 + $0x6f8] sm:$0xf]
    %v1365 = vld [vmem:[#allocation5 + $0x6fc] sm:$0xf]
    %v1366 = vld [vmem:[#allocation5 + $0x700] sm:$0xf]
    %v1367 = vld [vmem:[#allocation5 + $0x704] sm:$0xf]
    %v1368 = vld [vmem:[#allocation5 + $0x708] sm:$0xf]
    %v1369 = vld [vmem:[#allocation5 + $0x70c] sm:$0xf]
    %v1370 = vld [vmem:[#allocation5 + $0x710] sm:$0xf]
    %v1371 = vld [vmem:[#allocation5 + $0x714] sm:$0xf]
    %v1372 = vld [vmem:[#allocation5 + $0x718] sm:$0xf]
    %v1373 = vld [vmem:[#allocation5 + $0x71c] sm:$0xf]
    %v1374 = vld [vmem:[#allocation5 + $0x720] sm:$0xf]
    %v1375 = vld [vmem:[#allocation5 + $0x724] sm:$0xf]
    %v1376 = vld [vmem:[#allocation5 + $0x728] sm:$0xf]
    %v1377 = vld [vmem:[#allocation5 + $0x72c] sm:$0xf]
    %v1378 = vld [vmem:[#allocation5 + $0x730] sm:$0xf]
    %v1379 = vld [vmem:[#allocation5 + $0x734] sm:$0xf]
    %v1380 = vld [vmem:[#allocation5 + $0x738] sm:$0xf]
    %v1381 = vld [vmem:[#allocation5 + $0x73c] sm:$0xf]
    %v1382 = vld [vmem:[#allocation5 + $0x740] sm:$0xf]
    %v1383 = vld [vmem:[#allocation5 + $0x744] sm:$0xf]
    %v1384 = vld [vmem:[#allocation5 + $0x748] sm:$0xf]
    %v1385 = vld [vmem:[#allocation5 + $0x74c] sm:$0xf]
    %v1386 = vld [vmem:[#allocation5 + $0x750] sm:$0xf]
    %v1387 = vld [vmem:[#allocation5 + $0x754] sm:$0xf]
    %v1388 = vld [vmem:[#allocation5 + $0x758] sm:$0xf]
    %v1389 = vld [vmem:[#allocation5 + $0x75c] sm:$0xf]
    %v1390 = vld [vmem:[#allocation5 + $0x760] sm:$0xf]
    %v1391 = vld [vmem:[#allocation5 + $0x764] sm:$0xf]
    %v1392 = vld [vmem:[#allocation5 + $0x768] sm:$0xf]
    %v1393 = vld [vmem:[#allocation5 + $0x76c] sm:$0xf]
    %v1394 = vld [vmem:[#allocation5 + $0x770] sm:$0xf]
    %v1395 = vld [vmem:[#allocation5 + $0x774] sm:$0xf]
    %v1396 = vld [vmem:[#allocation5 + $0x778] sm:$0xf]
    %v1397 = vld [vmem:[#allocation5 + $0x77c] sm:$0xf]
    %v1398 = vld [vmem:[#allocation5 + $0x780] sm:$0xf]
    %v1399 = vld [vmem:[#allocation5 + $0x784] sm:$0xf]
    %v1400 = vld [vmem:[#allocation5 + $0x788] sm:$0xf]
    %v1401 = vld [vmem:[#allocation5 + $0x78c] sm:$0xf]
    %v1402 = vld [vmem:[#allocation5 + $0x790] sm:$0xf]
    %v1403 = vld [vmem:[#allocation5 + $0x794] sm:$0xf]
    %v1404 = vld [vmem:[#allocation5 + $0x798] sm:$0xf]
    %v1405 = vld [vmem:[#allocation5 + $0x79c] sm:$0xf]
    %v1406 = vld [vmem:[#allocation5 + $0x7a0] sm:$0xf]
    %v1407 = vld [vmem:[#allocation5 + $0x7a4] sm:$0xf]
    %v1408 = vld [vmem:[#allocation5 + $0x7a8] sm:$0xf]
    %v1409 = vld [vmem:[#allocation5 + $0x7ac] sm:$0xf]
    %v1410 = vld [vmem:[#allocation5 + $0x7b0] sm:$0xf]
    %v1411 = vld [vmem:[#allocation5 + $0x7b4] sm:$0xf]
    %v1412 = vld [vmem:[#allocation5 + $0x7b8] sm:$0xf]
    %v1413 = vld [vmem:[#allocation5 + $0x7bc] sm:$0xf]
    %v1414 = vld [vmem:[#allocation5 + $0x7c0] sm:$0xf]
    %v1415 = vld [vmem:[#allocation5 + $0x7c4] sm:$0xf]
    %v1416 = vld [vmem:[#allocation5 + $0x7c8] sm:$0xf]
    %v1417 = vld [vmem:[#allocation5 + $0x7cc] sm:$0xf]
    %v1418 = vld [vmem:[#allocation5 + $0x7d0] sm:$0xf]
    %v1419 = vld [vmem:[#allocation5 + $0x7d4] sm:$0xf]
    %v1420 = vld [vmem:[#allocation5 + $0x7d8] sm:$0xf]
    %v1421 = vld [vmem:[#allocation5 + $0x7dc] sm:$0xf]
    %v1422 = vld [vmem:[#allocation5 + $0x7e0] sm:$0xf]
    %v1423 = vld [vmem:[#allocation5 + $0x7e4] sm:$0xf]
    %v1424 = vld [vmem:[#allocation5 + $0x7e8] sm:$0xf]
    %v1425 = vld [vmem:[#allocation5 + $0x7ec] sm:$0xf]
    %v1426 = vld [vmem:[#allocation5 + $0x7f0] sm:$0xf]
    %v1427 = vld [vmem:[#allocation5 + $0x7f4] sm:$0xf]
    %v1428 = vld [vmem:[#allocation5 + $0x7f8] sm:$0xf]
    %v1429 = vld [vmem:[#allocation5 + $0x7fc] sm:$0xf]
    %v1430 = vld [vmem:[#allocation5 + $0x800] sm:$0xf]
    %v1431 = vld [vmem:[#allocation5 + $0x804] sm:$0xf]
    %v1432 = vld [vmem:[#allocation5 + $0x808] sm:$0xf]
    %v1433 = vld [vmem:[#allocation5 + $0x80c] sm:$0xf]
    %v1434 = vld [vmem:[#allocation5 + $0x810] sm:$0xf]
    %v1435 = vld [vmem:[#allocation5 + $0x814] sm:$0xf]
    %v1436 = vld [vmem:[#allocation5 + $0x818] sm:$0xf]
    %v1437 = vld [vmem:[#allocation5 + $0x81c] sm:$0xf]
    %v1438 = vld [vmem:[#allocation5 + $0x820] sm:$0xf]
    %v1439 = vld [vmem:[#allocation5 + $0x824] sm:$0xf]
    %v1440 = vld [vmem:[#allocation5 + $0x828] sm:$0xf]
    %v1441 = vld [vmem:[#allocation5 + $0x82c] sm:$0xf]
    %v1442 = vld [vmem:[#allocation5 + $0x830] sm:$0xf]
    %v1443 = vld [vmem:[#allocation5 + $0x834] sm:$0xf]
    %v1444 = vld [vmem:[#allocation5 + $0x838] sm:$0xf]
    %v1445 = vld [vmem:[#allocation5 + $0x83c] sm:$0xf]
    %v1446 = vld [vmem:[#allocation5 + $0x840] sm:$0xf]
    %v1447 = vld [vmem:[#allocation5 + $0x844] sm:$0xf]
    %v1448 = vld [vmem:[#allocation5 + $0x848] sm:$0xf]
    %v1449 = vld [vmem:[#allocation5 + $0x84c] sm:$0xf]
    %v1450 = vld [vmem:[#allocation5 + $0x850] sm:$0xf]
    %v1451 = vld [vmem:[#allocation5 + $0x854] sm:$0xf]
    %v1452 = vld [vmem:[#allocation5 + $0x858] sm:$0xf]
    %v1453 = vld [vmem:[#allocation5 + $0x85c] sm:$0xf]
    %v1454 = vld [vmem:[#allocation5 + $0x860] sm:$0xf]
    %v1455 = vld [vmem:[#allocation5 + $0x864] sm:$0xf]
    %v1456 = vld [vmem:[#allocation5 + $0x868] sm:$0xf]
    %v1457 = vld [vmem:[#allocation5 + $0x86c] sm:$0xf]
    %v1458 = vld [vmem:[#allocation5 + $0x870] sm:$0xf]
    %v1459 = vld [vmem:[#allocation5 + $0x874] sm:$0xf]
    %v1460 = vld [vmem:[#allocation5 + $0x878] sm:$0xf]
    %v1461 = vld [vmem:[#allocation5 + $0x87c] sm:$0xf]
    %v1462 = vld [vmem:[#allocation5 + $0x880] sm:$0xf]
    %v1463 = vld [vmem:[#allocation5 + $0x884] sm:$0xf]
    %v1464 = vld [vmem:[#allocation5 + $0x888] sm:$0xf]
    %v1465 = vld [vmem:[#allocation5 + $0x88c] sm:$0xf]
    %v1466 = vld [vmem:[#allocation5 + $0x890] sm:$0xf]
    %v1467 = vld [vmem:[#allocation5 + $0x894] sm:$0xf]
    %v1468 = vld [vmem:[#allocation5 + $0x898] sm:$0xf]
    %v1469 = vld [vmem:[#allocation5 + $0x89c] sm:$0xf]
    %v1470 = vld [vmem:[#allocation5 + $0x8a0] sm:$0xf]
    %v1471 = vld [vmem:[#allocation5 + $0x8a4] sm:$0xf]
    %v1472 = vld [vmem:[#allocation5 + $0x8a8] sm:$0xf]
    %v1473 = vld [vmem:[#allocation5 + $0x8ac] sm:$0xf]
    %v1474 = vld [vmem:[#allocation5 + $0x8b0] sm:$0xf]
    %v1475 = vld [vmem:[#allocation5 + $0x8b4] sm:$0xf]
    %v1476 = vld [vmem:[#allocation5 + $0x8b8] sm:$0xf]
    %v1477 = vld [vmem:[#allocation5 + $0x8bc] sm:$0xf]
    %v1478 = vld [vmem:[#allocation5 + $0x8c0] sm:$0xf]
    %v1479 = vld [vmem:[#allocation5 + $0x8c4] sm:$0xf]
    %v1480 = vld [vmem:[#allocation5 + $0x8c8] sm:$0xf]
    %v1481 = vld [vmem:[#allocation5 + $0x8cc] sm:$0xf]
    %v1482 = vld [vmem:[#allocation5 + $0x8d0] sm:$0xf]
    %v1483 = vld [vmem:[#allocation5 + $0x8d4] sm:$0xf]
    %v1484 = vld [vmem:[#allocation5 + $0x8d8] sm:$0xf]
    %v1485 = vld [vmem:[#allocation5 + $0x8dc] sm:$0xf]
    %v1486 = vld [vmem:[#allocation5 + $0x8e0] sm:$0xf]
    %v1487 = vld [vmem:[#allocation5 + $0x8e4] sm:$0xf]
    %v1488 = vld [vmem:[#allocation5 + $0x8e8] sm:$0xf]
    %v1489 = vld [vmem:[#allocation5 + $0x8ec] sm:$0xf]
    %v1490 = vld [vmem:[#allocation5 + $0x8f0] sm:$0xf]
    %v1491 = vld [vmem:[#allocation5 + $0x8f4] sm:$0xf]
    %v1492 = vld [vmem:[#allocation5 + $0x8f8] sm:$0xf]
    %v1493 = vld [vmem:[#allocation5 + $0x8fc] sm:$0xf]
    %v1494 = vld [vmem:[#allocation5 + $0x900] sm:$0xf]
    %v1495 = vld [vmem:[#allocation5 + $0x904] sm:$0xf]
    %v1496 = vld [vmem:[#allocation5 + $0x908] sm:$0xf]
    %v1497 = vld [vmem:[#allocation5 + $0x90c] sm:$0xf]
    %v1498 = vld [vmem:[#allocation5 + $0x910] sm:$0xf]
    %v1499 = vld [vmem:[#allocation5 + $0x914] sm:$0xf]
    %v1500 = vld [vmem:[#allocation5 + $0x918] sm:$0xf]
    %v1501 = vld [vmem:[#allocation5 + $0x91c] sm:$0xf]
    %v1502 = vld [vmem:[#allocation5 + $0x920] sm:$0xf]
    %v1503 = vld [vmem:[#allocation5 + $0x924] sm:$0xf]
    %v1504 = vld [vmem:[#allocation5 + $0x928] sm:$0xf]
    %v1505 = vld [vmem:[#allocation5 + $0x92c] sm:$0xf]
    %v1506 = vld [vmem:[#allocation5 + $0x930] sm:$0xf]
    %v1507 = vld [vmem:[#allocation5 + $0x934] sm:$0xf]
    %v1508 = vld [vmem:[#allocation5 + $0x938] sm:$0xf]
    %v1509 = vld [vmem:[#allocation5 + $0x93c] sm:$0xf]
    %v1510 = vld [vmem:[#allocation5 + $0x940] sm:$0xf]
    %v1511 = vld [vmem:[#allocation5 + $0x944] sm:$0xf]
    %v1512 = vld [vmem:[#allocation5 + $0x948] sm:$0xf]
    %v1513 = vld [vmem:[#allocation5 + $0x94c] sm:$0xf]
    %v1514 = vld [vmem:[#allocation5 + $0x950] sm:$0xf]
    %v1515 = vld [vmem:[#allocation5 + $0x954] sm:$0xf]
    %v1516 = vld [vmem:[#allocation5 + $0x958] sm:$0xf]
    %v1517 = vld [vmem:[#allocation5 + $0x95c] sm:$0xf]
    %v1518 = vld [vmem:[#allocation5 + $0x960] sm:$0xf]
    %v1519 = vld [vmem:[#allocation5 + $0x964] sm:$0xf]
    %v1520 = vld [vmem:[#allocation5 + $0x968] sm:$0xf]
    %v1521 = vld [vmem:[#allocation5 + $0x96c] sm:$0xf]
    %v1522 = vld [vmem:[#allocation5 + $0x970] sm:$0xf]
    %v1523 = vld [vmem:[#allocation5 + $0x974] sm:$0xf]
    %v1524 = vld [vmem:[#allocation5 + $0x978] sm:$0xf]
    %v1525 = vld [vmem:[#allocation5 + $0x97c] sm:$0xf]
    %v1526 = vld [vmem:[#allocation5 + $0x980] sm:$0xf]
    %v1527 = vld [vmem:[#allocation5 + $0x984] sm:$0xf]
    %v1528 = vld [vmem:[#allocation5 + $0x988] sm:$0xf]
    %v1529 = vld [vmem:[#allocation5 + $0x98c] sm:$0xf]
    %v1530 = vld [vmem:[#allocation5 + $0x990] sm:$0xf]
    %v1531 = vld [vmem:[#allocation5 + $0x994] sm:$0xf]
    %v1532 = vld [vmem:[#allocation5 + $0x998] sm:$0xf]
    %v1533 = vld [vmem:[#allocation5 + $0x99c] sm:$0xf]
    %v1534 = vld [vmem:[#allocation5 + $0x9a0] sm:$0xf]
    %v1535 = vld [vmem:[#allocation5 + $0x9a4] sm:$0xf]
    %v1536 = vld [vmem:[#allocation5 + $0x9a8] sm:$0xf]
    %v1537 = vld [vmem:[#allocation5 + $0x9ac] sm:$0xf]
    %v1538 = vld [vmem:[#allocation5 + $0x9b0] sm:$0xf]
    %v1539 = vld [vmem:[#allocation5 + $0x9b4] sm:$0xf]
    %v1540 = vld [vmem:[#allocation5 + $0x9b8] sm:$0xf]
    %v1541 = vld [vmem:[#allocation5 + $0x9bc] sm:$0xf]
    %v1542 = vld [vmem:[#allocation5 + $0x9c0] sm:$0xf]
    %v1543 = vld [vmem:[#allocation5 + $0x9c4] sm:$0xf]
    %v1544 = vld [vmem:[#allocation5 + $0x9c8] sm:$0xf]
    %v1545 = vld [vmem:[#allocation5 + $0x9cc] sm:$0xf]
    %v1546 = vld [vmem:[#allocation5 + $0x9d0] sm:$0xf]
    %v1547 = vld [vmem:[#allocation5 + $0x9d4] sm:$0xf]
    %v1548 = vld [vmem:[#allocation5 + $0x9d8] sm:$0xf]
    %v1549 = vld [vmem:[#allocation5 + $0x9dc] sm:$0xf]
    %v1550 = vld [vmem:[#allocation5 + $0x9e0] sm:$0xf]
    %v1551 = vld [vmem:[#allocation5 + $0x9e4] sm:$0xf]
    %v1552 = vld [vmem:[#allocation5 + $0x9e8] sm:$0xf]
    %v1553 = vld [vmem:[#allocation5 + $0x9ec] sm:$0xf]
    %v1554 = vld [vmem:[#allocation5 + $0x9f0] sm:$0xf]
    %v1555 = vld [vmem:[#allocation5 + $0x9f4] sm:$0xf]
    %v1556 = vld [vmem:[#allocation5 + $0x9f8] sm:$0xf]
    %v1557 = vld [vmem:[#allocation5 + $0x9fc] sm:$0xf]
    %v1558 = vld [vmem:[#allocation5 + $0xa00] sm:$0xf]
    %v1559 = vld [vmem:[#allocation5 + $0xa04] sm:$0xf]
    %v1560 = vld [vmem:[#allocation5 + $0xa08] sm:$0xf]
    %v1561 = vld [vmem:[#allocation5 + $0xa0c] sm:$0xf]
    %v1562 = vld [vmem:[#allocation5 + $0xa10] sm:$0xf]
    %v1563 = vld [vmem:[#allocation5 + $0xa14] sm:$0xf]
    %v1564 = vld [vmem:[#allocation5 + $0xa18] sm:$0xf]
    %v1565 = vld [vmem:[#allocation5 + $0xa1c] sm:$0xf]
    %v1566 = vld [vmem:[#allocation5 + $0xa20] sm:$0xf]
    %v1567 = vld [vmem:[#allocation5 + $0xa24] sm:$0xf]
    %v1568 = vld [vmem:[#allocation5 + $0xa28] sm:$0xf]
    %v1569 = vld [vmem:[#allocation5 + $0xa2c] sm:$0xf]
    %v1570 = vld [vmem:[#allocation5 + $0xa30] sm:$0xf]
    %v1571 = vld [vmem:[#allocation5 + $0xa34] sm:$0xf]
    %v1572 = vld [vmem:[#allocation5 + $0xa38] sm:$0xf]
    %v1573 = vld [vmem:[#allocation5 + $0xa3c] sm:$0xf]
    %v1574 = vld [vmem:[#allocation5 + $0xa40] sm:$0xf]
    %v1575 = vld [vmem:[#allocation5 + $0xa44] sm:$0xf]
    %v1576 = vld [vmem:[#allocation5 + $0xa48] sm:$0xf]
    %v1577 = vld [vmem:[#allocation5 + $0xa4c] sm:$0xf]
    %v1578 = vld [vmem:[#allocation5 + $0xa50] sm:$0xf]
    %v1579 = vld [vmem:[#allocation5 + $0xa54] sm:$0xf]
    %v1580 = vld [vmem:[#allocation5 + $0xa58] sm:$0xf]
    %v1581 = vld [vmem:[#allocation5 + $0xa5c] sm:$0xf]
    %v1582 = vld [vmem:[#allocation5 + $0xa60] sm:$0xf]
    %v1583 = vld [vmem:[#allocation5 + $0xa64] sm:$0xf]
    %v1584 = vld [vmem:[#allocation5 + $0xa68] sm:$0xf]
    %v1585 = vld [vmem:[#allocation5 + $0xa6c] sm:$0xf]
    %v1586 = vld [vmem:[#allocation5 + $0xa70] sm:$0xf]
    %v1587 = vld [vmem:[#allocation5 + $0xa74] sm:$0xf]
    %v1588 = vld [vmem:[#allocation5 + $0xa78] sm:$0xf]
    %v1589 = vld [vmem:[#allocation5 + $0xa7c] sm:$0xf]
    %v1590 = vld [vmem:[#allocation5 + $0xa80] sm:$0xf]
    %v1591 = vld [vmem:[#allocation5 + $0xa84] sm:$0xf]
    %v1592 = vld [vmem:[#allocation5 + $0xa88] sm:$0xf]
    %v1593 = vld [vmem:[#allocation5 + $0xa8c] sm:$0xf]
    %v1594 = vld [vmem:[#allocation5 + $0xa90] sm:$0xf]
    %v1595 = vld [vmem:[#allocation5 + $0xa94] sm:$0xf]
    %v1596 = vld [vmem:[#allocation5 + $0xa98] sm:$0xf]
    %v1597 = vld [vmem:[#allocation5 + $0xa9c] sm:$0xf]
    %v1598 = vld [vmem:[#allocation5 + $0xaa0] sm:$0xf]
    %v1599 = vld [vmem:[#allocation5 + $0xaa4] sm:$0xf]
    %v1600 = vld [vmem:[#allocation5 + $0xaa8] sm:$0xf]
    %v1601 = vld [vmem:[#allocation5 + $0xaac] sm:$0xf]
    %v1602 = vld [vmem:[#allocation5 + $0xab0] sm:$0xf]
    %v1603 = vld [vmem:[#allocation5 + $0xab4] sm:$0xf]
    %v1604 = vld [vmem:[#allocation5 + $0xab8] sm:$0xf]
    %v1605 = vld [vmem:[#allocation5 + $0xabc] sm:$0xf]
    %v1606 = vld [vmem:[#allocation5 + $0xac0] sm:$0xf]
    %v1607 = vld [vmem:[#allocation5 + $0xac4] sm:$0xf]
    %v1608 = vld [vmem:[#allocation5 + $0xac8] sm:$0xf]
    %v1609 = vld [vmem:[#allocation5 + $0xacc] sm:$0xf]
    %v1610 = vld [vmem:[#allocation5 + $0xad0] sm:$0xf]
    %v1611 = vld [vmem:[#allocation5 + $0xad4] sm:$0xf]
    %v1612 = vld [vmem:[#allocation5 + $0xad8] sm:$0xf]
    %v1613 = vld [vmem:[#allocation5 + $0xadc] sm:$0xf]
    %v1614 = vld [vmem:[#allocation5 + $0xae0] sm:$0xf]
    %v1615 = vld [vmem:[#allocation5 + $0xae4] sm:$0xf]
    %v1616 = vld [vmem:[#allocation5 + $0xae8] sm:$0xf]
    %v1617 = vld [vmem:[#allocation5 + $0xaec] sm:$0xf]
    %v1618 = vld [vmem:[#allocation5 + $0xaf0] sm:$0xf]
    %v1619 = vld [vmem:[#allocation5 + $0xaf4] sm:$0xf]
    %v1620 = vld [vmem:[#allocation5 + $0xaf8] sm:$0xf]
    %v1621 = vld [vmem:[#allocation5 + $0xafc] sm:$0xf]
    %v1622 = vld [vmem:[#allocation5 + $0xb00] sm:$0xf]
    %v1623 = vld [vmem:[#allocation5 + $0xb04] sm:$0xf]
    %v1624 = vld [vmem:[#allocation5 + $0xb08] sm:$0xf]
    %v1625 = vld [vmem:[#allocation5 + $0xb0c] sm:$0xf]
    %v1626 = vld [vmem:[#allocation5 + $0xb10] sm:$0xf]
    %v1627 = vld [vmem:[#allocation5 + $0xb14] sm:$0xf]
    %v1628 = vld [vmem:[#allocation5 + $0xb18] sm:$0xf]
    %v1629 = vld [vmem:[#allocation5 + $0xb1c] sm:$0xf]
    %v1630 = vld [vmem:[#allocation5 + $0xb20] sm:$0xf]
    %v1631 = vld [vmem:[#allocation5 + $0xb24] sm:$0xf]
    %v1632 = vld [vmem:[#allocation5 + $0xb28] sm:$0xf]
    %v1633 = vld [vmem:[#allocation5 + $0xb2c] sm:$0xf]
    %v1634 = vld [vmem:[#allocation5 + $0xb30] sm:$0xf]
    %v1635 = vld [vmem:[#allocation5 + $0xb34] sm:$0xf]
    %v1636 = vld [vmem:[#allocation5 + $0xb38] sm:$0xf]
    %v1637 = vld [vmem:[#allocation5 + $0xb3c] sm:$0xf]
    %v1638 = vld [vmem:[#allocation5 + $0xb40] sm:$0xf]
    %v1639 = vld [vmem:[#allocation5 + $0xb44] sm:$0xf]
    %v1640 = vld [vmem:[#allocation5 + $0xb48] sm:$0xf]
    %v1641 = vld [vmem:[#allocation5 + $0xb4c] sm:$0xf]
    %v1642 = vld [vmem:[#allocation5 + $0xb50] sm:$0xf]
    %v1643 = vld [vmem:[#allocation5 + $0xb54] sm:$0xf]
    %v1644 = vld [vmem:[#allocation5 + $0xb58] sm:$0xf]
    %v1645 = vld [vmem:[#allocation5 + $0xb5c] sm:$0xf]
    %v1646 = vld [vmem:[#allocation5 + $0xb60] sm:$0xf]
    %v1647 = vld [vmem:[#allocation5 + $0xb64] sm:$0xf]
    %v1648 = vld [vmem:[#allocation5 + $0xb68] sm:$0xf]
    %v1649 = vld [vmem:[#allocation5 + $0xb6c] sm:$0xf]
    %v1650 = vld [vmem:[#allocation5 + $0xb70] sm:$0xf]
    %v1651 = vld [vmem:[#allocation5 + $0xb74] sm:$0xf]
    %v1652 = vld [vmem:[#allocation5 + $0xb78] sm:$0xf]
    %v1653 = vld [vmem:[#allocation5 + $0xb7c] sm:$0xf]
    %v1654 = vld [vmem:[#allocation5 + $0xb80] sm:$0xf]
    %v1655 = vld [vmem:[#allocation5 + $0xb84] sm:$0xf]
    %v1656 = vld [vmem:[#allocation5 + $0xb88] sm:$0xf]
    %v1657 = vld [vmem:[#allocation5 + $0xb8c] sm:$0xf]
    %v1658 = vld [vmem:[#allocation5 + $0xb90] sm:$0xf]
    %v1659 = vld [vmem:[#allocation5 + $0xb94] sm:$0xf]
    %v1660 = vld [vmem:[#allocation5 + $0xb98] sm:$0xf]
    %v1661 = vld [vmem:[#allocation5 + $0xb9c] sm:$0xf]
    %v1662 = vld [vmem:[#allocation5 + $0xba0] sm:$0xf]
    %v1663 = vld [vmem:[#allocation5 + $0xba4] sm:$0xf]
    %v1664 = vld [vmem:[#allocation5 + $0xba8] sm:$0xf]
    %v1665 = vld [vmem:[#allocation5 + $0xbac] sm:$0xf]
    %v1666 = vld [vmem:[#allocation5 + $0xbb0] sm:$0xf]
    %v1667 = vld [vmem:[#allocation5 + $0xbb4] sm:$0xf]
    %v1668 = vld [vmem:[#allocation5 + $0xbb8] sm:$0xf]
    %v1669 = vld [vmem:[#allocation5 + $0xbbc] sm:$0xf]
    %v1670 = vld [vmem:[#allocation5 + $0xbc0] sm:$0xf]
    %v1671 = vld [vmem:[#allocation5 + $0xbc4] sm:$0xf]
    %v1672 = vld [vmem:[#allocation5 + $0xbc8] sm:$0xf]
    %v1673 = vld [vmem:[#allocation5 + $0xbcc] sm:$0xf]
    %v1674 = vld [vmem:[#allocation5 + $0xbd0] sm:$0xf]
    %v1675 = vld [vmem:[#allocation5 + $0xbd4] sm:$0xf]
    %v1676 = vld [vmem:[#allocation5 + $0xbd8] sm:$0xf]
    %v1677 = vld [vmem:[#allocation5 + $0xbdc] sm:$0xf]
    %v1678 = vld [vmem:[#allocation5 + $0xbe0] sm:$0xf]
    %v1679 = vld [vmem:[#allocation5 + $0xbe4] sm:$0xf]
    %v1680 = vld [vmem:[#allocation5 + $0xbe8] sm:$0xf]
    %v1681 = vld [vmem:[#allocation5 + $0xbec] sm:$0xf]
    %v1682 = vld [vmem:[#allocation5 + $0xbf0] sm:$0xf]
    %v1683 = vld [vmem:[#allocation5 + $0xbf4] sm:$0xf]
    %v1684 = vld [vmem:[#allocation5 + $0xbf8] sm:$0xf]
    %v1685 = vld [vmem:[#allocation5 + $0xbfc] sm:$0xf]
    %v1686 = vld [vmem:[#allocation5 + $0xc00] sm:$0xf]
    %v1687 = vld [vmem:[#allocation5 + $0xc04] sm:$0xf]
    %v1688 = vld [vmem:[#allocation5 + $0xc08] sm:$0xf]
    %v1689 = vld [vmem:[#allocation5 + $0xc0c] sm:$0xf]
    %v1690 = vld [vmem:[#allocation5 + $0xc10] sm:$0xf]
    %v1691 = vld [vmem:[#allocation5 + $0xc14] sm:$0xf]
    %v1692 = vld [vmem:[#allocation5 + $0xc18] sm:$0xf]
    %v1693 = vld [vmem:[#allocation5 + $0xc1c] sm:$0xf]
    %v1694 = vld [vmem:[#allocation5 + $0xc20] sm:$0xf]
    %v1695 = vld [vmem:[#allocation5 + $0xc24] sm:$0xf]
    %v1696 = vld [vmem:[#allocation5 + $0xc28] sm:$0xf]
    %v1697 = vld [vmem:[#allocation5 + $0xc2c] sm:$0xf]
    %v1698 = vld [vmem:[#allocation5 + $0xc30] sm:$0xf]
    %v1699 = vld [vmem:[#allocation5 + $0xc34] sm:$0xf]
    %v1700 = vld [vmem:[#allocation5 + $0xc38] sm:$0xf]
    %v1701 = vld [vmem:[#allocation5 + $0xc3c] sm:$0xf]
    %v1702 = vld [vmem:[#allocation5 + $0xc40] sm:$0xf]
    %v1703 = vld [vmem:[#allocation5 + $0xc44] sm:$0xf]
    %v1704 = vld [vmem:[#allocation5 + $0xc48] sm:$0xf]
    %v1705 = vld [vmem:[#allocation5 + $0xc4c] sm:$0xf]
    %v1706 = vld [vmem:[#allocation5 + $0xc50] sm:$0xf]
    %v1707 = vld [vmem:[#allocation5 + $0xc54] sm:$0xf]
    %v1708 = vld [vmem:[#allocation5 + $0xc58] sm:$0xf]
    %v1709 = vld [vmem:[#allocation5 + $0xc5c] sm:$0xf]
    %v1710 = vld [vmem:[#allocation5 + $0xc60] sm:$0xf]
    %v1711 = vld [vmem:[#allocation5 + $0xc64] sm:$0xf]
    %v1712 = vld [vmem:[#allocation5 + $0xc68] sm:$0xf]
    %v1713 = vld [vmem:[#allocation5 + $0xc6c] sm:$0xf]
    %v1714 = vld [vmem:[#allocation5 + $0xc70] sm:$0xf]
    %v1715 = vld [vmem:[#allocation5 + $0xc74] sm:$0xf]
    %v1716 = vld [vmem:[#allocation5 + $0xc78] sm:$0xf]
    %v1717 = vld [vmem:[#allocation5 + $0xc7c] sm:$0xf]
    %v1718 = vld [vmem:[#allocation5 + $0xc80] sm:$0xf]
    %v1719 = vld [vmem:[#allocation5 + $0xc84] sm:$0xf]
    %v1720 = vld [vmem:[#allocation5 + $0xc88] sm:$0xf]
    %v1721 = vld [vmem:[#allocation5 + $0xc8c] sm:$0xf]
    %v1722 = vld [vmem:[#allocation5 + $0xc90] sm:$0xf]
    %v1723 = vld [vmem:[#allocation5 + $0xc94] sm:$0xf]
    %v1724 = vld [vmem:[#allocation5 + $0xc98] sm:$0xf]
    %v1725 = vld [vmem:[#allocation5 + $0xc9c] sm:$0xf]
    %v1726 = vld [vmem:[#allocation5 + $0xca0] sm:$0xf]
    %v1727 = vld [vmem:[#allocation5 + $0xca4] sm:$0xf]
    %v1728 = vld [vmem:[#allocation5 + $0xca8] sm:$0xf]
    %v1729 = vld [vmem:[#allocation5 + $0xcac] sm:$0xf]
    %v1730 = vld [vmem:[#allocation5 + $0xcb0] sm:$0xf]
    %v1731 = vld [vmem:[#allocation5 + $0xcb4] sm:$0xf]
    %v1732 = vld [vmem:[#allocation5 + $0xcb8] sm:$0xf]
    %v1733 = vld [vmem:[#allocation5 + $0xcbc] sm:$0xf]
    %v1734 = vld [vmem:[#allocation5 + $0xcc0] sm:$0xf]
    %v1735 = vld [vmem:[#allocation5 + $0xcc4] sm:$0xf]
    %v1736 = vld [vmem:[#allocation5 + $0xcc8] sm:$0xf]
    %v1737 = vld [vmem:[#allocation5 + $0xccc] sm:$0xf]
    %v1738 = vld [vmem:[#allocation5 + $0xcd0] sm:$0xf]
    %v1739 = vld [vmem:[#allocation5 + $0xcd4] sm:$0xf]
    %v1740 = vld [vmem:[#allocation5 + $0xcd8] sm:$0xf]
    %v1741 = vld [vmem:[#allocation5 + $0xcdc] sm:$0xf]
    %v1742 = vld [vmem:[#allocation5 + $0xce0] sm:$0xf]
    %v1743 = vld [vmem:[#allocation5 + $0xce4] sm:$0xf]
    %v1744 = vld [vmem:[#allocation5 + $0xce8] sm:$0xf]
    %v1745 = vld [vmem:[#allocation5 + $0xcec] sm:$0xf]
    %v1746 = vld [vmem:[#allocation5 + $0xcf0] sm:$0xf]
    %v1747 = vld [vmem:[#allocation5 + $0xcf4] sm:$0xf]
    %v1748 = vld [vmem:[#allocation5 + $0xcf8] sm:$0xf]
    %v1749 = vld [vmem:[#allocation5 + $0xcfc] sm:$0xf]
    %v1750 = vld [vmem:[#allocation5 + $0xd00] sm:$0xf]
    %v1751 = vld [vmem:[#allocation5 + $0xd04] sm:$0xf]
    %v1752 = vld [vmem:[#allocation5 + $0xd08] sm:$0xf]
    %v1753 = vld [vmem:[#allocation5 + $0xd0c] sm:$0xf]
    %v1754 = vld [vmem:[#allocation5 + $0xd10] sm:$0xf]
    %v1755 = vld [vmem:[#allocation5 + $0xd14] sm:$0xf]
    %v1756 = vld [vmem:[#allocation5 + $0xd18] sm:$0xf]
    %v1757 = vld [vmem:[#allocation5 + $0xd1c] sm:$0xf]
    %v1758 = vld [vmem:[#allocation5 + $0xd20] sm:$0xf]
    %v1759 = vld [vmem:[#allocation5 + $0xd24] sm:$0xf]
    %v1760 = vld [vmem:[#allocation5 + $0xd28] sm:$0xf]
    %v1761 = vld [vmem:[#allocation5 + $0xd2c] sm:$0xf]
    %v1762 = vld [vmem:[#allocation5 + $0xd30] sm:$0xf]
    %v1763 = vld [vmem:[#allocation5 + $0xd34] sm:$0xf]
    %v1764 = vld [vmem:[#allocation5 + $0xd38] sm:$0xf]
    %v1765 = vld [vmem:[#allocation5 + $0xd3c] sm:$0xf]
    %v1766 = vld [vmem:[#allocation5 + $0xd40] sm:$0xf]
    %v1767 = vld [vmem:[#allocation5 + $0xd44] sm:$0xf]
    %v1768 = vld [vmem:[#allocation5 + $0xd48] sm:$0xf]
    %v1769 = vld [vmem:[#allocation5 + $0xd4c] sm:$0xf]
    %v1770 = vld [vmem:[#allocation5 + $0xd50] sm:$0xf]
    %v1771 = vld [vmem:[#allocation5 + $0xd54] sm:$0xf]
    %v1772 = vld [vmem:[#allocation5 + $0xd58] sm:$0xf]
    %v1773 = vld [vmem:[#allocation5 + $0xd5c] sm:$0xf]
    %v1774 = vld [vmem:[#allocation5 + $0xd60] sm:$0xf]
    %v1775 = vld [vmem:[#allocation5 + $0xd64] sm:$0xf]
    %v1776 = vld [vmem:[#allocation5 + $0xd68] sm:$0xf]
    %v1777 = vld [vmem:[#allocation5 + $0xd6c] sm:$0xf]
    %v1778 = vld [vmem:[#allocation5 + $0xd70] sm:$0xf]
    %v1779 = vld [vmem:[#allocation5 + $0xd74] sm:$0xf]
    %v1780 = vld [vmem:[#allocation5 + $0xd78] sm:$0xf]
    %v1781 = vld [vmem:[#allocation5 + $0xd7c] sm:$0xf]
    %v1782 = vld [vmem:[#allocation5 + $0xd80] sm:$0xf]
    %v1783 = vld [vmem:[#allocation5 + $0xd84] sm:$0xf]
    %v1784 = vld [vmem:[#allocation5 + $0xd88] sm:$0xf]
    %v1785 = vld [vmem:[#allocation5 + $0xd8c] sm:$0xf]
    %v1786 = vld [vmem:[#allocation5 + $0xd90] sm:$0xf]
    %v1787 = vld [vmem:[#allocation5 + $0xd94] sm:$0xf]
    %v1788 = vld [vmem:[#allocation5 + $0xd98] sm:$0xf]
    %v1789 = vld [vmem:[#allocation5 + $0xd9c] sm:$0xf]
    %v1790 = vld [vmem:[#allocation5 + $0xda0] sm:$0xf]
    %v1791 = vld [vmem:[#allocation5 + $0xda4] sm:$0xf]
    %v1792 = vld [vmem:[#allocation5 + $0xda8] sm:$0xf]
    %v1793 = vld [vmem:[#allocation5 + $0xdac] sm:$0xf]
    %v1794 = vld [vmem:[#allocation5 + $0xdb0] sm:$0xf]
    %v1795 = vld [vmem:[#allocation5 + $0xdb4] sm:$0xf]
    %v1796 = vld [vmem:[#allocation5 + $0xdb8] sm:$0xf]
    %v1797 = vld [vmem:[#allocation5 + $0xdbc] sm:$0xf]
    %v1798 = vld [vmem:[#allocation5 + $0xdc0] sm:$0xf]
    %v1799 = vld [vmem:[#allocation5 + $0xdc4] sm:$0xf]
    %v1800 = vld [vmem:[#allocation5 + $0xdc8] sm:$0xf]
    %v1801 = vld [vmem:[#allocation5 + $0xdcc] sm:$0xf]
    %v1802 = vld [vmem:[#allocation5 + $0xdd0] sm:$0xf]
    %v1803 = vld [vmem:[#allocation5 + $0xdd4] sm:$0xf]
    %v1804 = vld [vmem:[#allocation5 + $0xdd8] sm:$0xf]
    %v1805 = vld [vmem:[#allocation5 + $0xddc] sm:$0xf]
    %v1806 = vld [vmem:[#allocation5 + $0xde0] sm:$0xf]
    %v1807 = vld [vmem:[#allocation5 + $0xde4] sm:$0xf]
    %v1808 = vld [vmem:[#allocation5 + $0xde8] sm:$0xf]
    %v1809 = vld [vmem:[#allocation5 + $0xdec] sm:$0xf]
    %v1810 = vld [vmem:[#allocation5 + $0xdf0] sm:$0xf]
    %v1811 = vld [vmem:[#allocation5 + $0xdf4] sm:$0xf]
    %v1812 = vld [vmem:[#allocation5 + $0xdf8] sm:$0xf]
    %v1813 = vld [vmem:[#allocation5 + $0xdfc] sm:$0xf]
    %v1814 = vld [vmem:[#allocation5 + $0xe00] sm:$0xf]
    %v1815 = vld [vmem:[#allocation5 + $0xe04] sm:$0xf]
    %v1816 = vld [vmem:[#allocation5 + $0xe08] sm:$0xf]
    %v1817 = vld [vmem:[#allocation5 + $0xe0c] sm:$0xf]
    %v1818 = vld [vmem:[#allocation5 + $0xe10] sm:$0xf]
    %v1819 = vld [vmem:[#allocation5 + $0xe14] sm:$0xf]
    %v1820 = vld [vmem:[#allocation5 + $0xe18] sm:$0xf]
    %v1821 = vld [vmem:[#allocation5 + $0xe1c] sm:$0xf]
    %v1822 = vld [vmem:[#allocation5 + $0xe20] sm:$0xf]
    %v1823 = vld [vmem:[#allocation5 + $0xe24] sm:$0xf]
    %v1824 = vld [vmem:[#allocation5 + $0xe28] sm:$0xf]
    %v1825 = vld [vmem:[#allocation5 + $0xe2c] sm:$0xf]
    %v1826 = vld [vmem:[#allocation5 + $0xe30] sm:$0xf]
    %v1827 = vld [vmem:[#allocation5 + $0xe34] sm:$0xf]
    %v1828 = vld [vmem:[#allocation5 + $0xe38] sm:$0xf]
    %v1829 = vld [vmem:[#allocation5 + $0xe3c] sm:$0xf]
    %v1830 = vld [vmem:[#allocation5 + $0xe40] sm:$0xf]
    %v1831 = vld [vmem:[#allocation5 + $0xe44] sm:$0xf]
    %v1832 = vld [vmem:[#allocation5 + $0xe48] sm:$0xf]
    %v1833 = vld [vmem:[#allocation5 + $0xe4c] sm:$0xf]
    %v1834 = vld [vmem:[#allocation5 + $0xe50] sm:$0xf]
    %v1835 = vld [vmem:[#allocation5 + $0xe54] sm:$0xf]
    %v1836 = vld [vmem:[#allocation5 + $0xe58] sm:$0xf]
    %v1837 = vld [vmem:[#allocation5 + $0xe5c] sm:$0xf]
    %v1838 = vld [vmem:[#allocation5 + $0xe60] sm:$0xf]
    %v1839 = vld [vmem:[#allocation5 + $0xe64] sm:$0xf]
    %v1840 = vld [vmem:[#allocation5 + $0xe68] sm:$0xf]
    %v1841 = vld [vmem:[#allocation5 + $0xe6c] sm:$0xf]
    %v1842 = vld [vmem:[#allocation5 + $0xe70] sm:$0xf]
    %v1843 = vld [vmem:[#allocation5 + $0xe74] sm:$0xf]
    %v1844 = vld [vmem:[#allocation5 + $0xe78] sm:$0xf]
    %v1845 = vld [vmem:[#allocation5 + $0xe7c] sm:$0xf]
    %v1846 = vld [vmem:[#allocation5 + $0xe80] sm:$0xf]
    %v1847 = vld [vmem:[#allocation5 + $0xe84] sm:$0xf]
    %v1848 = vld [vmem:[#allocation5 + $0xe88] sm:$0xf]
    %v1849 = vld [vmem:[#allocation5 + $0xe8c] sm:$0xf]
    %v1850 = vld [vmem:[#allocation5 + $0xe90] sm:$0xf]
    %v1851 = vld [vmem:[#allocation5 + $0xe94] sm:$0xf]
    %v1852 = vld [vmem:[#allocation5 + $0xe98] sm:$0xf]
    %v1853 = vld [vmem:[#allocation5 + $0xe9c] sm:$0xf]
    %v1854 = vld [vmem:[#allocation5 + $0xea0] sm:$0xf]
    %v1855 = vld [vmem:[#allocation5 + $0xea4] sm:$0xf]
    %v1856 = vld [vmem:[#allocation5 + $0xea8] sm:$0xf]
    %v1857 = vld [vmem:[#allocation5 + $0xeac] sm:$0xf]
    %v1858 = vld [vmem:[#allocation5 + $0xeb0] sm:$0xf]
    %v1859 = vld [vmem:[#allocation5 + $0xeb4] sm:$0xf]
    %v1860 = vld [vmem:[#allocation5 + $0xeb8] sm:$0xf]
    %v1861 = vld [vmem:[#allocation5 + $0xebc] sm:$0xf]
    %v1862 = vld [vmem:[#allocation5 + $0xec0] sm:$0xf]
    %v1863 = vld [vmem:[#allocation5 + $0xec4] sm:$0xf]
    %v1864 = vld [vmem:[#allocation5 + $0xec8] sm:$0xf]
    %v1865 = vld [vmem:[#allocation5 + $0xecc] sm:$0xf]
    %v1866 = vld [vmem:[#allocation5 + $0xed0] sm:$0xf]
    %v1867 = vld [vmem:[#allocation5 + $0xed4] sm:$0xf]
    %v1868 = vld [vmem:[#allocation5 + $0xed8] sm:$0xf]
    %v1869 = vld [vmem:[#allocation5 + $0xedc] sm:$0xf]
    %v1870 = vld [vmem:[#allocation5 + $0xee0] sm:$0xf]
    %v1871 = vld [vmem:[#allocation5 + $0xee4] sm:$0xf]
    %v1872 = vld [vmem:[#allocation5 + $0xee8] sm:$0xf]
    %v1873 = vld [vmem:[#allocation5 + $0xeec] sm:$0xf]
    %v1874 = vld [vmem:[#allocation5 + $0xef0] sm:$0xf]
    %v1875 = vld [vmem:[#allocation5 + $0xef4] sm:$0xf]
    %v1876 = vld [vmem:[#allocation5 + $0xef8] sm:$0xf]
    %v1877 = vld [vmem:[#allocation5 + $0xefc] sm:$0xf]
    %v1878 = vld [vmem:[#allocation5 + $0xf00] sm:$0xf]
    %v1879 = vld [vmem:[#allocation5 + $0xf04] sm:$0xf]
    %v1880 = vld [vmem:[#allocation5 + $0xf08] sm:$0xf]
    %v1881 = vld [vmem:[#allocation5 + $0xf0c] sm:$0xf]
    %v1882 = vld [vmem:[#allocation5 + $0xf10] sm:$0xf]
    %v1883 = vld [vmem:[#allocation5 + $0xf14] sm:$0xf]
    %v1884 = vld [vmem:[#allocation5 + $0xf18] sm:$0xf]
    %v1885 = vld [vmem:[#allocation5 + $0xf1c] sm:$0xf]
    %v1886 = vld [vmem:[#allocation5 + $0xf20] sm:$0xf]
    %v1887 = vld [vmem:[#allocation5 + $0xf24] sm:$0xf]
    %v1888 = vld [vmem:[#allocation5 + $0xf28] sm:$0xf]
    %v1889 = vld [vmem:[#allocation5 + $0xf2c] sm:$0xf]
    %v1890 = vld [vmem:[#allocation5 + $0xf30] sm:$0xf]
    %v1891 = vld [vmem:[#allocation5 + $0xf34] sm:$0xf]
    %v1892 = vld [vmem:[#allocation5 + $0xf38] sm:$0xf]
    %v1893 = vld [vmem:[#allocation5 + $0xf3c] sm:$0xf]
    %v1894 = vld [vmem:[#allocation5 + $0xf40] sm:$0xf]
    %v1895 = vld [vmem:[#allocation5 + $0xf44] sm:$0xf]
    %v1896 = vld [vmem:[#allocation5 + $0xf48] sm:$0xf]
    %v1897 = vld [vmem:[#allocation5 + $0xf4c] sm:$0xf]
    %v1898 = vld [vmem:[#allocation5 + $0xf50] sm:$0xf]
    %v1899 = vld [vmem:[#allocation5 + $0xf54] sm:$0xf]
    %v1900 = vld [vmem:[#allocation5 + $0xf58] sm:$0xf]
    %v1901 = vld [vmem:[#allocation5 + $0xf5c] sm:$0xf]
    %v1902 = vld [vmem:[#allocation5 + $0xf60] sm:$0xf]
    %v1903 = vld [vmem:[#allocation5 + $0xf64] sm:$0xf]
    %v1904 = vld [vmem:[#allocation5 + $0xf68] sm:$0xf]
    %v1905 = vld [vmem:[#allocation5 + $0xf6c] sm:$0xf]
    %v1906 = vld [vmem:[#allocation5 + $0xf70] sm:$0xf]
    %v1907 = vld [vmem:[#allocation5 + $0xf74] sm:$0xf]
    %v1908 = vld [vmem:[#allocation5 + $0xf78] sm:$0xf]
    %v1909 = vld [vmem:[#allocation5 + $0xf7c] sm:$0xf]
    %v1910 = vld [vmem:[#allocation5 + $0xf80] sm:$0xf]
    %v1911 = vld [vmem:[#allocation5 + $0xf84] sm:$0xf]
    %v1912 = vld [vmem:[#allocation5 + $0xf88] sm:$0xf]
    %v1913 = vld [vmem:[#allocation5 + $0xf8c] sm:$0xf]
    %v1914 = vld [vmem:[#allocation5 + $0xf90] sm:$0xf]
    %v1915 = vld [vmem:[#allocation5 + $0xf94] sm:$0xf]
    %v1916 = vld [vmem:[#allocation5 + $0xf98] sm:$0xf]
    %v1917 = vld [vmem:[#allocation5 + $0xf9c] sm:$0xf]
    %v1918 = vld [vmem:[#allocation5 + $0xfa0] sm:$0xf]
    %v1919 = vld [vmem:[#allocation5 + $0xfa4] sm:$0xf]
    %v1920 = vld [vmem:[#allocation5 + $0xfa8] sm:$0xf]
    %v1921 = vld [vmem:[#allocation5 + $0xfac] sm:$0xf]
    %v1922 = vld [vmem:[#allocation5 + $0xfb0] sm:$0xf]
    %v1923 = vld [vmem:[#allocation5 + $0xfb4] sm:$0xf]
    %v1924 = vld [vmem:[#allocation5 + $0xfb8] sm:$0xf]
    %v1925 = vld [vmem:[#allocation5 + $0xfbc] sm:$0xf]
    %v1926 = vld [vmem:[#allocation5 + $0xfc0] sm:$0xf]
    %v1927 = vld [vmem:[#allocation5 + $0xfc4] sm:$0xf]
    %v1928 = vld [vmem:[#allocation5 + $0xfc8] sm:$0xf]
    %v1929 = vld [vmem:[#allocation5 + $0xfcc] sm:$0xf]
    %v1930 = vld [vmem:[#allocation5 + $0xfd0] sm:$0xf]
    %v1931 = vld [vmem:[#allocation5 + $0xfd4] sm:$0xf]
    %v1932 = vld [vmem:[#allocation5 + $0xfd8] sm:$0xf]
    %v1933 = vld [vmem:[#allocation5 + $0xfdc] sm:$0xf]
    %v1934 = vld [vmem:[#allocation5 + $0xfe0] sm:$0xf]
    %v1935 = vld [vmem:[#allocation5 + $0xfe4] sm:$0xf]
    %v1936 = vld [vmem:[#allocation5 + $0xfe8] sm:$0xf]
    %v1937 = vld [vmem:[#allocation5 + $0xfec] sm:$0xf]
    %v1938 = vld [vmem:[#allocation5 + $0xff0] sm:$0xf]
    %v1939 = vld [vmem:[#allocation5 + $0xff4] sm:$0xf]
    %v1940 = vld [vmem:[#allocation5 + $0xff8] sm:$0xf]
    %v1941 = vld [vmem:[#allocation5 + $0xffc] sm:$0xf]
    %v1942 = vld [vmem:[#allocation7] sm:$0x1]
    %v1944 = vlaneseq
    %v1945 = vshrl.u32 %v1944, 7
    %v1946 = vsub.s32 0, %v1945
    %v1947 = vrot.slane %v1942, %v1946
    %v2973 = vunpack.c.l.b16 %v918
    %v2974 = vunpack.c.l.b16 %v919
    %v2975 = vunpack.c.l.b16 %v920
    %v2976 = vunpack.c.l.b16 %v921
    %v2977 = vunpack.c.l.b16 %v922
    %v2978 = vunpack.c.l.b16 %v923
    %v2979 = vunpack.c.l.b16 %v924
    %v2980 = vunpack.c.l.b16 %v925
    %v2981 = vunpack.c.l.b16 %v926
    %v2982 = vunpack.c.l.b16 %v927
    %v2983 = vunpack.c.l.b16 %v928
    %v2984 = vunpack.c.l.b16 %v929
    %v2985 = vunpack.c.l.b16 %v930
    %v2986 = vunpack.c.l.b16 %v931
    %v2987 = vunpack.c.l.b16 %v932
    %v2988 = vunpack.c.l.b16 %v933
    %v2989 = vunpack.c.l.b16 %v934
    %v2990 = vunpack.c.l.b16 %v935
    %v2991 = vunpack.c.l.b16 %v936
    %v2992 = vunpack.c.l.b16 %v937
    %v2993 = vunpack.c.l.b16 %v938
    %v2994 = vunpack.c.l.b16 %v939
    %v2995 = vunpack.c.l.b16 %v940
    %v2996 = vunpack.c.l.b16 %v941
    %v2997 = vunpack.c.l.b16 %v942
    %v2998 = vunpack.c.l.b16 %v943
    %v2999 = vunpack.c.l.b16 %v944
    %v3000 = vunpack.c.l.b16 %v945
    %v3001 = vunpack.c.l.b16 %v946
    %v3002 = vunpack.c.l.b16 %v947
    %v3003 = vunpack.c.l.b16 %v948
    %v3004 = vunpack.c.l.b16 %v949
    %v3005 = vunpack.c.l.b16 %v950
    %v3006 = vunpack.c.l.b16 %v951
    %v3007 = vunpack.c.l.b16 %v952
    %v3008 = vunpack.c.l.b16 %v953
    %v3009 = vunpack.c.l.b16 %v954
    %v3010 = vunpack.c.l.b16 %v955
    %v3011 = vunpack.c.l.b16 %v956
    %v3012 = vunpack.c.l.b16 %v957
    %v3013 = vunpack.c.l.b16 %v958
    %v3014 = vunpack.c.l.b16 %v959
    %v3015 = vunpack.c.l.b16 %v960
    %v3016 = vunpack.c.l.b16 %v961
    %v3017 = vunpack.c.l.b16 %v962
    %v3018 = vunpack.c.l.b16 %v963
    %v3019 = vunpack.c.l.b16 %v964
    %v3020 = vunpack.c.l.b16 %v965
    %v3021 = vunpack.c.l.b16 %v966
    %v3022 = vunpack.c.l.b16 %v967
    %v3023 = vunpack.c.l.b16 %v968
    %v3024 = vunpack.c.l.b16 %v969
    %v3025 = vunpack.c.l.b16 %v970
    %v3026 = vunpack.c.l.b16 %v971
    %v3027 = vunpack.c.l.b16 %v972
    %v3028 = vunpack.c.l.b16 %v973
    %v3029 = vunpack.c.l.b16 %v974
    %v3030 = vunpack.c.l.b16 %v975
    %v3031 = vunpack.c.l.b16 %v976
    %v3032 = vunpack.c.l.b16 %v977
    %v3033 = vunpack.c.l.b16 %v978
    %v3034 = vunpack.c.l.b16 %v979
    %v3035 = vunpack.c.l.b16 %v980
    %v3036 = vunpack.c.l.b16 %v981
    %v3037 = vunpack.c.l.b16 %v982
    %v3038 = vunpack.c.l.b16 %v983
    %v3039 = vunpack.c.l.b16 %v984
    %v3040 = vunpack.c.l.b16 %v985
    %v3041 = vunpack.c.l.b16 %v986
    %v3042 = vunpack.c.l.b16 %v987
    %v3043 = vunpack.c.l.b16 %v988
    %v3044 = vunpack.c.l.b16 %v989
    %v3045 = vunpack.c.l.b16 %v990
    %v3046 = vunpack.c.l.b16 %v991
    %v3047 = vunpack.c.l.b16 %v992
    %v3048 = vunpack.c.l.b16 %v993
    %v3049 = vunpack.c.l.b16 %v994
    %v3050 = vunpack.c.l.b16 %v995
    %v3051 = vunpack.c.l.b16 %v996
    %v3052 = vunpack.c.l.b16 %v997
    %v3053 = vunpack.c.l.b16 %v998
    %v3054 = vunpack.c.l.b16 %v999
    %v3055 = vunpack.c.l.b16 %v1000
    %v3056 = vunpack.c.l.b16 %v1001
    %v3057 = vunpack.c.l.b16 %v1002
    %v3058 = vunpack.c.l.b16 %v1003
    %v3059 = vunpack.c.l.b16 %v1004
    %v3060 = vunpack.c.l.b16 %v1005
    %v3061 = vunpack.c.l.b16 %v1006
    %v3062 = vunpack.c.l.b16 %v1007
    %v3063 = vunpack.c.l.b16 %v1008
    %v3064 = vunpack.c.l.b16 %v1009
    %v3065 = vunpack.c.l.b16 %v1010
    %v3066 = vunpack.c.l.b16 %v1011
    %v3067 = vunpack.c.l.b16 %v1012
    %v3068 = vunpack.c.l.b16 %v1013
    %v3069 = vunpack.c.l.b16 %v1014
    %v3070 = vunpack.c.l.b16 %v1015
    %v3071 = vunpack.c.l.b16 %v1016
    %v3072 = vunpack.c.l.b16 %v1017
    %v3073 = vunpack.c.l.b16 %v1018
    %v3074 = vunpack.c.l.b16 %v1019
    %v3075 = vunpack.c.l.b16 %v1020
    %v3076 = vunpack.c.l.b16 %v1021
    %v3077 = vunpack.c.l.b16 %v1022
    %v3078 = vunpack.c.l.b16 %v1023
    %v3079 = vunpack.c.l.b16 %v1024
    %v3080 = vunpack.c.l.b16 %v1025
    %v3081 = vunpack.c.l.b16 %v1026
    %v3082 = vunpack.c.l.b16 %v1027
    %v3083 = vunpack.c.l.b16 %v1028
    %v3084 = vunpack.c.l.b16 %v1029
    %v3085 = vunpack.c.l.b16 %v1030
    %v3086 = vunpack.c.l.b16 %v1031
    %v3087 = vunpack.c.l.b16 %v1032
    %v3088 = vunpack.c.l.b16 %v1033
    %v3089 = vunpack.c.l.b16 %v1034
    %v3090 = vunpack.c.l.b16 %v1035
    %v3091 = vunpack.c.l.b16 %v1036
    %v3092 = vunpack.c.l.b16 %v1037
    %v3093 = vunpack.c.l.b16 %v1038
    %v3094 = vunpack.c.l.b16 %v1039
    %v3095 = vunpack.c.l.b16 %v1040
    %v3096 = vunpack.c.l.b16 %v1041
    %v3097 = vunpack.c.l.b16 %v1042
    %v3098 = vunpack.c.l.b16 %v1043
    %v3099 = vunpack.c.l.b16 %v1044
    %v3100 = vunpack.c.l.b16 %v1045
    %v3101 = vunpack.c.l.b16 %v1046
    %v3102 = vunpack.c.l.b16 %v1047
    %v3103 = vunpack.c.l.b16 %v1048
    %v3104 = vunpack.c.l.b16 %v1049
    %v3105 = vunpack.c.l.b16 %v1050
    %v3106 = vunpack.c.l.b16 %v1051
    %v3107 = vunpack.c.l.b16 %v1052
    %v3108 = vunpack.c.l.b16 %v1053
    %v3109 = vunpack.c.l.b16 %v1054
    %v3110 = vunpack.c.l.b16 %v1055
    %v3111 = vunpack.c.l.b16 %v1056
    %v3112 = vunpack.c.l.b16 %v1057
    %v3113 = vunpack.c.l.b16 %v1058
    %v3114 = vunpack.c.l.b16 %v1059
    %v3115 = vunpack.c.l.b16 %v1060
    %v3116 = vunpack.c.l.b16 %v1061
    %v3117 = vunpack.c.l.b16 %v1062
    %v3118 = vunpack.c.l.b16 %v1063
    %v3119 = vunpack.c.l.b16 %v1064
    %v3120 = vunpack.c.l.b16 %v1065
    %v3121 = vunpack.c.l.b16 %v1066
    %v3122 = vunpack.c.l.b16 %v1067
    %v3123 = vunpack.c.l.b16 %v1068
    %v3124 = vunpack.c.l.b16 %v1069
    %v3125 = vunpack.c.l.b16 %v1070
    %v3126 = vunpack.c.l.b16 %v1071
    %v3127 = vunpack.c.l.b16 %v1072
    %v3128 = vunpack.c.l.b16 %v1073
    %v3129 = vunpack.c.l.b16 %v1074
    %v3130 = vunpack.c.l.b16 %v1075
    %v3131 = vunpack.c.l.b16 %v1076
    %v3132 = vunpack.c.l.b16 %v1077
    %v3133 = vunpack.c.l.b16 %v1078
    %v3134 = vunpack.c.l.b16 %v1079
    %v3135 = vunpack.c.l.b16 %v1080
    %v3136 = vunpack.c.l.b16 %v1081
    %v3137 = vunpack.c.l.b16 %v1082
    %v3138 = vunpack.c.l.b16 %v1083
    %v3139 = vunpack.c.l.b16 %v1084
    %v3140 = vunpack.c.l.b16 %v1085
    %v3141 = vunpack.c.l.b16 %v1086
    %v3142 = vunpack.c.l.b16 %v1087
    %v3143 = vunpack.c.l.b16 %v1088
    %v3144 = vunpack.c.l.b16 %v1089
    %v3145 = vunpack.c.l.b16 %v1090
    %v3146 = vunpack.c.l.b16 %v1091
    %v3147 = vunpack.c.l.b16 %v1092
    %v3148 = vunpack.c.l.b16 %v1093
    %v3149 = vunpack.c.l.b16 %v1094
    %v3150 = vunpack.c.l.b16 %v1095
    %v3151 = vunpack.c.l.b16 %v1096
    %v3152 = vunpack.c.l.b16 %v1097
    %v3153 = vunpack.c.l.b16 %v1098
    %v3154 = vunpack.c.l.b16 %v1099
    %v3155 = vunpack.c.l.b16 %v1100
    %v3156 = vunpack.c.l.b16 %v1101
    %v3157 = vunpack.c.l.b16 %v1102
    %v3158 = vunpack.c.l.b16 %v1103
    %v3159 = vunpack.c.l.b16 %v1104
    %v3160 = vunpack.c.l.b16 %v1105
    %v3161 = vunpack.c.l.b16 %v1106
    %v3162 = vunpack.c.l.b16 %v1107
    %v3163 = vunpack.c.l.b16 %v1108
    %v3164 = vunpack.c.l.b16 %v1109
    %v3165 = vunpack.c.l.b16 %v1110
    %v3166 = vunpack.c.l.b16 %v1111
    %v3167 = vunpack.c.l.b16 %v1112
    %v3168 = vunpack.c.l.b16 %v1113
    %v3169 = vunpack.c.l.b16 %v1114
    %v3170 = vunpack.c.l.b16 %v1115
    %v3171 = vunpack.c.l.b16 %v1116
    %v3172 = vunpack.c.l.b16 %v1117
    %v3173 = vunpack.c.l.b16 %v1118
    %v3174 = vunpack.c.l.b16 %v1119
    %v3175 = vunpack.c.l.b16 %v1120
    %v3176 = vunpack.c.l.b16 %v1121
    %v3177 = vunpack.c.l.b16 %v1122
    %v3178 = vunpack.c.l.b16 %v1123
    %v3179 = vunpack.c.l.b16 %v1124
    %v3180 = vunpack.c.l.b16 %v1125
    %v3181 = vunpack.c.l.b16 %v1126
    %v3182 = vunpack.c.l.b16 %v1127
    %v3183 = vunpack.c.l.b16 %v1128
    %v3184 = vunpack.c.l.b16 %v1129
    %v3185 = vunpack.c.l.b16 %v1130
    %v3186 = vunpack.c.l.b16 %v1131
    %v3187 = vunpack.c.l.b16 %v1132
    %v3188 = vunpack.c.l.b16 %v1133
    %v3189 = vunpack.c.l.b16 %v1134
    %v3190 = vunpack.c.l.b16 %v1135
    %v3191 = vunpack.c.l.b16 %v1136
    %v3192 = vunpack.c.l.b16 %v1137
    %v3193 = vunpack.c.l.b16 %v1138
    %v3194 = vunpack.c.l.b16 %v1139
    %v3195 = vunpack.c.l.b16 %v1140
    %v3196 = vunpack.c.l.b16 %v1141
    %v3197 = vunpack.c.l.b16 %v1142
    %v3198 = vunpack.c.l.b16 %v1143
    %v3199 = vunpack.c.l.b16 %v1144
    %v3200 = vunpack.c.l.b16 %v1145
    %v3201 = vunpack.c.l.b16 %v1146
    %v3202 = vunpack.c.l.b16 %v1147
    %v3203 = vunpack.c.l.b16 %v1148
    %v3204 = vunpack.c.l.b16 %v1149
    %v3205 = vunpack.c.l.b16 %v1150
    %v3206 = vunpack.c.l.b16 %v1151
    %v3207 = vunpack.c.l.b16 %v1152
    %v3208 = vunpack.c.l.b16 %v1153
    %v3209 = vunpack.c.l.b16 %v1154
    %v3210 = vunpack.c.l.b16 %v1155
    %v3211 = vunpack.c.l.b16 %v1156
    %v3212 = vunpack.c.l.b16 %v1157
    %v3213 = vunpack.c.l.b16 %v1158
    %v3214 = vunpack.c.l.b16 %v1159
    %v3215 = vunpack.c.l.b16 %v1160
    %v3216 = vunpack.c.l.b16 %v1161
    %v3217 = vunpack.c.l.b16 %v1162
    %v3218 = vunpack.c.l.b16 %v1163
    %v3219 = vunpack.c.l.b16 %v1164
    %v3220 = vunpack.c.l.b16 %v1165
    %v3221 = vunpack.c.l.b16 %v1166
    %v3222 = vunpack.c.l.b16 %v1167
    %v3223 = vunpack.c.l.b16 %v1168
    %v3224 = vunpack.c.l.b16 %v1169
    %v3225 = vunpack.c.l.b16 %v1170
    %v3226 = vunpack.c.l.b16 %v1171
    %v3227 = vunpack.c.l.b16 %v1172
    %v3228 = vunpack.c.l.b16 %v1173
    %v3229 = vunpack.c.l.b16 %v1174
    %v3230 = vunpack.c.l.b16 %v1175
    %v3231 = vunpack.c.l.b16 %v1176
    %v3232 = vunpack.c.l.b16 %v1177
    %v3233 = vunpack.c.l.b16 %v1178
    %v3234 = vunpack.c.l.b16 %v1179
    %v3235 = vunpack.c.l.b16 %v1180
    %v3236 = vunpack.c.l.b16 %v1181
    %v3237 = vunpack.c.l.b16 %v1182
    %v3238 = vunpack.c.l.b16 %v1183
    %v3239 = vunpack.c.l.b16 %v1184
    %v3240 = vunpack.c.l.b16 %v1185
    %v3241 = vunpack.c.l.b16 %v1186
    %v3242 = vunpack.c.l.b16 %v1187
    %v3243 = vunpack.c.l.b16 %v1188
    %v3244 = vunpack.c.l.b16 %v1189
    %v3245 = vunpack.c.l.b16 %v1190
    %v3246 = vunpack.c.l.b16 %v1191
    %v3247 = vunpack.c.l.b16 %v1192
    %v3248 = vunpack.c.l.b16 %v1193
    %v3249 = vunpack.c.l.b16 %v1194
    %v3250 = vunpack.c.l.b16 %v1195
    %v3251 = vunpack.c.l.b16 %v1196
    %v3252 = vunpack.c.l.b16 %v1197
    %v3253 = vunpack.c.l.b16 %v1198
    %v3254 = vunpack.c.l.b16 %v1199
    %v3255 = vunpack.c.l.b16 %v1200
    %v3256 = vunpack.c.l.b16 %v1201
    %v3257 = vunpack.c.l.b16 %v1202
    %v3258 = vunpack.c.l.b16 %v1203
    %v3259 = vunpack.c.l.b16 %v1204
    %v3260 = vunpack.c.l.b16 %v1205
    %v3261 = vunpack.c.l.b16 %v1206
    %v3262 = vunpack.c.l.b16 %v1207
    %v3263 = vunpack.c.l.b16 %v1208
    %v3264 = vunpack.c.l.b16 %v1209
    %v3265 = vunpack.c.l.b16 %v1210
    %v3266 = vunpack.c.l.b16 %v1211
    %v3267 = vunpack.c.l.b16 %v1212
    %v3268 = vunpack.c.l.b16 %v1213
    %v3269 = vunpack.c.l.b16 %v1214
    %v3270 = vunpack.c.l.b16 %v1215
    %v3271 = vunpack.c.l.b16 %v1216
    %v3272 = vunpack.c.l.b16 %v1217
    %v3273 = vunpack.c.l.b16 %v1218
    %v3274 = vunpack.c.l.b16 %v1219
    %v3275 = vunpack.c.l.b16 %v1220
    %v3276 = vunpack.c.l.b16 %v1221
    %v3277 = vunpack.c.l.b16 %v1222
    %v3278 = vunpack.c.l.b16 %v1223
    %v3279 = vunpack.c.l.b16 %v1224
    %v3280 = vunpack.c.l.b16 %v1225
    %v3281 = vunpack.c.l.b16 %v1226
    %v3282 = vunpack.c.l.b16 %v1227
    %v3283 = vunpack.c.l.b16 %v1228
    %v3284 = vunpack.c.l.b16 %v1229
    %v3285 = vunpack.c.l.b16 %v1230
    %v3286 = vunpack.c.l.b16 %v1231
    %v3287 = vunpack.c.l.b16 %v1232
    %v3288 = vunpack.c.l.b16 %v1233
    %v3289 = vunpack.c.l.b16 %v1234
    %v3290 = vunpack.c.l.b16 %v1235
    %v3291 = vunpack.c.l.b16 %v1236
    %v3292 = vunpack.c.l.b16 %v1237
    %v3293 = vunpack.c.l.b16 %v1238
    %v3294 = vunpack.c.l.b16 %v1239
    %v3295 = vunpack.c.l.b16 %v1240
    %v3296 = vunpack.c.l.b16 %v1241
    %v3297 = vunpack.c.l.b16 %v1242
    %v3298 = vunpack.c.l.b16 %v1243
    %v3299 = vunpack.c.l.b16 %v1244
    %v3300 = vunpack.c.l.b16 %v1245
    %v3301 = vunpack.c.l.b16 %v1246
    %v3302 = vunpack.c.l.b16 %v1247
    %v3303 = vunpack.c.l.b16 %v1248
    %v3304 = vunpack.c.l.b16 %v1249
    %v3305 = vunpack.c.l.b16 %v1250
    %v3306 = vunpack.c.l.b16 %v1251
    %v3307 = vunpack.c.l.b16 %v1252
    %v3308 = vunpack.c.l.b16 %v1253
    %v3309 = vunpack.c.l.b16 %v1254
    %v3310 = vunpack.c.l.b16 %v1255
    %v3311 = vunpack.c.l.b16 %v1256
    %v3312 = vunpack.c.l.b16 %v1257
    %v3313 = vunpack.c.l.b16 %v1258
    %v3314 = vunpack.c.l.b16 %v1259
    %v3315 = vunpack.c.l.b16 %v1260
    %v3316 = vunpack.c.l.b16 %v1261
    %v3317 = vunpack.c.l.b16 %v1262
    %v3318 = vunpack.c.l.b16 %v1263
    %v3319 = vunpack.c.l.b16 %v1264
    %v3320 = vunpack.c.l.b16 %v1265
    %v3321 = vunpack.c.l.b16 %v1266
    %v3322 = vunpack.c.l.b16 %v1267
    %v3323 = vunpack.c.l.b16 %v1268
    %v3324 = vunpack.c.l.b16 %v1269
    %v3325 = vunpack.c.l.b16 %v1270
    %v3326 = vunpack.c.l.b16 %v1271
    %v3327 = vunpack.c.l.b16 %v1272
    %v3328 = vunpack.c.l.b16 %v1273
    %v3329 = vunpack.c.l.b16 %v1274
    %v3330 = vunpack.c.l.b16 %v1275
    %v3331 = vunpack.c.l.b16 %v1276
    %v3332 = vunpack.c.l.b16 %v1277
    %v3333 = vunpack.c.l.b16 %v1278
    %v3334 = vunpack.c.l.b16 %v1279
    %v3335 = vunpack.c.l.b16 %v1280
    %v3336 = vunpack.c.l.b16 %v1281
    %v3337 = vunpack.c.l.b16 %v1282
    %v3338 = vunpack.c.l.b16 %v1283
    %v3339 = vunpack.c.l.b16 %v1284
    %v3340 = vunpack.c.l.b16 %v1285
    %v3341 = vunpack.c.l.b16 %v1286
    %v3342 = vunpack.c.l.b16 %v1287
    %v3343 = vunpack.c.l.b16 %v1288
    %v3344 = vunpack.c.l.b16 %v1289
    %v3345 = vunpack.c.l.b16 %v1290
    %v3346 = vunpack.c.l.b16 %v1291
    %v3347 = vunpack.c.l.b16 %v1292
    %v3348 = vunpack.c.l.b16 %v1293
    %v3349 = vunpack.c.l.b16 %v1294
    %v3350 = vunpack.c.l.b16 %v1295
    %v3351 = vunpack.c.l.b16 %v1296
    %v3352 = vunpack.c.l.b16 %v1297
    %v3353 = vunpack.c.l.b16 %v1298
    %v3354 = vunpack.c.l.b16 %v1299
    %v3355 = vunpack.c.l.b16 %v1300
    %v3356 = vunpack.c.l.b16 %v1301
    %v3357 = vunpack.c.l.b16 %v1302
    %v3358 = vunpack.c.l.b16 %v1303
    %v3359 = vunpack.c.l.b16 %v1304
    %v3360 = vunpack.c.l.b16 %v1305
    %v3361 = vunpack.c.l.b16 %v1306
    %v3362 = vunpack.c.l.b16 %v1307
    %v3363 = vunpack.c.l.b16 %v1308
    %v3364 = vunpack.c.l.b16 %v1309
    %v3365 = vunpack.c.l.b16 %v1310
    %v3366 = vunpack.c.l.b16 %v1311
    %v3367 = vunpack.c.l.b16 %v1312
    %v3368 = vunpack.c.l.b16 %v1313
    %v3369 = vunpack.c.l.b16 %v1314
    %v3370 = vunpack.c.l.b16 %v1315
    %v3371 = vunpack.c.l.b16 %v1316
    %v3372 = vunpack.c.l.b16 %v1317
    %v3373 = vunpack.c.l.b16 %v1318
    %v3374 = vunpack.c.l.b16 %v1319
    %v3375 = vunpack.c.l.b16 %v1320
    %v3376 = vunpack.c.l.b16 %v1321
    %v3377 = vunpack.c.l.b16 %v1322
    %v3378 = vunpack.c.l.b16 %v1323
    %v3379 = vunpack.c.l.b16 %v1324
    %v3380 = vunpack.c.l.b16 %v1325
    %v3381 = vunpack.c.l.b16 %v1326
    %v3382 = vunpack.c.l.b16 %v1327
    %v3383 = vunpack.c.l.b16 %v1328
    %v3384 = vunpack.c.l.b16 %v1329
    %v3385 = vunpack.c.l.b16 %v1330
    %v3386 = vunpack.c.l.b16 %v1331
    %v3387 = vunpack.c.l.b16 %v1332
    %v3388 = vunpack.c.l.b16 %v1333
    %v3389 = vunpack.c.l.b16 %v1334
    %v3390 = vunpack.c.l.b16 %v1335
    %v3391 = vunpack.c.l.b16 %v1336
    %v3392 = vunpack.c.l.b16 %v1337
    %v3393 = vunpack.c.l.b16 %v1338
    %v3394 = vunpack.c.l.b16 %v1339
    %v3395 = vunpack.c.l.b16 %v1340
    %v3396 = vunpack.c.l.b16 %v1341
    %v3397 = vunpack.c.l.b16 %v1342
    %v3398 = vunpack.c.l.b16 %v1343
    %v3399 = vunpack.c.l.b16 %v1344
    %v3400 = vunpack.c.l.b16 %v1345
    %v3401 = vunpack.c.l.b16 %v1346
    %v3402 = vunpack.c.l.b16 %v1347
    %v3403 = vunpack.c.l.b16 %v1348
    %v3404 = vunpack.c.l.b16 %v1349
    %v3405 = vunpack.c.l.b16 %v1350
    %v3406 = vunpack.c.l.b16 %v1351
    %v3407 = vunpack.c.l.b16 %v1352
    %v3408 = vunpack.c.l.b16 %v1353
    %v3409 = vunpack.c.l.b16 %v1354
    %v3410 = vunpack.c.l.b16 %v1355
    %v3411 = vunpack.c.l.b16 %v1356
    %v3412 = vunpack.c.l.b16 %v1357
    %v3413 = vunpack.c.l.b16 %v1358
    %v3414 = vunpack.c.l.b16 %v1359
    %v3415 = vunpack.c.l.b16 %v1360
    %v3416 = vunpack.c.l.b16 %v1361
    %v3417 = vunpack.c.l.b16 %v1362
    %v3418 = vunpack.c.l.b16 %v1363
    %v3419 = vunpack.c.l.b16 %v1364
    %v3420 = vunpack.c.l.b16 %v1365
    %v3421 = vunpack.c.l.b16 %v1366
    %v3422 = vunpack.c.l.b16 %v1367
    %v3423 = vunpack.c.l.b16 %v1368
    %v3424 = vunpack.c.l.b16 %v1369
    %v3425 = vunpack.c.l.b16 %v1370
    %v3426 = vunpack.c.l.b16 %v1371
    %v3427 = vunpack.c.l.b16 %v1372
    %v3428 = vunpack.c.l.b16 %v1373
    %v3429 = vunpack.c.l.b16 %v1374
    %v3430 = vunpack.c.l.b16 %v1375
    %v3431 = vunpack.c.l.b16 %v1376
    %v3432 = vunpack.c.l.b16 %v1377
    %v3433 = vunpack.c.l.b16 %v1378
    %v3434 = vunpack.c.l.b16 %v1379
    %v3435 = vunpack.c.l.b16 %v1380
    %v3436 = vunpack.c.l.b16 %v1381
    %v3437 = vunpack.c.l.b16 %v1382
    %v3438 = vunpack.c.l.b16 %v1383
    %v3439 = vunpack.c.l.b16 %v1384
    %v3440 = vunpack.c.l.b16 %v1385
    %v3441 = vunpack.c.l.b16 %v1386
    %v3442 = vunpack.c.l.b16 %v1387
    %v3443 = vunpack.c.l.b16 %v1388
    %v3444 = vunpack.c.l.b16 %v1389
    %v3445 = vunpack.c.l.b16 %v1390
    %v3446 = vunpack.c.l.b16 %v1391
    %v3447 = vunpack.c.l.b16 %v1392
    %v3448 = vunpack.c.l.b16 %v1393
    %v3449 = vunpack.c.l.b16 %v1394
    %v3450 = vunpack.c.l.b16 %v1395
    %v3451 = vunpack.c.l.b16 %v1396
    %v3452 = vunpack.c.l.b16 %v1397
    %v3453 = vunpack.c.l.b16 %v1398
    %v3454 = vunpack.c.l.b16 %v1399
    %v3455 = vunpack.c.l.b16 %v1400
    %v3456 = vunpack.c.l.b16 %v1401
    %v3457 = vunpack.c.l.b16 %v1402
    %v3458 = vunpack.c.l.b16 %v1403
    %v3459 = vunpack.c.l.b16 %v1404
    %v3460 = vunpack.c.l.b16 %v1405
    %v3461 = vunpack.c.l.b16 %v1406
    %v3462 = vunpack.c.l.b16 %v1407
    %v3463 = vunpack.c.l.b16 %v1408
    %v3464 = vunpack.c.l.b16 %v1409
    %v3465 = vunpack.c.l.b16 %v1410
    %v3466 = vunpack.c.l.b16 %v1411
    %v3467 = vunpack.c.l.b16 %v1412
    %v3468 = vunpack.c.l.b16 %v1413
    %v3469 = vunpack.c.l.b16 %v1414
    %v3470 = vunpack.c.l.b16 %v1415
    %v3471 = vunpack.c.l.b16 %v1416
    %v3472 = vunpack.c.l.b16 %v1417
    %v3473 = vunpack.c.l.b16 %v1418
    %v3474 = vunpack.c.l.b16 %v1419
    %v3475 = vunpack.c.l.b16 %v1420
    %v3476 = vunpack.c.l.b16 %v1421
    %v3477 = vunpack.c.l.b16 %v1422
    %v3478 = vunpack.c.l.b16 %v1423
    %v3479 = vunpack.c.l.b16 %v1424
    %v3480 = vunpack.c.l.b16 %v1425
    %v3481 = vunpack.c.l.b16 %v1426
    %v3482 = vunpack.c.l.b16 %v1427
    %v3483 = vunpack.c.l.b16 %v1428
    %v3484 = vunpack.c.l.b16 %v1429
    %v3485 = vunpack.c.l.b16 %v1430
    %v3486 = vunpack.c.l.b16 %v1431
    %v3487 = vunpack.c.l.b16 %v1432
    %v3488 = vunpack.c.l.b16 %v1433
    %v3489 = vunpack.c.l.b16 %v1434
    %v3490 = vunpack.c.l.b16 %v1435
    %v3491 = vunpack.c.l.b16 %v1436
    %v3492 = vunpack.c.l.b16 %v1437
    %v3493 = vunpack.c.l.b16 %v1438
    %v3494 = vunpack.c.l.b16 %v1439
    %v3495 = vunpack.c.l.b16 %v1440
    %v3496 = vunpack.c.l.b16 %v1441
    %v3497 = vunpack.c.l.b16 %v1442
    %v3498 = vunpack.c.l.b16 %v1443
    %v3499 = vunpack.c.l.b16 %v1444
    %v3500 = vunpack.c.l.b16 %v1445
    %v3501 = vunpack.c.l.b16 %v1446
    %v3502 = vunpack.c.l.b16 %v1447
    %v3503 = vunpack.c.l.b16 %v1448
    %v3504 = vunpack.c.l.b16 %v1449
    %v3505 = vunpack.c.l.b16 %v1450
    %v3506 = vunpack.c.l.b16 %v1451
    %v3507 = vunpack.c.l.b16 %v1452
    %v3508 = vunpack.c.l.b16 %v1453
    %v3509 = vunpack.c.l.b16 %v1454
    %v3510 = vunpack.c.l.b16 %v1455
    %v3511 = vunpack.c.l.b16 %v1456
    %v3512 = vunpack.c.l.b16 %v1457
    %v3513 = vunpack.c.l.b16 %v1458
    %v3514 = vunpack.c.l.b16 %v1459
    %v3515 = vunpack.c.l.b16 %v1460
    %v3516 = vunpack.c.l.b16 %v1461
    %v3517 = vunpack.c.l.b16 %v1462
    %v3518 = vunpack.c.l.b16 %v1463
    %v3519 = vunpack.c.l.b16 %v1464
    %v3520 = vunpack.c.l.b16 %v1465
    %v3521 = vunpack.c.l.b16 %v1466
    %v3522 = vunpack.c.l.b16 %v1467
    %v3523 = vunpack.c.l.b16 %v1468
    %v3524 = vunpack.c.l.b16 %v1469
    %v3525 = vunpack.c.l.b16 %v1470
    %v3526 = vunpack.c.l.b16 %v1471
    %v3527 = vunpack.c.l.b16 %v1472
    %v3528 = vunpack.c.l.b16 %v1473
    %v3529 = vunpack.c.l.b16 %v1474
    %v3530 = vunpack.c.l.b16 %v1475
    %v3531 = vunpack.c.l.b16 %v1476
    %v3532 = vunpack.c.l.b16 %v1477
    %v3533 = vunpack.c.l.b16 %v1478
    %v3534 = vunpack.c.l.b16 %v1479
    %v3535 = vunpack.c.l.b16 %v1480
    %v3536 = vunpack.c.l.b16 %v1481
    %v3537 = vunpack.c.l.b16 %v1482
    %v3538 = vunpack.c.l.b16 %v1483
    %v3539 = vunpack.c.l.b16 %v1484
    %v3540 = vunpack.c.l.b16 %v1485
    %v3541 = vunpack.c.l.b16 %v1486
    %v3542 = vunpack.c.l.b16 %v1487
    %v3543 = vunpack.c.l.b16 %v1488
    %v3544 = vunpack.c.l.b16 %v1489
    %v3545 = vunpack.c.l.b16 %v1490
    %v3546 = vunpack.c.l.b16 %v1491
    %v3547 = vunpack.c.l.b16 %v1492
    %v3548 = vunpack.c.l.b16 %v1493
    %v3549 = vunpack.c.l.b16 %v1494
    %v3550 = vunpack.c.l.b16 %v1495
    %v3551 = vunpack.c.l.b16 %v1496
    %v3552 = vunpack.c.l.b16 %v1497
    %v3553 = vunpack.c.l.b16 %v1498
    %v3554 = vunpack.c.l.b16 %v1499
    %v3555 = vunpack.c.l.b16 %v1500
    %v3556 = vunpack.c.l.b16 %v1501
    %v3557 = vunpack.c.l.b16 %v1502
    %v3558 = vunpack.c.l.b16 %v1503
    %v3559 = vunpack.c.l.b16 %v1504
    %v3560 = vunpack.c.l.b16 %v1505
    %v3561 = vunpack.c.l.b16 %v1506
    %v3562 = vunpack.c.l.b16 %v1507
    %v3563 = vunpack.c.l.b16 %v1508
    %v3564 = vunpack.c.l.b16 %v1509
    %v3565 = vunpack.c.l.b16 %v1510
    %v3566 = vunpack.c.l.b16 %v1511
    %v3567 = vunpack.c.l.b16 %v1512
    %v3568 = vunpack.c.l.b16 %v1513
    %v3569 = vunpack.c.l.b16 %v1514
    %v3570 = vunpack.c.l.b16 %v1515
    %v3571 = vunpack.c.l.b16 %v1516
    %v3572 = vunpack.c.l.b16 %v1517
    %v3573 = vunpack.c.l.b16 %v1518
    %v3574 = vunpack.c.l.b16 %v1519
    %v3575 = vunpack.c.l.b16 %v1520
    %v3576 = vunpack.c.l.b16 %v1521
    %v3577 = vunpack.c.l.b16 %v1522
    %v3578 = vunpack.c.l.b16 %v1523
    %v3579 = vunpack.c.l.b16 %v1524
    %v3580 = vunpack.c.l.b16 %v1525
    %v3581 = vunpack.c.l.b16 %v1526
    %v3582 = vunpack.c.l.b16 %v1527
    %v3583 = vunpack.c.l.b16 %v1528
    %v3584 = vunpack.c.l.b16 %v1529
    %v3585 = vunpack.c.l.b16 %v1530
    %v3586 = vunpack.c.l.b16 %v1531
    %v3587 = vunpack.c.l.b16 %v1532
    %v3588 = vunpack.c.l.b16 %v1533
    %v3589 = vunpack.c.l.b16 %v1534
    %v3590 = vunpack.c.l.b16 %v1535
    %v3591 = vunpack.c.l.b16 %v1536
    %v3592 = vunpack.c.l.b16 %v1537
    %v3593 = vunpack.c.l.b16 %v1538
    %v3594 = vunpack.c.l.b16 %v1539
    %v3595 = vunpack.c.l.b16 %v1540
    %v3596 = vunpack.c.l.b16 %v1541
    %v3597 = vunpack.c.l.b16 %v1542
    %v3598 = vunpack.c.l.b16 %v1543
    %v3599 = vunpack.c.l.b16 %v1544
    %v3600 = vunpack.c.l.b16 %v1545
    %v3601 = vunpack.c.l.b16 %v1546
    %v3602 = vunpack.c.l.b16 %v1547
    %v3603 = vunpack.c.l.b16 %v1548
    %v3604 = vunpack.c.l.b16 %v1549
    %v3605 = vunpack.c.l.b16 %v1550
    %v3606 = vunpack.c.l.b16 %v1551
    %v3607 = vunpack.c.l.b16 %v1552
    %v3608 = vunpack.c.l.b16 %v1553
    %v3609 = vunpack.c.l.b16 %v1554
    %v3610 = vunpack.c.l.b16 %v1555
    %v3611 = vunpack.c.l.b16 %v1556
    %v3612 = vunpack.c.l.b16 %v1557
    %v3613 = vunpack.c.l.b16 %v1558
    %v3614 = vunpack.c.l.b16 %v1559
    %v3615 = vunpack.c.l.b16 %v1560
    %v3616 = vunpack.c.l.b16 %v1561
    %v3617 = vunpack.c.l.b16 %v1562
    %v3618 = vunpack.c.l.b16 %v1563
    %v3619 = vunpack.c.l.b16 %v1564
    %v3620 = vunpack.c.l.b16 %v1565
    %v3621 = vunpack.c.l.b16 %v1566
    %v3622 = vunpack.c.l.b16 %v1567
    %v3623 = vunpack.c.l.b16 %v1568
    %v3624 = vunpack.c.l.b16 %v1569
    %v3625 = vunpack.c.l.b16 %v1570
    %v3626 = vunpack.c.l.b16 %v1571
    %v3627 = vunpack.c.l.b16 %v1572
    %v3628 = vunpack.c.l.b16 %v1573
    %v3629 = vunpack.c.l.b16 %v1574
    %v3630 = vunpack.c.l.b16 %v1575
    %v3631 = vunpack.c.l.b16 %v1576
    %v3632 = vunpack.c.l.b16 %v1577
    %v3633 = vunpack.c.l.b16 %v1578
    %v3634 = vunpack.c.l.b16 %v1579
    %v3635 = vunpack.c.l.b16 %v1580
    %v3636 = vunpack.c.l.b16 %v1581
    %v3637 = vunpack.c.l.b16 %v1582
    %v3638 = vunpack.c.l.b16 %v1583
    %v3639 = vunpack.c.l.b16 %v1584
    %v3640 = vunpack.c.l.b16 %v1585
    %v3641 = vunpack.c.l.b16 %v1586
    %v3642 = vunpack.c.l.b16 %v1587
    %v3643 = vunpack.c.l.b16 %v1588
    %v3644 = vunpack.c.l.b16 %v1589
    %v3645 = vunpack.c.l.b16 %v1590
    %v3646 = vunpack.c.l.b16 %v1591
    %v3647 = vunpack.c.l.b16 %v1592
    %v3648 = vunpack.c.l.b16 %v1593
    %v3649 = vunpack.c.l.b16 %v1594
    %v3650 = vunpack.c.l.b16 %v1595
    %v3651 = vunpack.c.l.b16 %v1596
    %v3652 = vunpack.c.l.b16 %v1597
    %v3653 = vunpack.c.l.b16 %v1598
    %v3654 = vunpack.c.l.b16 %v1599
    %v3655 = vunpack.c.l.b16 %v1600
    %v3656 = vunpack.c.l.b16 %v1601
    %v3657 = vunpack.c.l.b16 %v1602
    %v3658 = vunpack.c.l.b16 %v1603
    %v3659 = vunpack.c.l.b16 %v1604
    %v3660 = vunpack.c.l.b16 %v1605
    %v3661 = vunpack.c.l.b16 %v1606
    %v3662 = vunpack.c.l.b16 %v1607
    %v3663 = vunpack.c.l.b16 %v1608
    %v3664 = vunpack.c.l.b16 %v1609
    %v3665 = vunpack.c.l.b16 %v1610
    %v3666 = vunpack.c.l.b16 %v1611
    %v3667 = vunpack.c.l.b16 %v1612
    %v3668 = vunpack.c.l.b16 %v1613
    %v3669 = vunpack.c.l.b16 %v1614
    %v3670 = vunpack.c.l.b16 %v1615
    %v3671 = vunpack.c.l.b16 %v1616
    %v3672 = vunpack.c.l.b16 %v1617
    %v3673 = vunpack.c.l.b16 %v1618
    %v3674 = vunpack.c.l.b16 %v1619
    %v3675 = vunpack.c.l.b16 %v1620
    %v3676 = vunpack.c.l.b16 %v1621
    %v3677 = vunpack.c.l.b16 %v1622
    %v3678 = vunpack.c.l.b16 %v1623
    %v3679 = vunpack.c.l.b16 %v1624
    %v3680 = vunpack.c.l.b16 %v1625
    %v3681 = vunpack.c.l.b16 %v1626
    %v3682 = vunpack.c.l.b16 %v1627
    %v3683 = vunpack.c.l.b16 %v1628
    %v3684 = vunpack.c.l.b16 %v1629
    %v3685 = vunpack.c.l.b16 %v1630
    %v3686 = vunpack.c.l.b16 %v1631
    %v3687 = vunpack.c.l.b16 %v1632
    %v3688 = vunpack.c.l.b16 %v1633
    %v3689 = vunpack.c.l.b16 %v1634
    %v3690 = vunpack.c.l.b16 %v1635
    %v3691 = vunpack.c.l.b16 %v1636
    %v3692 = vunpack.c.l.b16 %v1637
    %v3693 = vunpack.c.l.b16 %v1638
    %v3694 = vunpack.c.l.b16 %v1639
    %v3695 = vunpack.c.l.b16 %v1640
    %v3696 = vunpack.c.l.b16 %v1641
    %v3697 = vunpack.c.l.b16 %v1642
    %v3698 = vunpack.c.l.b16 %v1643
    %v3699 = vunpack.c.l.b16 %v1644
    %v3700 = vunpack.c.l.b16 %v1645
    %v3701 = vunpack.c.l.b16 %v1646
    %v3702 = vunpack.c.l.b16 %v1647
    %v3703 = vunpack.c.l.b16 %v1648
    %v3704 = vunpack.c.l.b16 %v1649
    %v3705 = vunpack.c.l.b16 %v1650
    %v3706 = vunpack.c.l.b16 %v1651
    %v3707 = vunpack.c.l.b16 %v1652
    %v3708 = vunpack.c.l.b16 %v1653
    %v3709 = vunpack.c.l.b16 %v1654
    %v3710 = vunpack.c.l.b16 %v1655
    %v3711 = vunpack.c.l.b16 %v1656
    %v3712 = vunpack.c.l.b16 %v1657
    %v3713 = vunpack.c.l.b16 %v1658
    %v3714 = vunpack.c.l.b16 %v1659
    %v3715 = vunpack.c.l.b16 %v1660
    %v3716 = vunpack.c.l.b16 %v1661
    %v3717 = vunpack.c.l.b16 %v1662
    %v3718 = vunpack.c.l.b16 %v1663
    %v3719 = vunpack.c.l.b16 %v1664
    %v3720 = vunpack.c.l.b16 %v1665
    %v3721 = vunpack.c.l.b16 %v1666
    %v3722 = vunpack.c.l.b16 %v1667
    %v3723 = vunpack.c.l.b16 %v1668
    %v3724 = vunpack.c.l.b16 %v1669
    %v3725 = vunpack.c.l.b16 %v1670
    %v3726 = vunpack.c.l.b16 %v1671
    %v3727 = vunpack.c.l.b16 %v1672
    %v3728 = vunpack.c.l.b16 %v1673
    %v3729 = vunpack.c.l.b16 %v1674
    %v3730 = vunpack.c.l.b16 %v1675
    %v3731 = vunpack.c.l.b16 %v1676
    %v3732 = vunpack.c.l.b16 %v1677
    %v3733 = vunpack.c.l.b16 %v1678
    %v3734 = vunpack.c.l.b16 %v1679
    %v3735 = vunpack.c.l.b16 %v1680
    %v3736 = vunpack.c.l.b16 %v1681
    %v3737 = vunpack.c.l.b16 %v1682
    %v3738 = vunpack.c.l.b16 %v1683
    %v3739 = vunpack.c.l.b16 %v1684
    %v3740 = vunpack.c.l.b16 %v1685
    %v3741 = vunpack.c.l.b16 %v1686
    %v3742 = vunpack.c.l.b16 %v1687
    %v3743 = vunpack.c.l.b16 %v1688
    %v3744 = vunpack.c.l.b16 %v1689
    %v3745 = vunpack.c.l.b16 %v1690
    %v3746 = vunpack.c.l.b16 %v1691
    %v3747 = vunpack.c.l.b16 %v1692
    %v3748 = vunpack.c.l.b16 %v1693
    %v3749 = vunpack.c.l.b16 %v1694
    %v3750 = vunpack.c.l.b16 %v1695
    %v3751 = vunpack.c.l.b16 %v1696
    %v3752 = vunpack.c.l.b16 %v1697
    %v3753 = vunpack.c.l.b16 %v1698
    %v3754 = vunpack.c.l.b16 %v1699
    %v3755 = vunpack.c.l.b16 %v1700
    %v3756 = vunpack.c.l.b16 %v1701
    %v3757 = vunpack.c.l.b16 %v1702
    %v3758 = vunpack.c.l.b16 %v1703
    %v3759 = vunpack.c.l.b16 %v1704
    %v3760 = vunpack.c.l.b16 %v1705
    %v3761 = vunpack.c.l.b16 %v1706
    %v3762 = vunpack.c.l.b16 %v1707
    %v3763 = vunpack.c.l.b16 %v1708
    %v3764 = vunpack.c.l.b16 %v1709
    %v3765 = vunpack.c.l.b16 %v1710
    %v3766 = vunpack.c.l.b16 %v1711
    %v3767 = vunpack.c.l.b16 %v1712
    %v3768 = vunpack.c.l.b16 %v1713
    %v3769 = vunpack.c.l.b16 %v1714
    %v3770 = vunpack.c.l.b16 %v1715
    %v3771 = vunpack.c.l.b16 %v1716
    %v3772 = vunpack.c.l.b16 %v1717
    %v3773 = vunpack.c.l.b16 %v1718
    %v3774 = vunpack.c.l.b16 %v1719
    %v3775 = vunpack.c.l.b16 %v1720
    %v3776 = vunpack.c.l.b16 %v1721
    %v3777 = vunpack.c.l.b16 %v1722
    %v3778 = vunpack.c.l.b16 %v1723
    %v3779 = vunpack.c.l.b16 %v1724
    %v3780 = vunpack.c.l.b16 %v1725
    %v3781 = vunpack.c.l.b16 %v1726
    %v3782 = vunpack.c.l.b16 %v1727
    %v3783 = vunpack.c.l.b16 %v1728
    %v3784 = vunpack.c.l.b16 %v1729
    %v3785 = vunpack.c.l.b16 %v1730
    %v3786 = vunpack.c.l.b16 %v1731
    %v3787 = vunpack.c.l.b16 %v1732
    %v3788 = vunpack.c.l.b16 %v1733
    %v3789 = vunpack.c.l.b16 %v1734
    %v3790 = vunpack.c.l.b16 %v1735
    %v3791 = vunpack.c.l.b16 %v1736
    %v3792 = vunpack.c.l.b16 %v1737
    %v3793 = vunpack.c.l.b16 %v1738
    %v3794 = vunpack.c.l.b16 %v1739
    %v3795 = vunpack.c.l.b16 %v1740
    %v3796 = vunpack.c.l.b16 %v1741
    %v3797 = vunpack.c.l.b16 %v1742
    %v3798 = vunpack.c.l.b16 %v1743
    %v3799 = vunpack.c.l.b16 %v1744
    %v3800 = vunpack.c.l.b16 %v1745
    %v3801 = vunpack.c.l.b16 %v1746
    %v3802 = vunpack.c.l.b16 %v1747
    %v3803 = vunpack.c.l.b16 %v1748
    %v3804 = vunpack.c.l.b16 %v1749
    %v3805 = vunpack.c.l.b16 %v1750
    %v3806 = vunpack.c.l.b16 %v1751
    %v3807 = vunpack.c.l.b16 %v1752
    %v3808 = vunpack.c.l.b16 %v1753
    %v3809 = vunpack.c.l.b16 %v1754
    %v3810 = vunpack.c.l.b16 %v1755
    %v3811 = vunpack.c.l.b16 %v1756
    %v3812 = vunpack.c.l.b16 %v1757
    %v3813 = vunpack.c.l.b16 %v1758
    %v3814 = vunpack.c.l.b16 %v1759
    %v3815 = vunpack.c.l.b16 %v1760
    %v3816 = vunpack.c.l.b16 %v1761
    %v3817 = vunpack.c.l.b16 %v1762
    %v3818 = vunpack.c.l.b16 %v1763
    %v3819 = vunpack.c.l.b16 %v1764
    %v3820 = vunpack.c.l.b16 %v1765
    %v3821 = vunpack.c.l.b16 %v1766
    %v3822 = vunpack.c.l.b16 %v1767
    %v3823 = vunpack.c.l.b16 %v1768
    %v3824 = vunpack.c.l.b16 %v1769
    %v3825 = vunpack.c.l.b16 %v1770
    %v3826 = vunpack.c.l.b16 %v1771
    %v3827 = vunpack.c.l.b16 %v1772
    %v3828 = vunpack.c.l.b16 %v1773
    %v3829 = vunpack.c.l.b16 %v1774
    %v3830 = vunpack.c.l.b16 %v1775
    %v3831 = vunpack.c.l.b16 %v1776
    %v3832 = vunpack.c.l.b16 %v1777
    %v3833 = vunpack.c.l.b16 %v1778
    %v3834 = vunpack.c.l.b16 %v1779
    %v3835 = vunpack.c.l.b16 %v1780
    %v3836 = vunpack.c.l.b16 %v1781
    %v3837 = vunpack.c.l.b16 %v1782
    %v3838 = vunpack.c.l.b16 %v1783
    %v3839 = vunpack.c.l.b16 %v1784
    %v3840 = vunpack.c.l.b16 %v1785
    %v3841 = vunpack.c.l.b16 %v1786
    %v3842 = vunpack.c.l.b16 %v1787
    %v3843 = vunpack.c.l.b16 %v1788
    %v3844 = vunpack.c.l.b16 %v1789
    %v3845 = vunpack.c.l.b16 %v1790
    %v3846 = vunpack.c.l.b16 %v1791
    %v3847 = vunpack.c.l.b16 %v1792
    %v3848 = vunpack.c.l.b16 %v1793
    %v3849 = vunpack.c.l.b16 %v1794
    %v3850 = vunpack.c.l.b16 %v1795
    %v3851 = vunpack.c.l.b16 %v1796
    %v3852 = vunpack.c.l.b16 %v1797
    %v3853 = vunpack.c.l.b16 %v1798
    %v3854 = vunpack.c.l.b16 %v1799
    %v3855 = vunpack.c.l.b16 %v1800
    %v3856 = vunpack.c.l.b16 %v1801
    %v3857 = vunpack.c.l.b16 %v1802
    %v3858 = vunpack.c.l.b16 %v1803
    %v3859 = vunpack.c.l.b16 %v1804
    %v3860 = vunpack.c.l.b16 %v1805
    %v3861 = vunpack.c.l.b16 %v1806
    %v3862 = vunpack.c.l.b16 %v1807
    %v3863 = vunpack.c.l.b16 %v1808
    %v3864 = vunpack.c.l.b16 %v1809
    %v3865 = vunpack.c.l.b16 %v1810
    %v3866 = vunpack.c.l.b16 %v1811
    %v3867 = vunpack.c.l.b16 %v1812
    %v3868 = vunpack.c.l.b16 %v1813
    %v3869 = vunpack.c.l.b16 %v1814
    %v3870 = vunpack.c.l.b16 %v1815
    %v3871 = vunpack.c.l.b16 %v1816
    %v3872 = vunpack.c.l.b16 %v1817
    %v3873 = vunpack.c.l.b16 %v1818
    %v3874 = vunpack.c.l.b16 %v1819
    %v3875 = vunpack.c.l.b16 %v1820
    %v3876 = vunpack.c.l.b16 %v1821
    %v3877 = vunpack.c.l.b16 %v1822
    %v3878 = vunpack.c.l.b16 %v1823
    %v3879 = vunpack.c.l.b16 %v1824
    %v3880 = vunpack.c.l.b16 %v1825
    %v3881 = vunpack.c.l.b16 %v1826
    %v3882 = vunpack.c.l.b16 %v1827
    %v3883 = vunpack.c.l.b16 %v1828
    %v3884 = vunpack.c.l.b16 %v1829
    %v3885 = vunpack.c.l.b16 %v1830
    %v3886 = vunpack.c.l.b16 %v1831
    %v3887 = vunpack.c.l.b16 %v1832
    %v3888 = vunpack.c.l.b16 %v1833
    %v3889 = vunpack.c.l.b16 %v1834
    %v3890 = vunpack.c.l.b16 %v1835
    %v3891 = vunpack.c.l.b16 %v1836
    %v3892 = vunpack.c.l.b16 %v1837
    %v3893 = vunpack.c.l.b16 %v1838
    %v3894 = vunpack.c.l.b16 %v1839
    %v3895 = vunpack.c.l.b16 %v1840
    %v3896 = vunpack.c.l.b16 %v1841
    %v3897 = vunpack.c.l.b16 %v1842
    %v3898 = vunpack.c.l.b16 %v1843
    %v3899 = vunpack.c.l.b16 %v1844
    %v3900 = vunpack.c.l.b16 %v1845
    %v3901 = vunpack.c.l.b16 %v1846
    %v3902 = vunpack.c.l.b16 %v1847
    %v3903 = vunpack.c.l.b16 %v1848
    %v3904 = vunpack.c.l.b16 %v1849
    %v3905 = vunpack.c.l.b16 %v1850
    %v3906 = vunpack.c.l.b16 %v1851
    %v3907 = vunpack.c.l.b16 %v1852
    %v3908 = vunpack.c.l.b16 %v1853
    %v3909 = vunpack.c.l.b16 %v1854
    %v3910 = vunpack.c.l.b16 %v1855
    %v3911 = vunpack.c.l.b16 %v1856
    %v3912 = vunpack.c.l.b16 %v1857
    %v3913 = vunpack.c.l.b16 %v1858
    %v3914 = vunpack.c.l.b16 %v1859
    %v3915 = vunpack.c.l.b16 %v1860
    %v3916 = vunpack.c.l.b16 %v1861
    %v3917 = vunpack.c.l.b16 %v1862
    %v3918 = vunpack.c.l.b16 %v1863
    %v3919 = vunpack.c.l.b16 %v1864
    %v3920 = vunpack.c.l.b16 %v1865
    %v3921 = vunpack.c.l.b16 %v1866
    %v3922 = vunpack.c.l.b16 %v1867
    %v3923 = vunpack.c.l.b16 %v1868
    %v3924 = vunpack.c.l.b16 %v1869
    %v3925 = vunpack.c.l.b16 %v1870
    %v3926 = vunpack.c.l.b16 %v1871
    %v3927 = vunpack.c.l.b16 %v1872
    %v3928 = vunpack.c.l.b16 %v1873
    %v3929 = vunpack.c.l.b16 %v1874
    %v3930 = vunpack.c.l.b16 %v1875
    %v3931 = vunpack.c.l.b16 %v1876
    %v3932 = vunpack.c.l.b16 %v1877
    %v3933 = vunpack.c.l.b16 %v1878
    %v3934 = vunpack.c.l.b16 %v1879
    %v3935 = vunpack.c.l.b16 %v1880
    %v3936 = vunpack.c.l.b16 %v1881
    %v3937 = vunpack.c.l.b16 %v1882
    %v3938 = vunpack.c.l.b16 %v1883
    %v3939 = vunpack.c.l.b16 %v1884
    %v3940 = vunpack.c.l.b16 %v1885
    %v3941 = vunpack.c.l.b16 %v1886
    %v3942 = vunpack.c.l.b16 %v1887
    %v3943 = vunpack.c.l.b16 %v1888
    %v3944 = vunpack.c.l.b16 %v1889
    %v3945 = vunpack.c.l.b16 %v1890
    %v3946 = vunpack.c.l.b16 %v1891
    %v3947 = vunpack.c.l.b16 %v1892
    %v3948 = vunpack.c.l.b16 %v1893
    %v3949 = vunpack.c.l.b16 %v1894
    %v3950 = vunpack.c.l.b16 %v1895
    %v3951 = vunpack.c.l.b16 %v1896
    %v3952 = vunpack.c.l.b16 %v1897
    %v3953 = vunpack.c.l.b16 %v1898
    %v3954 = vunpack.c.l.b16 %v1899
    %v3955 = vunpack.c.l.b16 %v1900
    %v3956 = vunpack.c.l.b16 %v1901
    %v3957 = vunpack.c.l.b16 %v1902
    %v3958 = vunpack.c.l.b16 %v1903
    %v3959 = vunpack.c.l.b16 %v1904
    %v3960 = vunpack.c.l.b16 %v1905
    %v3961 = vunpack.c.l.b16 %v1906
    %v3962 = vunpack.c.l.b16 %v1907
    %v3963 = vunpack.c.l.b16 %v1908
    %v3964 = vunpack.c.l.b16 %v1909
    %v3965 = vunpack.c.l.b16 %v1910
    %v3966 = vunpack.c.l.b16 %v1911
    %v3967 = vunpack.c.l.b16 %v1912
    %v3968 = vunpack.c.l.b16 %v1913
    %v3969 = vunpack.c.l.b16 %v1914
    %v3970 = vunpack.c.l.b16 %v1915
    %v3971 = vunpack.c.l.b16 %v1916
    %v3972 = vunpack.c.l.b16 %v1917
    %v3973 = vunpack.c.l.b16 %v1918
    %v3974 = vunpack.c.l.b16 %v1919
    %v3975 = vunpack.c.l.b16 %v1920
    %v3976 = vunpack.c.l.b16 %v1921
    %v3977 = vunpack.c.l.b16 %v1922
    %v3978 = vunpack.c.l.b16 %v1923
    %v3979 = vunpack.c.l.b16 %v1924
    %v3980 = vunpack.c.l.b16 %v1925
    %v3981 = vunpack.c.l.b16 %v1926
    %v3982 = vunpack.c.l.b16 %v1927
    %v3983 = vunpack.c.l.b16 %v1928
    %v3984 = vunpack.c.l.b16 %v1929
    %v3985 = vunpack.c.l.b16 %v1930
    %v3986 = vunpack.c.l.b16 %v1931
    %v3987 = vunpack.c.l.b16 %v1932
    %v3988 = vunpack.c.l.b16 %v1933
    %v3989 = vunpack.c.l.b16 %v1934
    %v3990 = vunpack.c.l.b16 %v1935
    %v3991 = vunpack.c.l.b16 %v1936
    %v3992 = vunpack.c.l.b16 %v1937
    %v3993 = vunpack.c.l.b16 %v1938
    %v3994 = vunpack.c.l.b16 %v1939
    %v3995 = vunpack.c.l.b16 %v1940
    %v3996 = vunpack.c.l.b16 %v1941
    %v3997 = vpack.c.b16 %v2974, %v2973
    %v3998 = vpack.c.b16 %v2976, %v2975
    %v3999 = vpack.c.b16 %v2978, %v2977
    %v4000 = vpack.c.b16 %v2980, %v2979
    %v4001 = vpack.c.b16 %v2982, %v2981
    %v4002 = vpack.c.b16 %v2984, %v2983
    %v4003 = vpack.c.b16 %v2986, %v2985
    %v4004 = vpack.c.b16 %v2988, %v2987
    %v4005 = vpack.c.b16 %v2990, %v2989
    %v4006 = vpack.c.b16 %v2992, %v2991
    %v4007 = vpack.c.b16 %v2994, %v2993
    %v4008 = vpack.c.b16 %v2996, %v2995
    %v4009 = vpack.c.b16 %v2998, %v2997
    %v4010 = vpack.c.b16 %v3000, %v2999
    %v4011 = vpack.c.b16 %v3002, %v3001
    %v4012 = vpack.c.b16 %v3004, %v3003
    %v4013 = vpack.c.b16 %v3006, %v3005
    %v4014 = vpack.c.b16 %v3008, %v3007
    %v4015 = vpack.c.b16 %v3010, %v3009
    %v4016 = vpack.c.b16 %v3012, %v3011
    %v4017 = vpack.c.b16 %v3014, %v3013
    %v4018 = vpack.c.b16 %v3016, %v3015
    %v4019 = vpack.c.b16 %v3018, %v3017
    %v4020 = vpack.c.b16 %v3020, %v3019
    %v4021 = vpack.c.b16 %v3022, %v3021
    %v4022 = vpack.c.b16 %v3024, %v3023
    %v4023 = vpack.c.b16 %v3026, %v3025
    %v4024 = vpack.c.b16 %v3028, %v3027
    %v4025 = vpack.c.b16 %v3030, %v3029
    %v4026 = vpack.c.b16 %v3032, %v3031
    %v4027 = vpack.c.b16 %v3034, %v3033
    %v4028 = vpack.c.b16 %v3036, %v3035
    %v4029 = vpack.c.b16 %v3038, %v3037
    %v4030 = vpack.c.b16 %v3040, %v3039
    %v4031 = vpack.c.b16 %v3042, %v3041
    %v4032 = vpack.c.b16 %v3044, %v3043
    %v4033 = vpack.c.b16 %v3046, %v3045
    %v4034 = vpack.c.b16 %v3048, %v3047
    %v4035 = vpack.c.b16 %v3050, %v3049
    %v4036 = vpack.c.b16 %v3052, %v3051
    %v4037 = vpack.c.b16 %v3054, %v3053
    %v4038 = vpack.c.b16 %v3056, %v3055
    %v4039 = vpack.c.b16 %v3058, %v3057
    %v4040 = vpack.c.b16 %v3060, %v3059
    %v4041 = vpack.c.b16 %v3062, %v3061
    %v4042 = vpack.c.b16 %v3064, %v3063
    %v4043 = vpack.c.b16 %v3066, %v3065
    %v4044 = vpack.c.b16 %v3068, %v3067
    %v4045 = vpack.c.b16 %v3070, %v3069
    %v4046 = vpack.c.b16 %v3072, %v3071
    %v4047 = vpack.c.b16 %v3074, %v3073
    %v4048 = vpack.c.b16 %v3076, %v3075
    %v4049 = vpack.c.b16 %v3078, %v3077
    %v4050 = vpack.c.b16 %v3080, %v3079
    %v4051 = vpack.c.b16 %v3082, %v3081
    %v4052 = vpack.c.b16 %v3084, %v3083
    %v4053 = vpack.c.b16 %v3086, %v3085
    %v4054 = vpack.c.b16 %v3088, %v3087
    %v4055 = vpack.c.b16 %v3090, %v3089
    %v4056 = vpack.c.b16 %v3092, %v3091
    %v4057 = vpack.c.b16 %v3094, %v3093
    %v4058 = vpack.c.b16 %v3096, %v3095
    %v4059 = vpack.c.b16 %v3098, %v3097
    %v4060 = vpack.c.b16 %v3100, %v3099
    %v4061 = vpack.c.b16 %v3102, %v3101
    %v4062 = vpack.c.b16 %v3104, %v3103
    %v4063 = vpack.c.b16 %v3106, %v3105
    %v4064 = vpack.c.b16 %v3108, %v3107
    %v4065 = vpack.c.b16 %v3110, %v3109
    %v4066 = vpack.c.b16 %v3112, %v3111
    %v4067 = vpack.c.b16 %v3114, %v3113
    %v4068 = vpack.c.b16 %v3116, %v3115
    %v4069 = vpack.c.b16 %v3118, %v3117
    %v4070 = vpack.c.b16 %v3120, %v3119
    %v4071 = vpack.c.b16 %v3122, %v3121
    %v4072 = vpack.c.b16 %v3124, %v3123
    %v4073 = vpack.c.b16 %v3126, %v3125
    %v4074 = vpack.c.b16 %v3128, %v3127
    %v4075 = vpack.c.b16 %v3130, %v3129
    %v4076 = vpack.c.b16 %v3132, %v3131
    %v4077 = vpack.c.b16 %v3134, %v3133
    %v4078 = vpack.c.b16 %v3136, %v3135
    %v4079 = vpack.c.b16 %v3138, %v3137
    %v4080 = vpack.c.b16 %v3140, %v3139
    %v4081 = vpack.c.b16 %v3142, %v3141
    %v4082 = vpack.c.b16 %v3144, %v3143
    %v4083 = vpack.c.b16 %v3146, %v3145
    %v4084 = vpack.c.b16 %v3148, %v3147
    %v4085 = vpack.c.b16 %v3150, %v3149
    %v4086 = vpack.c.b16 %v3152, %v3151
    %v4087 = vpack.c.b16 %v3154, %v3153
    %v4088 = vpack.c.b16 %v3156, %v3155
    %v4089 = vpack.c.b16 %v3158, %v3157
    %v4090 = vpack.c.b16 %v3160, %v3159
    %v4091 = vpack.c.b16 %v3162, %v3161
    %v4092 = vpack.c.b16 %v3164, %v3163
    %v4093 = vpack.c.b16 %v3166, %v3165
    %v4094 = vpack.c.b16 %v3168, %v3167
    %v4095 = vpack.c.b16 %v3170, %v3169
    %v4096 = vpack.c.b16 %v3172, %v3171
    %v4097 = vpack.c.b16 %v3174, %v3173
    %v4098 = vpack.c.b16 %v3176, %v3175
    %v4099 = vpack.c.b16 %v3178, %v3177
    %v4100 = vpack.c.b16 %v3180, %v3179
    %v4101 = vpack.c.b16 %v3182, %v3181
    %v4102 = vpack.c.b16 %v3184, %v3183
    %v4103 = vpack.c.b16 %v3186, %v3185
    %v4104 = vpack.c.b16 %v3188, %v3187
    %v4105 = vpack.c.b16 %v3190, %v3189
    %v4106 = vpack.c.b16 %v3192, %v3191
    %v4107 = vpack.c.b16 %v3194, %v3193
    %v4108 = vpack.c.b16 %v3196, %v3195
    %v4109 = vpack.c.b16 %v3198, %v3197
    %v4110 = vpack.c.b16 %v3200, %v3199
    %v4111 = vpack.c.b16 %v3202, %v3201
    %v4112 = vpack.c.b16 %v3204, %v3203
    %v4113 = vpack.c.b16 %v3206, %v3205
    %v4114 = vpack.c.b16 %v3208, %v3207
    %v4115 = vpack.c.b16 %v3210, %v3209
    %v4116 = vpack.c.b16 %v3212, %v3211
    %v4117 = vpack.c.b16 %v3214, %v3213
    %v4118 = vpack.c.b16 %v3216, %v3215
    %v4119 = vpack.c.b16 %v3218, %v3217
    %v4120 = vpack.c.b16 %v3220, %v3219
    %v4121 = vpack.c.b16 %v3222, %v3221
    %v4122 = vpack.c.b16 %v3224, %v3223
    %v4123 = vpack.c.b16 %v3226, %v3225
    %v4124 = vpack.c.b16 %v3228, %v3227
    %v4125 = vpack.c.b16 %v3230, %v3229
    %v4126 = vpack.c.b16 %v3232, %v3231
    %v4127 = vpack.c.b16 %v3234, %v3233
    %v4128 = vpack.c.b16 %v3236, %v3235
    %v4129 = vpack.c.b16 %v3238, %v3237
    %v4130 = vpack.c.b16 %v3240, %v3239
    %v4131 = vpack.c.b16 %v3242, %v3241
    %v4132 = vpack.c.b16 %v3244, %v3243
    %v4133 = vpack.c.b16 %v3246, %v3245
    %v4134 = vpack.c.b16 %v3248, %v3247
    %v4135 = vpack.c.b16 %v3250, %v3249
    %v4136 = vpack.c.b16 %v3252, %v3251
    %v4137 = vpack.c.b16 %v3254, %v3253
    %v4138 = vpack.c.b16 %v3256, %v3255
    %v4139 = vpack.c.b16 %v3258, %v3257
    %v4140 = vpack.c.b16 %v3260, %v3259
    %v4141 = vpack.c.b16 %v3262, %v3261
    %v4142 = vpack.c.b16 %v3264, %v3263
    %v4143 = vpack.c.b16 %v3266, %v3265
    %v4144 = vpack.c.b16 %v3268, %v3267
    %v4145 = vpack.c.b16 %v3270, %v3269
    %v4146 = vpack.c.b16 %v3272, %v3271
    %v4147 = vpack.c.b16 %v3274, %v3273
    %v4148 = vpack.c.b16 %v3276, %v3275
    %v4149 = vpack.c.b16 %v3278, %v3277
    %v4150 = vpack.c.b16 %v3280, %v3279
    %v4151 = vpack.c.b16 %v3282, %v3281
    %v4152 = vpack.c.b16 %v3284, %v3283
    %v4153 = vpack.c.b16 %v3286, %v3285
    %v4154 = vpack.c.b16 %v3288, %v3287
    %v4155 = vpack.c.b16 %v3290, %v3289
    %v4156 = vpack.c.b16 %v3292, %v3291
    %v4157 = vpack.c.b16 %v3294, %v3293
    %v4158 = vpack.c.b16 %v3296, %v3295
    %v4159 = vpack.c.b16 %v3298, %v3297
    %v4160 = vpack.c.b16 %v3300, %v3299
    %v4161 = vpack.c.b16 %v3302, %v3301
    %v4162 = vpack.c.b16 %v3304, %v3303
    %v4163 = vpack.c.b16 %v3306, %v3305
    %v4164 = vpack.c.b16 %v3308, %v3307
    %v4165 = vpack.c.b16 %v3310, %v3309
    %v4166 = vpack.c.b16 %v3312, %v3311
    %v4167 = vpack.c.b16 %v3314, %v3313
    %v4168 = vpack.c.b16 %v3316, %v3315
    %v4169 = vpack.c.b16 %v3318, %v3317
    %v4170 = vpack.c.b16 %v3320, %v3319
    %v4171 = vpack.c.b16 %v3322, %v3321
    %v4172 = vpack.c.b16 %v3324, %v3323
    %v4173 = vpack.c.b16 %v3326, %v3325
    %v4174 = vpack.c.b16 %v3328, %v3327
    %v4175 = vpack.c.b16 %v3330, %v3329
    %v4176 = vpack.c.b16 %v3332, %v3331
    %v4177 = vpack.c.b16 %v3334, %v3333
    %v4178 = vpack.c.b16 %v3336, %v3335
    %v4179 = vpack.c.b16 %v3338, %v3337
    %v4180 = vpack.c.b16 %v3340, %v3339
    %v4181 = vpack.c.b16 %v3342, %v3341
    %v4182 = vpack.c.b16 %v3344, %v3343
    %v4183 = vpack.c.b16 %v3346, %v3345
    %v4184 = vpack.c.b16 %v3348, %v3347
    %v4185 = vpack.c.b16 %v3350, %v3349
    %v4186 = vpack.c.b16 %v3352, %v3351
    %v4187 = vpack.c.b16 %v3354, %v3353
    %v4188 = vpack.c.b16 %v3356, %v3355
    %v4189 = vpack.c.b16 %v3358, %v3357
    %v4190 = vpack.c.b16 %v3360, %v3359
    %v4191 = vpack.c.b16 %v3362, %v3361
    %v4192 = vpack.c.b16 %v3364, %v3363
    %v4193 = vpack.c.b16 %v3366, %v3365
    %v4194 = vpack.c.b16 %v3368, %v3367
    %v4195 = vpack.c.b16 %v3370, %v3369
    %v4196 = vpack.c.b16 %v3372, %v3371
    %v4197 = vpack.c.b16 %v3374, %v3373
    %v4198 = vpack.c.b16 %v3376, %v3375
    %v4199 = vpack.c.b16 %v3378, %v3377
    %v4200 = vpack.c.b16 %v3380, %v3379
    %v4201 = vpack.c.b16 %v3382, %v3381
    %v4202 = vpack.c.b16 %v3384, %v3383
    %v4203 = vpack.c.b16 %v3386, %v3385
    %v4204 = vpack.c.b16 %v3388, %v3387
    %v4205 = vpack.c.b16 %v3390, %v3389
    %v4206 = vpack.c.b16 %v3392, %v3391
    %v4207 = vpack.c.b16 %v3394, %v3393
    %v4208 = vpack.c.b16 %v3396, %v3395
    %v4209 = vpack.c.b16 %v3398, %v3397
    %v4210 = vpack.c.b16 %v3400, %v3399
    %v4211 = vpack.c.b16 %v3402, %v3401
    %v4212 = vpack.c.b16 %v3404, %v3403
    %v4213 = vpack.c.b16 %v3406, %v3405
    %v4214 = vpack.c.b16 %v3408, %v3407
    %v4215 = vpack.c.b16 %v3410, %v3409
    %v4216 = vpack.c.b16 %v3412, %v3411
    %v4217 = vpack.c.b16 %v3414, %v3413
    %v4218 = vpack.c.b16 %v3416, %v3415
    %v4219 = vpack.c.b16 %v3418, %v3417
    %v4220 = vpack.c.b16 %v3420, %v3419
    %v4221 = vpack.c.b16 %v3422, %v3421
    %v4222 = vpack.c.b16 %v3424, %v3423
    %v4223 = vpack.c.b16 %v3426, %v3425
    %v4224 = vpack.c.b16 %v3428, %v3427
    %v4225 = vpack.c.b16 %v3430, %v3429
    %v4226 = vpack.c.b16 %v3432, %v3431
    %v4227 = vpack.c.b16 %v3434, %v3433
    %v4228 = vpack.c.b16 %v3436, %v3435
    %v4229 = vpack.c.b16 %v3438, %v3437
    %v4230 = vpack.c.b16 %v3440, %v3439
    %v4231 = vpack.c.b16 %v3442, %v3441
    %v4232 = vpack.c.b16 %v3444, %v3443
    %v4233 = vpack.c.b16 %v3446, %v3445
    %v4234 = vpack.c.b16 %v3448, %v3447
    %v4235 = vpack.c.b16 %v3450, %v3449
    %v4236 = vpack.c.b16 %v3452, %v3451
    %v4237 = vpack.c.b16 %v3454, %v3453
    %v4238 = vpack.c.b16 %v3456, %v3455
    %v4239 = vpack.c.b16 %v3458, %v3457
    %v4240 = vpack.c.b16 %v3460, %v3459
    %v4241 = vpack.c.b16 %v3462, %v3461
    %v4242 = vpack.c.b16 %v3464, %v3463
    %v4243 = vpack.c.b16 %v3466, %v3465
    %v4244 = vpack.c.b16 %v3468, %v3467
    %v4245 = vpack.c.b16 %v3470, %v3469
    %v4246 = vpack.c.b16 %v3472, %v3471
    %v4247 = vpack.c.b16 %v3474, %v3473
    %v4248 = vpack.c.b16 %v3476, %v3475
    %v4249 = vpack.c.b16 %v3478, %v3477
    %v4250 = vpack.c.b16 %v3480, %v3479
    %v4251 = vpack.c.b16 %v3482, %v3481
    %v4252 = vpack.c.b16 %v3484, %v3483
    %v4253 = vpack.c.b16 %v3486, %v3485
    %v4254 = vpack.c.b16 %v3488, %v3487
    %v4255 = vpack.c.b16 %v3490, %v3489
    %v4256 = vpack.c.b16 %v3492, %v3491
    %v4257 = vpack.c.b16 %v3494, %v3493
    %v4258 = vpack.c.b16 %v3496, %v3495
    %v4259 = vpack.c.b16 %v3498, %v3497
    %v4260 = vpack.c.b16 %v3500, %v3499
    %v4261 = vpack.c.b16 %v3502, %v3501
    %v4262 = vpack.c.b16 %v3504, %v3503
    %v4263 = vpack.c.b16 %v3506, %v3505
    %v4264 = vpack.c.b16 %v3508, %v3507
    %v4265 = vpack.c.b16 %v3510, %v3509
    %v4266 = vpack.c.b16 %v3512, %v3511
    %v4267 = vpack.c.b16 %v3514, %v3513
    %v4268 = vpack.c.b16 %v3516, %v3515
    %v4269 = vpack.c.b16 %v3518, %v3517
    %v4270 = vpack.c.b16 %v3520, %v3519
    %v4271 = vpack.c.b16 %v3522, %v3521
    %v4272 = vpack.c.b16 %v3524, %v3523
    %v4273 = vpack.c.b16 %v3526, %v3525
    %v4274 = vpack.c.b16 %v3528, %v3527
    %v4275 = vpack.c.b16 %v3530, %v3529
    %v4276 = vpack.c.b16 %v3532, %v3531
    %v4277 = vpack.c.b16 %v3534, %v3533
    %v4278 = vpack.c.b16 %v3536, %v3535
    %v4279 = vpack.c.b16 %v3538, %v3537
    %v4280 = vpack.c.b16 %v3540, %v3539
    %v4281 = vpack.c.b16 %v3542, %v3541
    %v4282 = vpack.c.b16 %v3544, %v3543
    %v4283 = vpack.c.b16 %v3546, %v3545
    %v4284 = vpack.c.b16 %v3548, %v3547
    %v4285 = vpack.c.b16 %v3550, %v3549
    %v4286 = vpack.c.b16 %v3552, %v3551
    %v4287 = vpack.c.b16 %v3554, %v3553
    %v4288 = vpack.c.b16 %v3556, %v3555
    %v4289 = vpack.c.b16 %v3558, %v3557
    %v4290 = vpack.c.b16 %v3560, %v3559
    %v4291 = vpack.c.b16 %v3562, %v3561
    %v4292 = vpack.c.b16 %v3564, %v3563
    %v4293 = vpack.c.b16 %v3566, %v3565
    %v4294 = vpack.c.b16 %v3568, %v3567
    %v4295 = vpack.c.b16 %v3570, %v3569
    %v4296 = vpack.c.b16 %v3572, %v3571
    %v4297 = vpack.c.b16 %v3574, %v3573
    %v4298 = vpack.c.b16 %v3576, %v3575
    %v4299 = vpack.c.b16 %v3578, %v3577
    %v4300 = vpack.c.b16 %v3580, %v3579
    %v4301 = vpack.c.b16 %v3582, %v3581
    %v4302 = vpack.c.b16 %v3584, %v3583
    %v4303 = vpack.c.b16 %v3586, %v3585
    %v4304 = vpack.c.b16 %v3588, %v3587
    %v4305 = vpack.c.b16 %v3590, %v3589
    %v4306 = vpack.c.b16 %v3592, %v3591
    %v4307 = vpack.c.b16 %v3594, %v3593
    %v4308 = vpack.c.b16 %v3596, %v3595
    %v4309 = vpack.c.b16 %v3598, %v3597
    %v4310 = vpack.c.b16 %v3600, %v3599
    %v4311 = vpack.c.b16 %v3602, %v3601
    %v4312 = vpack.c.b16 %v3604, %v3603
    %v4313 = vpack.c.b16 %v3606, %v3605
    %v4314 = vpack.c.b16 %v3608, %v3607
    %v4315 = vpack.c.b16 %v3610, %v3609
    %v4316 = vpack.c.b16 %v3612, %v3611
    %v4317 = vpack.c.b16 %v3614, %v3613
    %v4318 = vpack.c.b16 %v3616, %v3615
    %v4319 = vpack.c.b16 %v3618, %v3617
    %v4320 = vpack.c.b16 %v3620, %v3619
    %v4321 = vpack.c.b16 %v3622, %v3621
    %v4322 = vpack.c.b16 %v3624, %v3623
    %v4323 = vpack.c.b16 %v3626, %v3625
    %v4324 = vpack.c.b16 %v3628, %v3627
    %v4325 = vpack.c.b16 %v3630, %v3629
    %v4326 = vpack.c.b16 %v3632, %v3631
    %v4327 = vpack.c.b16 %v3634, %v3633
    %v4328 = vpack.c.b16 %v3636, %v3635
    %v4329 = vpack.c.b16 %v3638, %v3637
    %v4330 = vpack.c.b16 %v3640, %v3639
    %v4331 = vpack.c.b16 %v3642, %v3641
    %v4332 = vpack.c.b16 %v3644, %v3643
    %v4333 = vpack.c.b16 %v3646, %v3645
    %v4334 = vpack.c.b16 %v3648, %v3647
    %v4335 = vpack.c.b16 %v3650, %v3649
    %v4336 = vpack.c.b16 %v3652, %v3651
    %v4337 = vpack.c.b16 %v3654, %v3653
    %v4338 = vpack.c.b16 %v3656, %v3655
    %v4339 = vpack.c.b16 %v3658, %v3657
    %v4340 = vpack.c.b16 %v3660, %v3659
    %v4341 = vpack.c.b16 %v3662, %v3661
    %v4342 = vpack.c.b16 %v3664, %v3663
    %v4343 = vpack.c.b16 %v3666, %v3665
    %v4344 = vpack.c.b16 %v3668, %v3667
    %v4345 = vpack.c.b16 %v3670, %v3669
    %v4346 = vpack.c.b16 %v3672, %v3671
    %v4347 = vpack.c.b16 %v3674, %v3673
    %v4348 = vpack.c.b16 %v3676, %v3675
    %v4349 = vpack.c.b16 %v3678, %v3677
    %v4350 = vpack.c.b16 %v3680, %v3679
    %v4351 = vpack.c.b16 %v3682, %v3681
    %v4352 = vpack.c.b16 %v3684, %v3683
    %v4353 = vpack.c.b16 %v3686, %v3685
    %v4354 = vpack.c.b16 %v3688, %v3687
    %v4355 = vpack.c.b16 %v3690, %v3689
    %v4356 = vpack.c.b16 %v3692, %v3691
    %v4357 = vpack.c.b16 %v3694, %v3693
    %v4358 = vpack.c.b16 %v3696, %v3695
    %v4359 = vpack.c.b16 %v3698, %v3697
    %v4360 = vpack.c.b16 %v3700, %v3699
    %v4361 = vpack.c.b16 %v3702, %v3701
    %v4362 = vpack.c.b16 %v3704, %v3703
    %v4363 = vpack.c.b16 %v3706, %v3705
    %v4364 = vpack.c.b16 %v3708, %v3707
    %v4365 = vpack.c.b16 %v3710, %v3709
    %v4366 = vpack.c.b16 %v3712, %v3711
    %v4367 = vpack.c.b16 %v3714, %v3713
    %v4368 = vpack.c.b16 %v3716, %v3715
    %v4369 = vpack.c.b16 %v3718, %v3717
    %v4370 = vpack.c.b16 %v3720, %v3719
    %v4371 = vpack.c.b16 %v3722, %v3721
    %v4372 = vpack.c.b16 %v3724, %v3723
    %v4373 = vpack.c.b16 %v3726, %v3725
    %v4374 = vpack.c.b16 %v3728, %v3727
    %v4375 = vpack.c.b16 %v3730, %v3729
    %v4376 = vpack.c.b16 %v3732, %v3731
    %v4377 = vpack.c.b16 %v3734, %v3733
    %v4378 = vpack.c.b16 %v3736, %v3735
    %v4379 = vpack.c.b16 %v3738, %v3737
    %v4380 = vpack.c.b16 %v3740, %v3739
    %v4381 = vpack.c.b16 %v3742, %v3741
    %v4382 = vpack.c.b16 %v3744, %v3743
    %v4383 = vpack.c.b16 %v3746, %v3745
    %v4384 = vpack.c.b16 %v3748, %v3747
    %v4385 = vpack.c.b16 %v3750, %v3749
    %v4386 = vpack.c.b16 %v3752, %v3751
    %v4387 = vpack.c.b16 %v3754, %v3753
    %v4388 = vpack.c.b16 %v3756, %v3755
    %v4389 = vpack.c.b16 %v3758, %v3757
    %v4390 = vpack.c.b16 %v3760, %v3759
    %v4391 = vpack.c.b16 %v3762, %v3761
    %v4392 = vpack.c.b16 %v3764, %v3763
    %v4393 = vpack.c.b16 %v3766, %v3765
    %v4394 = vpack.c.b16 %v3768, %v3767
    %v4395 = vpack.c.b16 %v3770, %v3769
    %v4396 = vpack.c.b16 %v3772, %v3771
    %v4397 = vpack.c.b16 %v3774, %v3773
    %v4398 = vpack.c.b16 %v3776, %v3775
    %v4399 = vpack.c.b16 %v3778, %v3777
    %v4400 = vpack.c.b16 %v3780, %v3779
    %v4401 = vpack.c.b16 %v3782, %v3781
    %v4402 = vpack.c.b16 %v3784, %v3783
    %v4403 = vpack.c.b16 %v3786, %v3785
    %v4404 = vpack.c.b16 %v3788, %v3787
    %v4405 = vpack.c.b16 %v3790, %v3789
    %v4406 = vpack.c.b16 %v3792, %v3791
    %v4407 = vpack.c.b16 %v3794, %v3793
    %v4408 = vpack.c.b16 %v3796, %v3795
    %v4409 = vpack.c.b16 %v3798, %v3797
    %v4410 = vpack.c.b16 %v3800, %v3799
    %v4411 = vpack.c.b16 %v3802, %v3801
    %v4412 = vpack.c.b16 %v3804, %v3803
    %v4413 = vpack.c.b16 %v3806, %v3805
    %v4414 = vpack.c.b16 %v3808, %v3807
    %v4415 = vpack.c.b16 %v3810, %v3809
    %v4416 = vpack.c.b16 %v3812, %v3811
    %v4417 = vpack.c.b16 %v3814, %v3813
    %v4418 = vpack.c.b16 %v3816, %v3815
    %v4419 = vpack.c.b16 %v3818, %v3817
    %v4420 = vpack.c.b16 %v3820, %v3819
    %v4421 = vpack.c.b16 %v3822, %v3821
    %v4422 = vpack.c.b16 %v3824, %v3823
    %v4423 = vpack.c.b16 %v3826, %v3825
    %v4424 = vpack.c.b16 %v3828, %v3827
    %v4425 = vpack.c.b16 %v3830, %v3829
    %v4426 = vpack.c.b16 %v3832, %v3831
    %v4427 = vpack.c.b16 %v3834, %v3833
    %v4428 = vpack.c.b16 %v3836, %v3835
    %v4429 = vpack.c.b16 %v3838, %v3837
    %v4430 = vpack.c.b16 %v3840, %v3839
    %v4431 = vpack.c.b16 %v3842, %v3841
    %v4432 = vpack.c.b16 %v3844, %v3843
    %v4433 = vpack.c.b16 %v3846, %v3845
    %v4434 = vpack.c.b16 %v3848, %v3847
    %v4435 = vpack.c.b16 %v3850, %v3849
    %v4436 = vpack.c.b16 %v3852, %v3851
    %v4437 = vpack.c.b16 %v3854, %v3853
    %v4438 = vpack.c.b16 %v3856, %v3855
    %v4439 = vpack.c.b16 %v3858, %v3857
    %v4440 = vpack.c.b16 %v3860, %v3859
    %v4441 = vpack.c.b16 %v3862, %v3861
    %v4442 = vpack.c.b16 %v3864, %v3863
    %v4443 = vpack.c.b16 %v3866, %v3865
    %v4444 = vpack.c.b16 %v3868, %v3867
    %v4445 = vpack.c.b16 %v3870, %v3869
    %v4446 = vpack.c.b16 %v3872, %v3871
    %v4447 = vpack.c.b16 %v3874, %v3873
    %v4448 = vpack.c.b16 %v3876, %v3875
    %v4449 = vpack.c.b16 %v3878, %v3877
    %v4450 = vpack.c.b16 %v3880, %v3879
    %v4451 = vpack.c.b16 %v3882, %v3881
    %v4452 = vpack.c.b16 %v3884, %v3883
    %v4453 = vpack.c.b16 %v3886, %v3885
    %v4454 = vpack.c.b16 %v3888, %v3887
    %v4455 = vpack.c.b16 %v3890, %v3889
    %v4456 = vpack.c.b16 %v3892, %v3891
    %v4457 = vpack.c.b16 %v3894, %v3893
    %v4458 = vpack.c.b16 %v3896, %v3895
    %v4459 = vpack.c.b16 %v3898, %v3897
    %v4460 = vpack.c.b16 %v3900, %v3899
    %v4461 = vpack.c.b16 %v3902, %v3901
    %v4462 = vpack.c.b16 %v3904, %v3903
    %v4463 = vpack.c.b16 %v3906, %v3905
    %v4464 = vpack.c.b16 %v3908, %v3907
    %v4465 = vpack.c.b16 %v3910, %v3909
    %v4466 = vpack.c.b16 %v3912, %v3911
    %v4467 = vpack.c.b16 %v3914, %v3913
    %v4468 = vpack.c.b16 %v3916, %v3915
    %v4469 = vpack.c.b16 %v3918, %v3917
    %v4470 = vpack.c.b16 %v3920, %v3919
    %v4471 = vpack.c.b16 %v3922, %v3921
    %v4472 = vpack.c.b16 %v3924, %v3923
    %v4473 = vpack.c.b16 %v3926, %v3925
    %v4474 = vpack.c.b16 %v3928, %v3927
    %v4475 = vpack.c.b16 %v3930, %v3929
    %v4476 = vpack.c.b16 %v3932, %v3931
    %v4477 = vpack.c.b16 %v3934, %v3933
    %v4478 = vpack.c.b16 %v3936, %v3935
    %v4479 = vpack.c.b16 %v3938, %v3937
    %v4480 = vpack.c.b16 %v3940, %v3939
    %v4481 = vpack.c.b16 %v3942, %v3941
    %v4482 = vpack.c.b16 %v3944, %v3943
    %v4483 = vpack.c.b16 %v3946, %v3945
    %v4484 = vpack.c.b16 %v3948, %v3947
    %v4485 = vpack.c.b16 %v3950, %v3949
    %v4486 = vpack.c.b16 %v3952, %v3951
    %v4487 = vpack.c.b16 %v3954, %v3953
    %v4488 = vpack.c.b16 %v3956, %v3955
    %v4489 = vpack.c.b16 %v3958, %v3957
    %v4490 = vpack.c.b16 %v3960, %v3959
    %v4491 = vpack.c.b16 %v3962, %v3961
    %v4492 = vpack.c.b16 %v3964, %v3963
    %v4493 = vpack.c.b16 %v3966, %v3965
    %v4494 = vpack.c.b16 %v3968, %v3967
    %v4495 = vpack.c.b16 %v3970, %v3969
    %v4496 = vpack.c.b16 %v3972, %v3971
    %v4497 = vpack.c.b16 %v3974, %v3973
    %v4498 = vpack.c.b16 %v3976, %v3975
    %v4499 = vpack.c.b16 %v3978, %v3977
    %v4500 = vpack.c.b16 %v3980, %v3979
    %v4501 = vpack.c.b16 %v3982, %v3981
    %v4502 = vpack.c.b16 %v3984, %v3983
    %v4503 = vpack.c.b16 %v3986, %v3985
    %v4504 = vpack.c.b16 %v3988, %v3987
    %v4505 = vpack.c.b16 %v3990, %v3989
    %v4506 = vpack.c.b16 %v3992, %v3991
    %v4507 = vpack.c.b16 %v3994, %v3993
    %v4508 = vpack.c.b16 %v3996, %v3995
    %5021 = vmatprep.subr.bf16.mxu0 0
    %5022 = vmatpush1.bf16.msra.mxu0 %v4004
    %5023 = vmatprep.subr.bf16.mxu0 0
    %5024 = vmatpush1.bf16.msra.mxu0 %v4003
    %5025 = vmatprep.subr.bf16.mxu0 0
    %5026 = vmatpush1.bf16.msra.mxu0 %v4002
    %5027 = vmatprep.subr.bf16.mxu0 0
    %5028 = vmatpush1.bf16.msra.mxu0 %v4001
    %5029 = vmatprep.subr.bf16.mxu0 0
    %5030 = vmatpush1.bf16.msra.mxu0 %v4000
    %5031 = vmatprep.subr.bf16.mxu0 0
    %5032 = vmatpush1.bf16.msra.mxu0 %v3999
    %5033 = vmatprep.subr.bf16.mxu0 0
    %5034 = vmatpush1.bf16.msra.mxu0 %v3998
    %5035 = vmatprep.subr.bf16.mxu0 0
    %5036 = vmatpush1.bf16.msra.mxu0 %v3997
    %5037 = vmatprep.subr.bf16.mxu0 0
    %5038 = vmatpush2.bf16.msra.mxu0 %v4012
    %5039 = vmatprep.subr.bf16.mxu0 0
    %5040 = vmatpush2.bf16.msra.mxu0 %v4011
    %5041 = vmatprep.subr.bf16.mxu0 0
    %5042 = vmatpush2.bf16.msra.mxu0 %v4010
    %5043 = vmatprep.subr.bf16.mxu0 0
    %5044 = vmatpush2.bf16.msra.mxu0 %v4009
    %5045 = vmatprep.subr.bf16.mxu0 0
    %5046 = vmatpush2.bf16.msra.mxu0 %v4008
    %5047 = vmatprep.subr.bf16.mxu0 0
    %5048 = vmatpush2.bf16.msra.mxu0 %v4007
    %5049 = vmatprep.subr.bf16.mxu0 0
    %5050 = vmatpush2.bf16.msra.mxu0 %v4006
    %5051 = vmatprep.subr.bf16.mxu0 0
    %5052 = vmatpush2.bf16.msra.mxu0 %v4005
    %5053 = vmatprep.mubr.bf16.mxu0 %v855
    %5054 = vmatmul.mubr.bf16.gmra.mxu0 %v854
    %v5055 = vpop.f32.mrf.mxu0
    %v5056 = vadd.f32 %v1947, %v5055
    %v5057 = vpop.f32.mrf.mxu0
    %v5058 = vpop.f32.mrf.mxu0
    %v5059 = vpop.f32.mrf.mxu0
    %5060 = vdwg.mxu0
    %5061 = vmatprep.subr.bf16.mxu0 0
    %5062 = vmatpush1.bf16.msra.mxu0 %v4020
    %5063 = vmatprep.subr.bf16.mxu0 0
    %5064 = vmatpush1.bf16.msra.mxu0 %v4019
    %5065 = vmatprep.subr.bf16.mxu0 0
    %5066 = vmatpush1.bf16.msra.mxu0 %v4018
    %5067 = vmatprep.subr.bf16.mxu0 0
    %5068 = vmatpush1.bf16.msra.mxu0 %v4017
    %5069 = vmatprep.subr.bf16.mxu0 0
    %5070 = vmatpush1.bf16.msra.mxu0 %v4016
    %5071 = vmatprep.subr.bf16.mxu0 0
    %5072 = vmatpush1.bf16.msra.mxu0 %v4015
    %5073 = vmatprep.subr.bf16.mxu0 0
    %5074 = vmatpush1.bf16.msra.mxu0 %v4014
    %5075 = vmatprep.subr.bf16.mxu0 0
    %5076 = vmatpush1.bf16.msra.mxu0 %v4013
    %5077 = vmatprep.subr.bf16.mxu0 0
    %5078 = vmatpush2.bf16.msra.mxu0 %v4028
    %5079 = vmatprep.subr.bf16.mxu0 0
    %5080 = vmatpush2.bf16.msra.mxu0 %v4027
    %5081 = vmatprep.subr.bf16.mxu0 0
    %5082 = vmatpush2.bf16.msra.mxu0 %v4026
    %5083 = vmatprep.subr.bf16.mxu0 0
    %5084 = vmatpush2.bf16.msra.mxu0 %v4025
    %5085 = vmatprep.subr.bf16.mxu0 0
    %5086 = vmatpush2.bf16.msra.mxu0 %v4024
    %5087 = vmatprep.subr.bf16.mxu0 0
    %5088 = vmatpush2.bf16.msra.mxu0 %v4023
    %5089 = vmatprep.subr.bf16.mxu0 0
    %5090 = vmatpush2.bf16.msra.mxu0 %v4022
    %5091 = vmatprep.subr.bf16.mxu0 0
    %5092 = vmatpush2.bf16.msra.mxu0 %v4021
    %5093 = vmatprep.mubr.bf16.mxu0 %v857
    %5094 = vmatmul.mubr.bf16.gmra.mxu0 %v856
    %v5095 = vpop.f32.mrf.mxu0
    %v5096 = vadd.f32 %v5056, %v5095
    %v5097 = vpop.f32.mrf.mxu0
    %v5098 = vpop.f32.mrf.mxu0
    %v5099 = vpop.f32.mrf.mxu0
    %5100 = vdwg.mxu0
    %5101 = vmatprep.subr.bf16.mxu0 0
    %5102 = vmatpush1.bf16.msra.mxu0 %v4036
    %5103 = vmatprep.subr.bf16.mxu0 0
    %5104 = vmatpush1.bf16.msra.mxu0 %v4035
    %5105 = vmatprep.subr.bf16.mxu0 0
    %5106 = vmatpush1.bf16.msra.mxu0 %v4034
    %5107 = vmatprep.subr.bf16.mxu0 0
    %5108 = vmatpush1.bf16.msra.mxu0 %v4033
    %5109 = vmatprep.subr.bf16.mxu0 0
    %5110 = vmatpush1.bf16.msra.mxu0 %v4032
    %5111 = vmatprep.subr.bf16.mxu0 0
    %5112 = vmatpush1.bf16.msra.mxu0 %v4031
    %5113 = vmatprep.subr.bf16.mxu0 0
    %5114 = vmatpush1.bf16.msra.mxu0 %v4030
    %5115 = vmatprep.subr.bf16.mxu0 0
    %5116 = vmatpush1.bf16.msra.mxu0 %v4029
    %5117 = vmatprep.subr.bf16.mxu0 0
    %5118 = vmatpush2.bf16.msra.mxu0 %v4044
    %5119 = vmatprep.subr.bf16.mxu0 0
    %5120 = vmatpush2.bf16.msra.mxu0 %v4043
    %5121 = vmatprep.subr.bf16.mxu0 0
    %5122 = vmatpush2.bf16.msra.mxu0 %v4042
    %5123 = vmatprep.subr.bf16.mxu0 0
    %5124 = vmatpush2.bf16.msra.mxu0 %v4041
    %5125 = vmatprep.subr.bf16.mxu0 0
    %5126 = vmatpush2.bf16.msra.mxu0 %v4040
    %5127 = vmatprep.subr.bf16.mxu0 0
    %5128 = vmatpush2.bf16.msra.mxu0 %v4039
    %5129 = vmatprep.subr.bf16.mxu0 0
    %5130 = vmatpush2.bf16.msra.mxu0 %v4038
    %5131 = vmatprep.subr.bf16.mxu0 0
    %5132 = vmatpush2.bf16.msra.mxu0 %v4037
    %5133 = vmatprep.mubr.bf16.mxu0 %v859
    %5134 = vmatmul.mubr.bf16.gmra.mxu0 %v858
    %v5135 = vpop.f32.mrf.mxu0
    %v5136 = vadd.f32 %v5096, %v5135
    %v5137 = vpop.f32.mrf.mxu0
    %v5138 = vpop.f32.mrf.mxu0
    %v5139 = vpop.f32.mrf.mxu0
    %5140 = vdwg.mxu0
    %5141 = vmatprep.subr.bf16.mxu0 0
    %5142 = vmatpush1.bf16.msra.mxu0 %v4052
    %5143 = vmatprep.subr.bf16.mxu0 0
    %5144 = vmatpush1.bf16.msra.mxu0 %v4051
    %5145 = vmatprep.subr.bf16.mxu0 0
    %5146 = vmatpush1.bf16.msra.mxu0 %v4050
    %5147 = vmatprep.subr.bf16.mxu0 0
    %5148 = vmatpush1.bf16.msra.mxu0 %v4049
    %5149 = vmatprep.subr.bf16.mxu0 0
    %5150 = vmatpush1.bf16.msra.mxu0 %v4048
    %5151 = vmatprep.subr.bf16.mxu0 0
    %5152 = vmatpush1.bf16.msra.mxu0 %v4047
    %5153 = vmatprep.subr.bf16.mxu0 0
    %5154 = vmatpush1.bf16.msra.mxu0 %v4046
    %5155 = vmatprep.subr.bf16.mxu0 0
    %5156 = vmatpush1.bf16.msra.mxu0 %v4045
    %5157 = vmatprep.subr.bf16.mxu0 0
    %5158 = vmatpush2.bf16.msra.mxu0 %v4060
    %5159 = vmatprep.subr.bf16.mxu0 0
    %5160 = vmatpush2.bf16.msra.mxu0 %v4059
    %5161 = vmatprep.subr.bf16.mxu0 0
    %5162 = vmatpush2.bf16.msra.mxu0 %v4058
    %5163 = vmatprep.subr.bf16.mxu0 0
    %5164 = vmatpush2.bf16.msra.mxu0 %v4057
    %5165 = vmatprep.subr.bf16.mxu0 0
    %5166 = vmatpush2.bf16.msra.mxu0 %v4056
    %5167 = vmatprep.subr.bf16.mxu0 0
    %5168 = vmatpush2.bf16.msra.mxu0 %v4055
    %5169 = vmatprep.subr.bf16.mxu0 0
    %5170 = vmatpush2.bf16.msra.mxu0 %v4054
    %5171 = vmatprep.subr.bf16.mxu0 0
    %5172 = vmatpush2.bf16.msra.mxu0 %v4053
    %5173 = vmatprep.mubr.bf16.mxu0 %v861
    %5174 = vmatmul.mubr.bf16.gmra.mxu0 %v860
    %v5175 = vpop.f32.mrf.mxu0
    %v5176 = vadd.f32 %v5136, %v5175
    %v5177 = vpop.f32.mrf.mxu0
    %v5178 = vpop.f32.mrf.mxu0
    %v5179 = vpop.f32.mrf.mxu0
    %5180 = vdwg.mxu0
    %5181 = vmatprep.subr.bf16.mxu0 0
    %5182 = vmatpush1.bf16.msra.mxu0 %v4068
    %5183 = vmatprep.subr.bf16.mxu0 0
    %5184 = vmatpush1.bf16.msra.mxu0 %v4067
    %5185 = vmatprep.subr.bf16.mxu0 0
    %5186 = vmatpush1.bf16.msra.mxu0 %v4066
    %5187 = vmatprep.subr.bf16.mxu0 0
    %5188 = vmatpush1.bf16.msra.mxu0 %v4065
    %5189 = vmatprep.subr.bf16.mxu0 0
    %5190 = vmatpush1.bf16.msra.mxu0 %v4064
    %5191 = vmatprep.subr.bf16.mxu0 0
    %5192 = vmatpush1.bf16.msra.mxu0 %v4063
    %5193 = vmatprep.subr.bf16.mxu0 0
    %5194 = vmatpush1.bf16.msra.mxu0 %v4062
    %5195 = vmatprep.subr.bf16.mxu0 0
    %5196 = vmatpush1.bf16.msra.mxu0 %v4061
    %5197 = vmatprep.subr.bf16.mxu0 0
    %5198 = vmatpush2.bf16.msra.mxu0 %v4076
    %5199 = vmatprep.subr.bf16.mxu0 0
    %5200 = vmatpush2.bf16.msra.mxu0 %v4075
    %5201 = vmatprep.subr.bf16.mxu0 0
    %5202 = vmatpush2.bf16.msra.mxu0 %v4074
    %5203 = vmatprep.subr.bf16.mxu0 0
    %5204 = vmatpush2.bf16.msra.mxu0 %v4073
    %5205 = vmatprep.subr.bf16.mxu0 0
    %5206 = vmatpush2.bf16.msra.mxu0 %v4072
    %5207 = vmatprep.subr.bf16.mxu0 0
    %5208 = vmatpush2.bf16.msra.mxu0 %v4071
    %5209 = vmatprep.subr.bf16.mxu0 0
    %5210 = vmatpush2.bf16.msra.mxu0 %v4070
    %5211 = vmatprep.subr.bf16.mxu0 0
    %5212 = vmatpush2.bf16.msra.mxu0 %v4069
    %5213 = vmatprep.mubr.bf16.mxu0 %v863
    %5214 = vmatmul.mubr.bf16.gmra.mxu0 %v862
    %v5215 = vpop.f32.mrf.mxu0
    %v5216 = vadd.f32 %v5176, %v5215
    %v5217 = vpop.f32.mrf.mxu0
    %v5218 = vpop.f32.mrf.mxu0
    %v5219 = vpop.f32.mrf.mxu0
    %5220 = vdwg.mxu0
    %5221 = vmatprep.subr.bf16.mxu0 0
    %5222 = vmatpush1.bf16.msra.mxu0 %v4084
    %5223 = vmatprep.subr.bf16.mxu0 0
    %5224 = vmatpush1.bf16.msra.mxu0 %v4083
    %5225 = vmatprep.subr.bf16.mxu0 0
    %5226 = vmatpush1.bf16.msra.mxu0 %v4082
    %5227 = vmatprep.subr.bf16.mxu0 0
    %5228 = vmatpush1.bf16.msra.mxu0 %v4081
    %5229 = vmatprep.subr.bf16.mxu0 0
    %5230 = vmatpush1.bf16.msra.mxu0 %v4080
    %5231 = vmatprep.subr.bf16.mxu0 0
    %5232 = vmatpush1.bf16.msra.mxu0 %v4079
    %5233 = vmatprep.subr.bf16.mxu0 0
    %5234 = vmatpush1.bf16.msra.mxu0 %v4078
    %5235 = vmatprep.subr.bf16.mxu0 0
    %5236 = vmatpush1.bf16.msra.mxu0 %v4077
    %5237 = vmatprep.subr.bf16.mxu0 0
    %5238 = vmatpush2.bf16.msra.mxu0 %v4092
    %5239 = vmatprep.subr.bf16.mxu0 0
    %5240 = vmatpush2.bf16.msra.mxu0 %v4091
    %5241 = vmatprep.subr.bf16.mxu0 0
    %5242 = vmatpush2.bf16.msra.mxu0 %v4090
    %5243 = vmatprep.subr.bf16.mxu0 0
    %5244 = vmatpush2.bf16.msra.mxu0 %v4089
    %5245 = vmatprep.subr.bf16.mxu0 0
    %5246 = vmatpush2.bf16.msra.mxu0 %v4088
    %5247 = vmatprep.subr.bf16.mxu0 0
    %5248 = vmatpush2.bf16.msra.mxu0 %v4087
    %5249 = vmatprep.subr.bf16.mxu0 0
    %5250 = vmatpush2.bf16.msra.mxu0 %v4086
    %5251 = vmatprep.subr.bf16.mxu0 0
    %5252 = vmatpush2.bf16.msra.mxu0 %v4085
    %5253 = vmatprep.mubr.bf16.mxu0 %v865
    %5254 = vmatmul.mubr.bf16.gmra.mxu0 %v864
    %v5255 = vpop.f32.mrf.mxu0
    %v5256 = vadd.f32 %v5216, %v5255
    %v5257 = vpop.f32.mrf.mxu0
    %v5258 = vpop.f32.mrf.mxu0
    %v5259 = vpop.f32.mrf.mxu0
    %5260 = vdwg.mxu0
    %5261 = vmatprep.subr.bf16.mxu0 0
    %5262 = vmatpush1.bf16.msra.mxu0 %v4100
    %5263 = vmatprep.subr.bf16.mxu0 0
    %5264 = vmatpush1.bf16.msra.mxu0 %v4099
    %5265 = vmatprep.subr.bf16.mxu0 0
    %5266 = vmatpush1.bf16.msra.mxu0 %v4098
    %5267 = vmatprep.subr.bf16.mxu0 0
    %5268 = vmatpush1.bf16.msra.mxu0 %v4097
    %5269 = vmatprep.subr.bf16.mxu0 0
    %5270 = vmatpush1.bf16.msra.mxu0 %v4096
    %5271 = vmatprep.subr.bf16.mxu0 0
    %5272 = vmatpush1.bf16.msra.mxu0 %v4095
    %5273 = vmatprep.subr.bf16.mxu0 0
    %5274 = vmatpush1.bf16.msra.mxu0 %v4094
    %5275 = vmatprep.subr.bf16.mxu0 0
    %5276 = vmatpush1.bf16.msra.mxu0 %v4093
    %5277 = vmatprep.subr.bf16.mxu0 0
    %5278 = vmatpush2.bf16.msra.mxu0 %v4108
    %5279 = vmatprep.subr.bf16.mxu0 0
    %5280 = vmatpush2.bf16.msra.mxu0 %v4107
    %5281 = vmatprep.subr.bf16.mxu0 0
    %5282 = vmatpush2.bf16.msra.mxu0 %v4106
    %5283 = vmatprep.subr.bf16.mxu0 0
    %5284 = vmatpush2.bf16.msra.mxu0 %v4105
    %5285 = vmatprep.subr.bf16.mxu0 0
    %5286 = vmatpush2.bf16.msra.mxu0 %v4104
    %5287 = vmatprep.subr.bf16.mxu0 0
    %5288 = vmatpush2.bf16.msra.mxu0 %v4103
    %5289 = vmatprep.subr.bf16.mxu0 0
    %5290 = vmatpush2.bf16.msra.mxu0 %v4102
    %5291 = vmatprep.subr.bf16.mxu0 0
    %5292 = vmatpush2.bf16.msra.mxu0 %v4101
    %5293 = vmatprep.mubr.bf16.mxu0 %v867
    %5294 = vmatmul.mubr.bf16.gmra.mxu0 %v866
    %v5295 = vpop.f32.mrf.mxu0
    %v5296 = vadd.f32 %v5256, %v5295
    %v5297 = vpop.f32.mrf.mxu0
    %v5298 = vpop.f32.mrf.mxu0
    %v5299 = vpop.f32.mrf.mxu0
    %5300 = vdwg.mxu0
    %5301 = vmatprep.subr.bf16.mxu0 0
    %5302 = vmatpush1.bf16.msra.mxu0 %v4116
    %5303 = vmatprep.subr.bf16.mxu0 0
    %5304 = vmatpush1.bf16.msra.mxu0 %v4115
    %5305 = vmatprep.subr.bf16.mxu0 0
    %5306 = vmatpush1.bf16.msra.mxu0 %v4114
    %5307 = vmatprep.subr.bf16.mxu0 0
    %5308 = vmatpush1.bf16.msra.mxu0 %v4113
    %5309 = vmatprep.subr.bf16.mxu0 0
    %5310 = vmatpush1.bf16.msra.mxu0 %v4112
    %5311 = vmatprep.subr.bf16.mxu0 0
    %5312 = vmatpush1.bf16.msra.mxu0 %v4111
    %5313 = vmatprep.subr.bf16.mxu0 0
    %5314 = vmatpush1.bf16.msra.mxu0 %v4110
    %5315 = vmatprep.subr.bf16.mxu0 0
    %5316 = vmatpush1.bf16.msra.mxu0 %v4109
    %5317 = vmatprep.subr.bf16.mxu0 0
    %5318 = vmatpush2.bf16.msra.mxu0 %v4124
    %5319 = vmatprep.subr.bf16.mxu0 0
    %5320 = vmatpush2.bf16.msra.mxu0 %v4123
    %5321 = vmatprep.subr.bf16.mxu0 0
    %5322 = vmatpush2.bf16.msra.mxu0 %v4122
    %5323 = vmatprep.subr.bf16.mxu0 0
    %5324 = vmatpush2.bf16.msra.mxu0 %v4121
    %5325 = vmatprep.subr.bf16.mxu0 0
    %5326 = vmatpush2.bf16.msra.mxu0 %v4120
    %5327 = vmatprep.subr.bf16.mxu0 0
    %5328 = vmatpush2.bf16.msra.mxu0 %v4119
    %5329 = vmatprep.subr.bf16.mxu0 0
    %5330 = vmatpush2.bf16.msra.mxu0 %v4118
    %5331 = vmatprep.subr.bf16.mxu0 0
    %5332 = vmatpush2.bf16.msra.mxu0 %v4117
    %5333 = vmatprep.mubr.bf16.mxu0 %v869
    %5334 = vmatmul.mubr.bf16.gmra.mxu0 %v868
    %v5335 = vpop.f32.mrf.mxu0
    %v5336 = vadd.f32 %v5296, %v5335
    %v5337 = vpop.f32.mrf.mxu0
    %v5338 = vpop.f32.mrf.mxu0
    %v5339 = vpop.f32.mrf.mxu0
    %5340 = vdwg.mxu0
    %5341 = vmatprep.subr.bf16.mxu0 0
    %5342 = vmatpush1.bf16.msra.mxu0 %v4132
    %5343 = vmatprep.subr.bf16.mxu0 0
    %5344 = vmatpush1.bf16.msra.mxu0 %v4131
    %5345 = vmatprep.subr.bf16.mxu0 0
    %5346 = vmatpush1.bf16.msra.mxu0 %v4130
    %5347 = vmatprep.subr.bf16.mxu0 0
    %5348 = vmatpush1.bf16.msra.mxu0 %v4129
    %5349 = vmatprep.subr.bf16.mxu0 0
    %5350 = vmatpush1.bf16.msra.mxu0 %v4128
    %5351 = vmatprep.subr.bf16.mxu0 0
    %5352 = vmatpush1.bf16.msra.mxu0 %v4127
    %5353 = vmatprep.subr.bf16.mxu0 0
    %5354 = vmatpush1.bf16.msra.mxu0 %v4126
    %5355 = vmatprep.subr.bf16.mxu0 0
    %5356 = vmatpush1.bf16.msra.mxu0 %v4125
    %5357 = vmatprep.subr.bf16.mxu0 0
    %5358 = vmatpush2.bf16.msra.mxu0 %v4140
    %5359 = vmatprep.subr.bf16.mxu0 0
    %5360 = vmatpush2.bf16.msra.mxu0 %v4139
    %5361 = vmatprep.subr.bf16.mxu0 0
    %5362 = vmatpush2.bf16.msra.mxu0 %v4138
    %5363 = vmatprep.subr.bf16.mxu0 0
    %5364 = vmatpush2.bf16.msra.mxu0 %v4137
    %5365 = vmatprep.subr.bf16.mxu0 0
    %5366 = vmatpush2.bf16.msra.mxu0 %v4136
    %5367 = vmatprep.subr.bf16.mxu0 0
    %5368 = vmatpush2.bf16.msra.mxu0 %v4135
    %5369 = vmatprep.subr.bf16.mxu0 0
    %5370 = vmatpush2.bf16.msra.mxu0 %v4134
    %5371 = vmatprep.subr.bf16.mxu0 0
    %5372 = vmatpush2.bf16.msra.mxu0 %v4133
    %5373 = vmatprep.mubr.bf16.mxu0 %v871
    %5374 = vmatmul.mubr.bf16.gmra.mxu0 %v870
    %v5375 = vpop.f32.mrf.mxu0
    %v5376 = vadd.f32 %v5336, %v5375
    %v5377 = vpop.f32.mrf.mxu0
    %v5378 = vpop.f32.mrf.mxu0
    %v5379 = vpop.f32.mrf.mxu0
    %5380 = vdwg.mxu0
    %5381 = vmatprep.subr.bf16.mxu0 0
    %5382 = vmatpush1.bf16.msra.mxu0 %v4148
    %5383 = vmatprep.subr.bf16.mxu0 0
    %5384 = vmatpush1.bf16.msra.mxu0 %v4147
    %5385 = vmatprep.subr.bf16.mxu0 0
    %5386 = vmatpush1.bf16.msra.mxu0 %v4146
    %5387 = vmatprep.subr.bf16.mxu0 0
    %5388 = vmatpush1.bf16.msra.mxu0 %v4145
    %5389 = vmatprep.subr.bf16.mxu0 0
    %5390 = vmatpush1.bf16.msra.mxu0 %v4144
    %5391 = vmatprep.subr.bf16.mxu0 0
    %5392 = vmatpush1.bf16.msra.mxu0 %v4143
    %5393 = vmatprep.subr.bf16.mxu0 0
    %5394 = vmatpush1.bf16.msra.mxu0 %v4142
    %5395 = vmatprep.subr.bf16.mxu0 0
    %5396 = vmatpush1.bf16.msra.mxu0 %v4141
    %5397 = vmatprep.subr.bf16.mxu0 0
    %5398 = vmatpush2.bf16.msra.mxu0 %v4156
    %5399 = vmatprep.subr.bf16.mxu0 0
    %5400 = vmatpush2.bf16.msra.mxu0 %v4155
    %5401 = vmatprep.subr.bf16.mxu0 0
    %5402 = vmatpush2.bf16.msra.mxu0 %v4154
    %5403 = vmatprep.subr.bf16.mxu0 0
    %5404 = vmatpush2.bf16.msra.mxu0 %v4153
    %5405 = vmatprep.subr.bf16.mxu0 0
    %5406 = vmatpush2.bf16.msra.mxu0 %v4152
    %5407 = vmatprep.subr.bf16.mxu0 0
    %5408 = vmatpush2.bf16.msra.mxu0 %v4151
    %5409 = vmatprep.subr.bf16.mxu0 0
    %5410 = vmatpush2.bf16.msra.mxu0 %v4150
    %5411 = vmatprep.subr.bf16.mxu0 0
    %5412 = vmatpush2.bf16.msra.mxu0 %v4149
    %5413 = vmatprep.mubr.bf16.mxu0 %v873
    %5414 = vmatmul.mubr.bf16.gmra.mxu0 %v872
    %v5415 = vpop.f32.mrf.mxu0
    %v5416 = vadd.f32 %v5376, %v5415
    %v5417 = vpop.f32.mrf.mxu0
    %v5418 = vpop.f32.mrf.mxu0
    %v5419 = vpop.f32.mrf.mxu0
    %5420 = vdwg.mxu0
    %5421 = vmatprep.subr.bf16.mxu0 0
    %5422 = vmatpush1.bf16.msra.mxu0 %v4164
    %5423 = vmatprep.subr.bf16.mxu0 0
    %5424 = vmatpush1.bf16.msra.mxu0 %v4163
    %5425 = vmatprep.subr.bf16.mxu0 0
    %5426 = vmatpush1.bf16.msra.mxu0 %v4162
    %5427 = vmatprep.subr.bf16.mxu0 0
    %5428 = vmatpush1.bf16.msra.mxu0 %v4161
    %5429 = vmatprep.subr.bf16.mxu0 0
    %5430 = vmatpush1.bf16.msra.mxu0 %v4160
    %5431 = vmatprep.subr.bf16.mxu0 0
    %5432 = vmatpush1.bf16.msra.mxu0 %v4159
    %5433 = vmatprep.subr.bf16.mxu0 0
    %5434 = vmatpush1.bf16.msra.mxu0 %v4158
    %5435 = vmatprep.subr.bf16.mxu0 0
    %5436 = vmatpush1.bf16.msra.mxu0 %v4157
    %5437 = vmatprep.subr.bf16.mxu0 0
    %5438 = vmatpush2.bf16.msra.mxu0 %v4172
    %5439 = vmatprep.subr.bf16.mxu0 0
    %5440 = vmatpush2.bf16.msra.mxu0 %v4171
    %5441 = vmatprep.subr.bf16.mxu0 0
    %5442 = vmatpush2.bf16.msra.mxu0 %v4170
    %5443 = vmatprep.subr.bf16.mxu0 0
    %5444 = vmatpush2.bf16.msra.mxu0 %v4169
    %5445 = vmatprep.subr.bf16.mxu0 0
    %5446 = vmatpush2.bf16.msra.mxu0 %v4168
    %5447 = vmatprep.subr.bf16.mxu0 0
    %5448 = vmatpush2.bf16.msra.mxu0 %v4167
    %5449 = vmatprep.subr.bf16.mxu0 0
    %5450 = vmatpush2.bf16.msra.mxu0 %v4166
    %5451 = vmatprep.subr.bf16.mxu0 0
    %5452 = vmatpush2.bf16.msra.mxu0 %v4165
    %5453 = vmatprep.mubr.bf16.mxu0 %v875
    %5454 = vmatmul.mubr.bf16.gmra.mxu0 %v874
    %v5455 = vpop.f32.mrf.mxu0
    %v5456 = vadd.f32 %v5416, %v5455
    %v5457 = vpop.f32.mrf.mxu0
    %v5458 = vpop.f32.mrf.mxu0
    %v5459 = vpop.f32.mrf.mxu0
    %5460 = vdwg.mxu0
    %5461 = vmatprep.subr.bf16.mxu0 0
    %5462 = vmatpush1.bf16.msra.mxu0 %v4180
    %5463 = vmatprep.subr.bf16.mxu0 0
    %5464 = vmatpush1.bf16.msra.mxu0 %v4179
    %5465 = vmatprep.subr.bf16.mxu0 0
    %5466 = vmatpush1.bf16.msra.mxu0 %v4178
    %5467 = vmatprep.subr.bf16.mxu0 0
    %5468 = vmatpush1.bf16.msra.mxu0 %v4177
    %5469 = vmatprep.subr.bf16.mxu0 0
    %5470 = vmatpush1.bf16.msra.mxu0 %v4176
    %5471 = vmatprep.subr.bf16.mxu0 0
    %5472 = vmatpush1.bf16.msra.mxu0 %v4175
    %5473 = vmatprep.subr.bf16.mxu0 0
    %5474 = vmatpush1.bf16.msra.mxu0 %v4174
    %5475 = vmatprep.subr.bf16.mxu0 0
    %5476 = vmatpush1.bf16.msra.mxu0 %v4173
    %5477 = vmatprep.subr.bf16.mxu0 0
    %5478 = vmatpush2.bf16.msra.mxu0 %v4188
    %5479 = vmatprep.subr.bf16.mxu0 0
    %5480 = vmatpush2.bf16.msra.mxu0 %v4187
    %5481 = vmatprep.subr.bf16.mxu0 0
    %5482 = vmatpush2.bf16.msra.mxu0 %v4186
    %5483 = vmatprep.subr.bf16.mxu0 0
    %5484 = vmatpush2.bf16.msra.mxu0 %v4185
    %5485 = vmatprep.subr.bf16.mxu0 0
    %5486 = vmatpush2.bf16.msra.mxu0 %v4184
    %5487 = vmatprep.subr.bf16.mxu0 0
    %5488 = vmatpush2.bf16.msra.mxu0 %v4183
    %5489 = vmatprep.subr.bf16.mxu0 0
    %5490 = vmatpush2.bf16.msra.mxu0 %v4182
    %5491 = vmatprep.subr.bf16.mxu0 0
    %5492 = vmatpush2.bf16.msra.mxu0 %v4181
    %5493 = vmatprep.mubr.bf16.mxu0 %v877
    %5494 = vmatmul.mubr.bf16.gmra.mxu0 %v876
    %v5495 = vpop.f32.mrf.mxu0
    %v5496 = vadd.f32 %v5456, %v5495
    %v5497 = vpop.f32.mrf.mxu0
    %v5498 = vpop.f32.mrf.mxu0
    %v5499 = vpop.f32.mrf.mxu0
    %5500 = vdwg.mxu0
    %5501 = vmatprep.subr.bf16.mxu0 0
    %5502 = vmatpush1.bf16.msra.mxu0 %v4196
    %5503 = vmatprep.subr.bf16.mxu0 0
    %5504 = vmatpush1.bf16.msra.mxu0 %v4195
    %5505 = vmatprep.subr.bf16.mxu0 0
    %5506 = vmatpush1.bf16.msra.mxu0 %v4194
    %5507 = vmatprep.subr.bf16.mxu0 0
    %5508 = vmatpush1.bf16.msra.mxu0 %v4193
    %5509 = vmatprep.subr.bf16.mxu0 0
    %5510 = vmatpush1.bf16.msra.mxu0 %v4192
    %5511 = vmatprep.subr.bf16.mxu0 0
    %5512 = vmatpush1.bf16.msra.mxu0 %v4191
    %5513 = vmatprep.subr.bf16.mxu0 0
    %5514 = vmatpush1.bf16.msra.mxu0 %v4190
    %5515 = vmatprep.subr.bf16.mxu0 0
    %5516 = vmatpush1.bf16.msra.mxu0 %v4189
    %5517 = vmatprep.subr.bf16.mxu0 0
    %5518 = vmatpush2.bf16.msra.mxu0 %v4204
    %5519 = vmatprep.subr.bf16.mxu0 0
    %5520 = vmatpush2.bf16.msra.mxu0 %v4203
    %5521 = vmatprep.subr.bf16.mxu0 0
    %5522 = vmatpush2.bf16.msra.mxu0 %v4202
    %5523 = vmatprep.subr.bf16.mxu0 0
    %5524 = vmatpush2.bf16.msra.mxu0 %v4201
    %5525 = vmatprep.subr.bf16.mxu0 0
    %5526 = vmatpush2.bf16.msra.mxu0 %v4200
    %5527 = vmatprep.subr.bf16.mxu0 0
    %5528 = vmatpush2.bf16.msra.mxu0 %v4199
    %5529 = vmatprep.subr.bf16.mxu0 0
    %5530 = vmatpush2.bf16.msra.mxu0 %v4198
    %5531 = vmatprep.subr.bf16.mxu0 0
    %5532 = vmatpush2.bf16.msra.mxu0 %v4197
    %5533 = vmatprep.mubr.bf16.mxu0 %v879
    %5534 = vmatmul.mubr.bf16.gmra.mxu0 %v878
    %v5535 = vpop.f32.mrf.mxu0
    %v5536 = vadd.f32 %v5496, %v5535
    %v5537 = vpop.f32.mrf.mxu0
    %v5538 = vpop.f32.mrf.mxu0
    %v5539 = vpop.f32.mrf.mxu0
    %5540 = vdwg.mxu0
    %5541 = vmatprep.subr.bf16.mxu0 0
    %5542 = vmatpush1.bf16.msra.mxu0 %v4212
    %5543 = vmatprep.subr.bf16.mxu0 0
    %5544 = vmatpush1.bf16.msra.mxu0 %v4211
    %5545 = vmatprep.subr.bf16.mxu0 0
    %5546 = vmatpush1.bf16.msra.mxu0 %v4210
    %5547 = vmatprep.subr.bf16.mxu0 0
    %5548 = vmatpush1.bf16.msra.mxu0 %v4209
    %5549 = vmatprep.subr.bf16.mxu0 0
    %5550 = vmatpush1.bf16.msra.mxu0 %v4208
    %5551 = vmatprep.subr.bf16.mxu0 0
    %5552 = vmatpush1.bf16.msra.mxu0 %v4207
    %5553 = vmatprep.subr.bf16.mxu0 0
    %5554 = vmatpush1.bf16.msra.mxu0 %v4206
    %5555 = vmatprep.subr.bf16.mxu0 0
    %5556 = vmatpush1.bf16.msra.mxu0 %v4205
    %5557 = vmatprep.subr.bf16.mxu0 0
    %5558 = vmatpush2.bf16.msra.mxu0 %v4220
    %5559 = vmatprep.subr.bf16.mxu0 0
    %5560 = vmatpush2.bf16.msra.mxu0 %v4219
    %5561 = vmatprep.subr.bf16.mxu0 0
    %5562 = vmatpush2.bf16.msra.mxu0 %v4218
    %5563 = vmatprep.subr.bf16.mxu0 0
    %5564 = vmatpush2.bf16.msra.mxu0 %v4217
    %5565 = vmatprep.subr.bf16.mxu0 0
    %5566 = vmatpush2.bf16.msra.mxu0 %v4216
    %5567 = vmatprep.subr.bf16.mxu0 0
    %5568 = vmatpush2.bf16.msra.mxu0 %v4215
    %5569 = vmatprep.subr.bf16.mxu0 0
    %5570 = vmatpush2.bf16.msra.mxu0 %v4214
    %5571 = vmatprep.subr.bf16.mxu0 0
    %5572 = vmatpush2.bf16.msra.mxu0 %v4213
    %5573 = vmatprep.mubr.bf16.mxu0 %v881
    %5574 = vmatmul.mubr.bf16.gmra.mxu0 %v880
    %v5575 = vpop.f32.mrf.mxu0
    %v5576 = vadd.f32 %v5536, %v5575
    %v5577 = vpop.f32.mrf.mxu0
    %v5578 = vpop.f32.mrf.mxu0
    %v5579 = vpop.f32.mrf.mxu0
    %5580 = vdwg.mxu0
    %5581 = vmatprep.subr.bf16.mxu0 0
    %5582 = vmatpush1.bf16.msra.mxu0 %v4228
    %5583 = vmatprep.subr.bf16.mxu0 0
    %5584 = vmatpush1.bf16.msra.mxu0 %v4227
    %5585 = vmatprep.subr.bf16.mxu0 0
    %5586 = vmatpush1.bf16.msra.mxu0 %v4226
    %5587 = vmatprep.subr.bf16.mxu0 0
    %5588 = vmatpush1.bf16.msra.mxu0 %v4225
    %5589 = vmatprep.subr.bf16.mxu0 0
    %5590 = vmatpush1.bf16.msra.mxu0 %v4224
    %5591 = vmatprep.subr.bf16.mxu0 0
    %5592 = vmatpush1.bf16.msra.mxu0 %v4223
    %5593 = vmatprep.subr.bf16.mxu0 0
    %5594 = vmatpush1.bf16.msra.mxu0 %v4222
    %5595 = vmatprep.subr.bf16.mxu0 0
    %5596 = vmatpush1.bf16.msra.mxu0 %v4221
    %5597 = vmatprep.subr.bf16.mxu0 0
    %5598 = vmatpush2.bf16.msra.mxu0 %v4236
    %5599 = vmatprep.subr.bf16.mxu0 0
    %5600 = vmatpush2.bf16.msra.mxu0 %v4235
    %5601 = vmatprep.subr.bf16.mxu0 0
    %5602 = vmatpush2.bf16.msra.mxu0 %v4234
    %5603 = vmatprep.subr.bf16.mxu0 0
    %5604 = vmatpush2.bf16.msra.mxu0 %v4233
    %5605 = vmatprep.subr.bf16.mxu0 0
    %5606 = vmatpush2.bf16.msra.mxu0 %v4232
    %5607 = vmatprep.subr.bf16.mxu0 0
    %5608 = vmatpush2.bf16.msra.mxu0 %v4231
    %5609 = vmatprep.subr.bf16.mxu0 0
    %5610 = vmatpush2.bf16.msra.mxu0 %v4230
    %5611 = vmatprep.subr.bf16.mxu0 0
    %5612 = vmatpush2.bf16.msra.mxu0 %v4229
    %5613 = vmatprep.mubr.bf16.mxu0 %v883
    %5614 = vmatmul.mubr.bf16.gmra.mxu0 %v882
    %v5615 = vpop.f32.mrf.mxu0
    %v5616 = vadd.f32 %v5576, %v5615
    %v5617 = vpop.f32.mrf.mxu0
    %v5618 = vpop.f32.mrf.mxu0
    %v5619 = vpop.f32.mrf.mxu0
    %5620 = vdwg.mxu0
    %5621 = vmatprep.subr.bf16.mxu0 0
    %5622 = vmatpush1.bf16.msra.mxu0 %v4244
    %5623 = vmatprep.subr.bf16.mxu0 0
    %5624 = vmatpush1.bf16.msra.mxu0 %v4243
    %5625 = vmatprep.subr.bf16.mxu0 0
    %5626 = vmatpush1.bf16.msra.mxu0 %v4242
    %5627 = vmatprep.subr.bf16.mxu0 0
    %5628 = vmatpush1.bf16.msra.mxu0 %v4241
    %5629 = vmatprep.subr.bf16.mxu0 0
    %5630 = vmatpush1.bf16.msra.mxu0 %v4240
    %5631 = vmatprep.subr.bf16.mxu0 0
    %5632 = vmatpush1.bf16.msra.mxu0 %v4239
    %5633 = vmatprep.subr.bf16.mxu0 0
    %5634 = vmatpush1.bf16.msra.mxu0 %v4238
    %5635 = vmatprep.subr.bf16.mxu0 0
    %5636 = vmatpush1.bf16.msra.mxu0 %v4237
    %5637 = vmatprep.subr.bf16.mxu0 0
    %5638 = vmatpush2.bf16.msra.mxu0 %v4252
    %5639 = vmatprep.subr.bf16.mxu0 0
    %5640 = vmatpush2.bf16.msra.mxu0 %v4251
    %5641 = vmatprep.subr.bf16.mxu0 0
    %5642 = vmatpush2.bf16.msra.mxu0 %v4250
    %5643 = vmatprep.subr.bf16.mxu0 0
    %5644 = vmatpush2.bf16.msra.mxu0 %v4249
    %5645 = vmatprep.subr.bf16.mxu0 0
    %5646 = vmatpush2.bf16.msra.mxu0 %v4248
    %5647 = vmatprep.subr.bf16.mxu0 0
    %5648 = vmatpush2.bf16.msra.mxu0 %v4247
    %5649 = vmatprep.subr.bf16.mxu0 0
    %5650 = vmatpush2.bf16.msra.mxu0 %v4246
    %5651 = vmatprep.subr.bf16.mxu0 0
    %5652 = vmatpush2.bf16.msra.mxu0 %v4245
    %5653 = vmatprep.mubr.bf16.mxu0 %v885
    %5654 = vmatmul.mubr.bf16.gmra.mxu0 %v884
    %v5655 = vpop.f32.mrf.mxu0
    %v5656 = vadd.f32 %v5616, %v5655
    %v5657 = vpop.f32.mrf.mxu0
    %v5658 = vpop.f32.mrf.mxu0
    %v5659 = vpop.f32.mrf.mxu0
    %5660 = vdwg.mxu0
    %5661 = vmatprep.subr.bf16.mxu0 0
    %5662 = vmatpush1.bf16.msra.mxu0 %v4260
    %5663 = vmatprep.subr.bf16.mxu0 0
    %5664 = vmatpush1.bf16.msra.mxu0 %v4259
    %5665 = vmatprep.subr.bf16.mxu0 0
    %5666 = vmatpush1.bf16.msra.mxu0 %v4258
    %5667 = vmatprep.subr.bf16.mxu0 0
    %5668 = vmatpush1.bf16.msra.mxu0 %v4257
    %5669 = vmatprep.subr.bf16.mxu0 0
    %5670 = vmatpush1.bf16.msra.mxu0 %v4256
    %5671 = vmatprep.subr.bf16.mxu0 0
    %5672 = vmatpush1.bf16.msra.mxu0 %v4255
    %5673 = vmatprep.subr.bf16.mxu0 0
    %5674 = vmatpush1.bf16.msra.mxu0 %v4254
    %5675 = vmatprep.subr.bf16.mxu0 0
    %5676 = vmatpush1.bf16.msra.mxu0 %v4253
    %5677 = vmatprep.subr.bf16.mxu0 0
    %5678 = vmatpush2.bf16.msra.mxu0 %v4268
    %5679 = vmatprep.subr.bf16.mxu0 0
    %5680 = vmatpush2.bf16.msra.mxu0 %v4267
    %5681 = vmatprep.subr.bf16.mxu0 0
    %5682 = vmatpush2.bf16.msra.mxu0 %v4266
    %5683 = vmatprep.subr.bf16.mxu0 0
    %5684 = vmatpush2.bf16.msra.mxu0 %v4265
    %5685 = vmatprep.subr.bf16.mxu0 0
    %5686 = vmatpush2.bf16.msra.mxu0 %v4264
    %5687 = vmatprep.subr.bf16.mxu0 0
    %5688 = vmatpush2.bf16.msra.mxu0 %v4263
    %5689 = vmatprep.subr.bf16.mxu0 0
    %5690 = vmatpush2.bf16.msra.mxu0 %v4262
    %5691 = vmatprep.subr.bf16.mxu0 0
    %5692 = vmatpush2.bf16.msra.mxu0 %v4261
    %5693 = vmatprep.mubr.bf16.mxu0 %v887
    %5694 = vmatmul.mubr.bf16.gmra.mxu0 %v886
    %v5695 = vpop.f32.mrf.mxu0
    %v5696 = vadd.f32 %v5656, %v5695
    %v5697 = vpop.f32.mrf.mxu0
    %v5698 = vpop.f32.mrf.mxu0
    %v5699 = vpop.f32.mrf.mxu0
    %5700 = vdwg.mxu0
    %5701 = vmatprep.subr.bf16.mxu0 0
    %5702 = vmatpush1.bf16.msra.mxu0 %v4276
    %5703 = vmatprep.subr.bf16.mxu0 0
    %5704 = vmatpush1.bf16.msra.mxu0 %v4275
    %5705 = vmatprep.subr.bf16.mxu0 0
    %5706 = vmatpush1.bf16.msra.mxu0 %v4274
    %5707 = vmatprep.subr.bf16.mxu0 0
    %5708 = vmatpush1.bf16.msra.mxu0 %v4273
    %5709 = vmatprep.subr.bf16.mxu0 0
    %5710 = vmatpush1.bf16.msra.mxu0 %v4272
    %5711 = vmatprep.subr.bf16.mxu0 0
    %5712 = vmatpush1.bf16.msra.mxu0 %v4271
    %5713 = vmatprep.subr.bf16.mxu0 0
    %5714 = vmatpush1.bf16.msra.mxu0 %v4270
    %5715 = vmatprep.subr.bf16.mxu0 0
    %5716 = vmatpush1.bf16.msra.mxu0 %v4269
    %5717 = vmatprep.subr.bf16.mxu0 0
    %5718 = vmatpush2.bf16.msra.mxu0 %v4284
    %5719 = vmatprep.subr.bf16.mxu0 0
    %5720 = vmatpush2.bf16.msra.mxu0 %v4283
    %5721 = vmatprep.subr.bf16.mxu0 0
    %5722 = vmatpush2.bf16.msra.mxu0 %v4282
    %5723 = vmatprep.subr.bf16.mxu0 0
    %5724 = vmatpush2.bf16.msra.mxu0 %v4281
    %5725 = vmatprep.subr.bf16.mxu0 0
    %5726 = vmatpush2.bf16.msra.mxu0 %v4280
    %5727 = vmatprep.subr.bf16.mxu0 0
    %5728 = vmatpush2.bf16.msra.mxu0 %v4279
    %5729 = vmatprep.subr.bf16.mxu0 0
    %5730 = vmatpush2.bf16.msra.mxu0 %v4278
    %5731 = vmatprep.subr.bf16.mxu0 0
    %5732 = vmatpush2.bf16.msra.mxu0 %v4277
    %5733 = vmatprep.mubr.bf16.mxu0 %v889
    %5734 = vmatmul.mubr.bf16.gmra.mxu0 %v888
    %v5735 = vpop.f32.mrf.mxu0
    %v5736 = vadd.f32 %v5696, %v5735
    %v5737 = vpop.f32.mrf.mxu0
    %v5738 = vpop.f32.mrf.mxu0
    %v5739 = vpop.f32.mrf.mxu0
    %5740 = vdwg.mxu0
    %5741 = vmatprep.subr.bf16.mxu0 0
    %5742 = vmatpush1.bf16.msra.mxu0 %v4292
    %5743 = vmatprep.subr.bf16.mxu0 0
    %5744 = vmatpush1.bf16.msra.mxu0 %v4291
    %5745 = vmatprep.subr.bf16.mxu0 0
    %5746 = vmatpush1.bf16.msra.mxu0 %v4290
    %5747 = vmatprep.subr.bf16.mxu0 0
    %5748 = vmatpush1.bf16.msra.mxu0 %v4289
    %5749 = vmatprep.subr.bf16.mxu0 0
    %5750 = vmatpush1.bf16.msra.mxu0 %v4288
    %5751 = vmatprep.subr.bf16.mxu0 0
    %5752 = vmatpush1.bf16.msra.mxu0 %v4287
    %5753 = vmatprep.subr.bf16.mxu0 0
    %5754 = vmatpush1.bf16.msra.mxu0 %v4286
    %5755 = vmatprep.subr.bf16.mxu0 0
    %5756 = vmatpush1.bf16.msra.mxu0 %v4285
    %5757 = vmatprep.subr.bf16.mxu0 0
    %5758 = vmatpush2.bf16.msra.mxu0 %v4300
    %5759 = vmatprep.subr.bf16.mxu0 0
    %5760 = vmatpush2.bf16.msra.mxu0 %v4299
    %5761 = vmatprep.subr.bf16.mxu0 0
    %5762 = vmatpush2.bf16.msra.mxu0 %v4298
    %5763 = vmatprep.subr.bf16.mxu0 0
    %5764 = vmatpush2.bf16.msra.mxu0 %v4297
    %5765 = vmatprep.subr.bf16.mxu0 0
    %5766 = vmatpush2.bf16.msra.mxu0 %v4296
    %5767 = vmatprep.subr.bf16.mxu0 0
    %5768 = vmatpush2.bf16.msra.mxu0 %v4295
    %5769 = vmatprep.subr.bf16.mxu0 0
    %5770 = vmatpush2.bf16.msra.mxu0 %v4294
    %5771 = vmatprep.subr.bf16.mxu0 0
    %5772 = vmatpush2.bf16.msra.mxu0 %v4293
    %5773 = vmatprep.mubr.bf16.mxu0 %v891
    %5774 = vmatmul.mubr.bf16.gmra.mxu0 %v890
    %v5775 = vpop.f32.mrf.mxu0
    %v5776 = vadd.f32 %v5736, %v5775
    %v5777 = vpop.f32.mrf.mxu0
    %v5778 = vpop.f32.mrf.mxu0
    %v5779 = vpop.f32.mrf.mxu0
    %5780 = vdwg.mxu0
    %5781 = vmatprep.subr.bf16.mxu0 0
    %5782 = vmatpush1.bf16.msra.mxu0 %v4308
    %5783 = vmatprep.subr.bf16.mxu0 0
    %5784 = vmatpush1.bf16.msra.mxu0 %v4307
    %5785 = vmatprep.subr.bf16.mxu0 0
    %5786 = vmatpush1.bf16.msra.mxu0 %v4306
    %5787 = vmatprep.subr.bf16.mxu0 0
    %5788 = vmatpush1.bf16.msra.mxu0 %v4305
    %5789 = vmatprep.subr.bf16.mxu0 0
    %5790 = vmatpush1.bf16.msra.mxu0 %v4304
    %5791 = vmatprep.subr.bf16.mxu0 0
    %5792 = vmatpush1.bf16.msra.mxu0 %v4303
    %5793 = vmatprep.subr.bf16.mxu0 0
    %5794 = vmatpush1.bf16.msra.mxu0 %v4302
    %5795 = vmatprep.subr.bf16.mxu0 0
    %5796 = vmatpush1.bf16.msra.mxu0 %v4301
    %5797 = vmatprep.subr.bf16.mxu0 0
    %5798 = vmatpush2.bf16.msra.mxu0 %v4316
    %5799 = vmatprep.subr.bf16.mxu0 0
    %5800 = vmatpush2.bf16.msra.mxu0 %v4315
    %5801 = vmatprep.subr.bf16.mxu0 0
    %5802 = vmatpush2.bf16.msra.mxu0 %v4314
    %5803 = vmatprep.subr.bf16.mxu0 0
    %5804 = vmatpush2.bf16.msra.mxu0 %v4313
    %5805 = vmatprep.subr.bf16.mxu0 0
    %5806 = vmatpush2.bf16.msra.mxu0 %v4312
    %5807 = vmatprep.subr.bf16.mxu0 0
    %5808 = vmatpush2.bf16.msra.mxu0 %v4311
    %5809 = vmatprep.subr.bf16.mxu0 0
    %5810 = vmatpush2.bf16.msra.mxu0 %v4310
    %5811 = vmatprep.subr.bf16.mxu0 0
    %5812 = vmatpush2.bf16.msra.mxu0 %v4309
    %5813 = vmatprep.mubr.bf16.mxu0 %v893
    %5814 = vmatmul.mubr.bf16.gmra.mxu0 %v892
    %v5815 = vpop.f32.mrf.mxu0
    %v5816 = vadd.f32 %v5776, %v5815
    %v5817 = vpop.f32.mrf.mxu0
    %v5818 = vpop.f32.mrf.mxu0
    %v5819 = vpop.f32.mrf.mxu0
    %5820 = vdwg.mxu0
    %5821 = vmatprep.subr.bf16.mxu0 0
    %5822 = vmatpush1.bf16.msra.mxu0 %v4324
    %5823 = vmatprep.subr.bf16.mxu0 0
    %5824 = vmatpush1.bf16.msra.mxu0 %v4323
    %5825 = vmatprep.subr.bf16.mxu0 0
    %5826 = vmatpush1.bf16.msra.mxu0 %v4322
    %5827 = vmatprep.subr.bf16.mxu0 0
    %5828 = vmatpush1.bf16.msra.mxu0 %v4321
    %5829 = vmatprep.subr.bf16.mxu0 0
    %5830 = vmatpush1.bf16.msra.mxu0 %v4320
    %5831 = vmatprep.subr.bf16.mxu0 0
    %5832 = vmatpush1.bf16.msra.mxu0 %v4319
    %5833 = vmatprep.subr.bf16.mxu0 0
    %5834 = vmatpush1.bf16.msra.mxu0 %v4318
    %5835 = vmatprep.subr.bf16.mxu0 0
    %5836 = vmatpush1.bf16.msra.mxu0 %v4317
    %5837 = vmatprep.subr.bf16.mxu0 0
    %5838 = vmatpush2.bf16.msra.mxu0 %v4332
    %5839 = vmatprep.subr.bf16.mxu0 0
    %5840 = vmatpush2.bf16.msra.mxu0 %v4331
    %5841 = vmatprep.subr.bf16.mxu0 0
    %5842 = vmatpush2.bf16.msra.mxu0 %v4330
    %5843 = vmatprep.subr.bf16.mxu0 0
    %5844 = vmatpush2.bf16.msra.mxu0 %v4329
    %5845 = vmatprep.subr.bf16.mxu0 0
    %5846 = vmatpush2.bf16.msra.mxu0 %v4328
    %5847 = vmatprep.subr.bf16.mxu0 0
    %5848 = vmatpush2.bf16.msra.mxu0 %v4327
    %5849 = vmatprep.subr.bf16.mxu0 0
    %5850 = vmatpush2.bf16.msra.mxu0 %v4326
    %5851 = vmatprep.subr.bf16.mxu0 0
    %5852 = vmatpush2.bf16.msra.mxu0 %v4325
    %5853 = vmatprep.mubr.bf16.mxu0 %v895
    %5854 = vmatmul.mubr.bf16.gmra.mxu0 %v894
    %v5855 = vpop.f32.mrf.mxu0
    %v5856 = vadd.f32 %v5816, %v5855
    %v5857 = vpop.f32.mrf.mxu0
    %v5858 = vpop.f32.mrf.mxu0
    %v5859 = vpop.f32.mrf.mxu0
    %5860 = vdwg.mxu0
    %5861 = vmatprep.subr.bf16.mxu0 0
    %5862 = vmatpush1.bf16.msra.mxu0 %v4340
    %5863 = vmatprep.subr.bf16.mxu0 0
    %5864 = vmatpush1.bf16.msra.mxu0 %v4339
    %5865 = vmatprep.subr.bf16.mxu0 0
    %5866 = vmatpush1.bf16.msra.mxu0 %v4338
    %5867 = vmatprep.subr.bf16.mxu0 0
    %5868 = vmatpush1.bf16.msra.mxu0 %v4337
    %5869 = vmatprep.subr.bf16.mxu0 0
    %5870 = vmatpush1.bf16.msra.mxu0 %v4336
    %5871 = vmatprep.subr.bf16.mxu0 0
    %5872 = vmatpush1.bf16.msra.mxu0 %v4335
    %5873 = vmatprep.subr.bf16.mxu0 0
    %5874 = vmatpush1.bf16.msra.mxu0 %v4334
    %5875 = vmatprep.subr.bf16.mxu0 0
    %5876 = vmatpush1.bf16.msra.mxu0 %v4333
    %5877 = vmatprep.subr.bf16.mxu0 0
    %5878 = vmatpush2.bf16.msra.mxu0 %v4348
    %5879 = vmatprep.subr.bf16.mxu0 0
    %5880 = vmatpush2.bf16.msra.mxu0 %v4347
    %5881 = vmatprep.subr.bf16.mxu0 0
    %5882 = vmatpush2.bf16.msra.mxu0 %v4346
    %5883 = vmatprep.subr.bf16.mxu0 0
    %5884 = vmatpush2.bf16.msra.mxu0 %v4345
    %5885 = vmatprep.subr.bf16.mxu0 0
    %5886 = vmatpush2.bf16.msra.mxu0 %v4344
    %5887 = vmatprep.subr.bf16.mxu0 0
    %5888 = vmatpush2.bf16.msra.mxu0 %v4343
    %5889 = vmatprep.subr.bf16.mxu0 0
    %5890 = vmatpush2.bf16.msra.mxu0 %v4342
    %5891 = vmatprep.subr.bf16.mxu0 0
    %5892 = vmatpush2.bf16.msra.mxu0 %v4341
    %5893 = vmatprep.mubr.bf16.mxu0 %v897
    %5894 = vmatmul.mubr.bf16.gmra.mxu0 %v896
    %v5895 = vpop.f32.mrf.mxu0
    %v5896 = vadd.f32 %v5856, %v5895
    %v5897 = vpop.f32.mrf.mxu0
    %v5898 = vpop.f32.mrf.mxu0
    %v5899 = vpop.f32.mrf.mxu0
    %5900 = vdwg.mxu0
    %5901 = vmatprep.subr.bf16.mxu0 0
    %5902 = vmatpush1.bf16.msra.mxu0 %v4356
    %5903 = vmatprep.subr.bf16.mxu0 0
    %5904 = vmatpush1.bf16.msra.mxu0 %v4355
    %5905 = vmatprep.subr.bf16.mxu0 0
    %5906 = vmatpush1.bf16.msra.mxu0 %v4354
    %5907 = vmatprep.subr.bf16.mxu0 0
    %5908 = vmatpush1.bf16.msra.mxu0 %v4353
    %5909 = vmatprep.subr.bf16.mxu0 0
    %5910 = vmatpush1.bf16.msra.mxu0 %v4352
    %5911 = vmatprep.subr.bf16.mxu0 0
    %5912 = vmatpush1.bf16.msra.mxu0 %v4351
    %5913 = vmatprep.subr.bf16.mxu0 0
    %5914 = vmatpush1.bf16.msra.mxu0 %v4350
    %5915 = vmatprep.subr.bf16.mxu0 0
    %5916 = vmatpush1.bf16.msra.mxu0 %v4349
    %5917 = vmatprep.subr.bf16.mxu0 0
    %5918 = vmatpush2.bf16.msra.mxu0 %v4364
    %5919 = vmatprep.subr.bf16.mxu0 0
    %5920 = vmatpush2.bf16.msra.mxu0 %v4363
    %5921 = vmatprep.subr.bf16.mxu0 0
    %5922 = vmatpush2.bf16.msra.mxu0 %v4362
    %5923 = vmatprep.subr.bf16.mxu0 0
    %5924 = vmatpush2.bf16.msra.mxu0 %v4361
    %5925 = vmatprep.subr.bf16.mxu0 0
    %5926 = vmatpush2.bf16.msra.mxu0 %v4360
    %5927 = vmatprep.subr.bf16.mxu0 0
    %5928 = vmatpush2.bf16.msra.mxu0 %v4359
    %5929 = vmatprep.subr.bf16.mxu0 0
    %5930 = vmatpush2.bf16.msra.mxu0 %v4358
    %5931 = vmatprep.subr.bf16.mxu0 0
    %5932 = vmatpush2.bf16.msra.mxu0 %v4357
    %5933 = vmatprep.mubr.bf16.mxu0 %v899
    %5934 = vmatmul.mubr.bf16.gmra.mxu0 %v898
    %v5935 = vpop.f32.mrf.mxu0
    %v5936 = vadd.f32 %v5896, %v5935
    %v5937 = vpop.f32.mrf.mxu0
    %v5938 = vpop.f32.mrf.mxu0
    %v5939 = vpop.f32.mrf.mxu0
    %5940 = vdwg.mxu0
    %5941 = vmatprep.subr.bf16.mxu0 0
    %5942 = vmatpush1.bf16.msra.mxu0 %v4372
    %5943 = vmatprep.subr.bf16.mxu0 0
    %5944 = vmatpush1.bf16.msra.mxu0 %v4371
    %5945 = vmatprep.subr.bf16.mxu0 0
    %5946 = vmatpush1.bf16.msra.mxu0 %v4370
    %5947 = vmatprep.subr.bf16.mxu0 0
    %5948 = vmatpush1.bf16.msra.mxu0 %v4369
    %5949 = vmatprep.subr.bf16.mxu0 0
    %5950 = vmatpush1.bf16.msra.mxu0 %v4368
    %5951 = vmatprep.subr.bf16.mxu0 0
    %5952 = vmatpush1.bf16.msra.mxu0 %v4367
    %5953 = vmatprep.subr.bf16.mxu0 0
    %5954 = vmatpush1.bf16.msra.mxu0 %v4366
    %5955 = vmatprep.subr.bf16.mxu0 0
    %5956 = vmatpush1.bf16.msra.mxu0 %v4365
    %5957 = vmatprep.subr.bf16.mxu0 0
    %5958 = vmatpush2.bf16.msra.mxu0 %v4380
    %5959 = vmatprep.subr.bf16.mxu0 0
    %5960 = vmatpush2.bf16.msra.mxu0 %v4379
    %5961 = vmatprep.subr.bf16.mxu0 0
    %5962 = vmatpush2.bf16.msra.mxu0 %v4378
    %5963 = vmatprep.subr.bf16.mxu0 0
    %5964 = vmatpush2.bf16.msra.mxu0 %v4377
    %5965 = vmatprep.subr.bf16.mxu0 0
    %5966 = vmatpush2.bf16.msra.mxu0 %v4376
    %5967 = vmatprep.subr.bf16.mxu0 0
    %5968 = vmatpush2.bf16.msra.mxu0 %v4375
    %5969 = vmatprep.subr.bf16.mxu0 0
    %5970 = vmatpush2.bf16.msra.mxu0 %v4374
    %5971 = vmatprep.subr.bf16.mxu0 0
    %5972 = vmatpush2.bf16.msra.mxu0 %v4373
    %5973 = vmatprep.mubr.bf16.mxu0 %v901
    %5974 = vmatmul.mubr.bf16.gmra.mxu0 %v900
    %v5975 = vpop.f32.mrf.mxu0
    %v5976 = vadd.f32 %v5936, %v5975
    %v5977 = vpop.f32.mrf.mxu0
    %v5978 = vpop.f32.mrf.mxu0
    %v5979 = vpop.f32.mrf.mxu0
    %5980 = vdwg.mxu0
    %5981 = vmatprep.subr.bf16.mxu0 0
    %5982 = vmatpush1.bf16.msra.mxu0 %v4388
    %5983 = vmatprep.subr.bf16.mxu0 0
    %5984 = vmatpush1.bf16.msra.mxu0 %v4387
    %5985 = vmatprep.subr.bf16.mxu0 0
    %5986 = vmatpush1.bf16.msra.mxu0 %v4386
    %5987 = vmatprep.subr.bf16.mxu0 0
    %5988 = vmatpush1.bf16.msra.mxu0 %v4385
    %5989 = vmatprep.subr.bf16.mxu0 0
    %5990 = vmatpush1.bf16.msra.mxu0 %v4384
    %5991 = vmatprep.subr.bf16.mxu0 0
    %5992 = vmatpush1.bf16.msra.mxu0 %v4383
    %5993 = vmatprep.subr.bf16.mxu0 0
    %5994 = vmatpush1.bf16.msra.mxu0 %v4382
    %5995 = vmatprep.subr.bf16.mxu0 0
    %5996 = vmatpush1.bf16.msra.mxu0 %v4381
    %5997 = vmatprep.subr.bf16.mxu0 0
    %5998 = vmatpush2.bf16.msra.mxu0 %v4396
    %5999 = vmatprep.subr.bf16.mxu0 0
    %6000 = vmatpush2.bf16.msra.mxu0 %v4395
    %6001 = vmatprep.subr.bf16.mxu0 0
    %6002 = vmatpush2.bf16.msra.mxu0 %v4394
    %6003 = vmatprep.subr.bf16.mxu0 0
    %6004 = vmatpush2.bf16.msra.mxu0 %v4393
    %6005 = vmatprep.subr.bf16.mxu0 0
    %6006 = vmatpush2.bf16.msra.mxu0 %v4392
    %6007 = vmatprep.subr.bf16.mxu0 0
    %6008 = vmatpush2.bf16.msra.mxu0 %v4391
    %6009 = vmatprep.subr.bf16.mxu0 0
    %6010 = vmatpush2.bf16.msra.mxu0 %v4390
    %6011 = vmatprep.subr.bf16.mxu0 0
    %6012 = vmatpush2.bf16.msra.mxu0 %v4389
    %6013 = vmatprep.mubr.bf16.mxu0 %v903
    %6014 = vmatmul.mubr.bf16.gmra.mxu0 %v902
    %v6015 = vpop.f32.mrf.mxu0
    %v6016 = vadd.f32 %v5976, %v6015
    %v6017 = vpop.f32.mrf.mxu0
    %v6018 = vpop.f32.mrf.mxu0
    %v6019 = vpop.f32.mrf.mxu0
    %6020 = vdwg.mxu0
    %6021 = vmatprep.subr.bf16.mxu0 0
    %6022 = vmatpush1.bf16.msra.mxu0 %v4404
    %6023 = vmatprep.subr.bf16.mxu0 0
    %6024 = vmatpush1.bf16.msra.mxu0 %v4403
    %6025 = vmatprep.subr.bf16.mxu0 0
    %6026 = vmatpush1.bf16.msra.mxu0 %v4402
    %6027 = vmatprep.subr.bf16.mxu0 0
    %6028 = vmatpush1.bf16.msra.mxu0 %v4401
    %6029 = vmatprep.subr.bf16.mxu0 0
    %6030 = vmatpush1.bf16.msra.mxu0 %v4400
    %6031 = vmatprep.subr.bf16.mxu0 0
    %6032 = vmatpush1.bf16.msra.mxu0 %v4399
    %6033 = vmatprep.subr.bf16.mxu0 0
    %6034 = vmatpush1.bf16.msra.mxu0 %v4398
    %6035 = vmatprep.subr.bf16.mxu0 0
    %6036 = vmatpush1.bf16.msra.mxu0 %v4397
    %6037 = vmatprep.subr.bf16.mxu0 0
    %6038 = vmatpush2.bf16.msra.mxu0 %v4412
    %6039 = vmatprep.subr.bf16.mxu0 0
    %6040 = vmatpush2.bf16.msra.mxu0 %v4411
    %6041 = vmatprep.subr.bf16.mxu0 0
    %6042 = vmatpush2.bf16.msra.mxu0 %v4410
    %6043 = vmatprep.subr.bf16.mxu0 0
    %6044 = vmatpush2.bf16.msra.mxu0 %v4409
    %6045 = vmatprep.subr.bf16.mxu0 0
    %6046 = vmatpush2.bf16.msra.mxu0 %v4408
    %6047 = vmatprep.subr.bf16.mxu0 0
    %6048 = vmatpush2.bf16.msra.mxu0 %v4407
    %6049 = vmatprep.subr.bf16.mxu0 0
    %6050 = vmatpush2.bf16.msra.mxu0 %v4406
    %6051 = vmatprep.subr.bf16.mxu0 0
    %6052 = vmatpush2.bf16.msra.mxu0 %v4405
    %6053 = vmatprep.mubr.bf16.mxu0 %v905
    %6054 = vmatmul.mubr.bf16.gmra.mxu0 %v904
    %v6055 = vpop.f32.mrf.mxu0
    %v6056 = vadd.f32 %v6016, %v6055
    %v6057 = vpop.f32.mrf.mxu0
    %v6058 = vpop.f32.mrf.mxu0
    %v6059 = vpop.f32.mrf.mxu0
    %6060 = vdwg.mxu0
    %6061 = vmatprep.subr.bf16.mxu0 0
    %6062 = vmatpush1.bf16.msra.mxu0 %v4420
    %6063 = vmatprep.subr.bf16.mxu0 0
    %6064 = vmatpush1.bf16.msra.mxu0 %v4419
    %6065 = vmatprep.subr.bf16.mxu0 0
    %6066 = vmatpush1.bf16.msra.mxu0 %v4418
    %6067 = vmatprep.subr.bf16.mxu0 0
    %6068 = vmatpush1.bf16.msra.mxu0 %v4417
    %6069 = vmatprep.subr.bf16.mxu0 0
    %6070 = vmatpush1.bf16.msra.mxu0 %v4416
    %6071 = vmatprep.subr.bf16.mxu0 0
    %6072 = vmatpush1.bf16.msra.mxu0 %v4415
    %6073 = vmatprep.subr.bf16.mxu0 0
    %6074 = vmatpush1.bf16.msra.mxu0 %v4414
    %6075 = vmatprep.subr.bf16.mxu0 0
    %6076 = vmatpush1.bf16.msra.mxu0 %v4413
    %6077 = vmatprep.subr.bf16.mxu0 0
    %6078 = vmatpush2.bf16.msra.mxu0 %v4428
    %6079 = vmatprep.subr.bf16.mxu0 0
    %6080 = vmatpush2.bf16.msra.mxu0 %v4427
    %6081 = vmatprep.subr.bf16.mxu0 0
    %6082 = vmatpush2.bf16.msra.mxu0 %v4426
    %6083 = vmatprep.subr.bf16.mxu0 0
    %6084 = vmatpush2.bf16.msra.mxu0 %v4425
    %6085 = vmatprep.subr.bf16.mxu0 0
    %6086 = vmatpush2.bf16.msra.mxu0 %v4424
    %6087 = vmatprep.subr.bf16.mxu0 0
    %6088 = vmatpush2.bf16.msra.mxu0 %v4423
    %6089 = vmatprep.subr.bf16.mxu0 0
    %6090 = vmatpush2.bf16.msra.mxu0 %v4422
    %6091 = vmatprep.subr.bf16.mxu0 0
    %6092 = vmatpush2.bf16.msra.mxu0 %v4421
    %6093 = vmatprep.mubr.bf16.mxu0 %v907
    %6094 = vmatmul.mubr.bf16.gmra.mxu0 %v906
    %v6095 = vpop.f32.mrf.mxu0
    %v6096 = vadd.f32 %v6056, %v6095
    %v6097 = vpop.f32.mrf.mxu0
    %v6098 = vpop.f32.mrf.mxu0
    %v6099 = vpop.f32.mrf.mxu0
    %6100 = vdwg.mxu0
    %6101 = vmatprep.subr.bf16.mxu0 0
    %6102 = vmatpush1.bf16.msra.mxu0 %v4436
    %6103 = vmatprep.subr.bf16.mxu0 0
    %6104 = vmatpush1.bf16.msra.mxu0 %v4435
    %6105 = vmatprep.subr.bf16.mxu0 0
    %6106 = vmatpush1.bf16.msra.mxu0 %v4434
    %6107 = vmatprep.subr.bf16.mxu0 0
    %6108 = vmatpush1.bf16.msra.mxu0 %v4433
    %6109 = vmatprep.subr.bf16.mxu0 0
    %6110 = vmatpush1.bf16.msra.mxu0 %v4432
    %6111 = vmatprep.subr.bf16.mxu0 0
    %6112 = vmatpush1.bf16.msra.mxu0 %v4431
    %6113 = vmatprep.subr.bf16.mxu0 0
    %6114 = vmatpush1.bf16.msra.mxu0 %v4430
    %6115 = vmatprep.subr.bf16.mxu0 0
    %6116 = vmatpush1.bf16.msra.mxu0 %v4429
    %6117 = vmatprep.subr.bf16.mxu0 0
    %6118 = vmatpush2.bf16.msra.mxu0 %v4444
    %6119 = vmatprep.subr.bf16.mxu0 0
    %6120 = vmatpush2.bf16.msra.mxu0 %v4443
    %6121 = vmatprep.subr.bf16.mxu0 0
    %6122 = vmatpush2.bf16.msra.mxu0 %v4442
    %6123 = vmatprep.subr.bf16.mxu0 0
    %6124 = vmatpush2.bf16.msra.mxu0 %v4441
    %6125 = vmatprep.subr.bf16.mxu0 0
    %6126 = vmatpush2.bf16.msra.mxu0 %v4440
    %6127 = vmatprep.subr.bf16.mxu0 0
    %6128 = vmatpush2.bf16.msra.mxu0 %v4439
    %6129 = vmatprep.subr.bf16.mxu0 0
    %6130 = vmatpush2.bf16.msra.mxu0 %v4438
    %6131 = vmatprep.subr.bf16.mxu0 0
    %6132 = vmatpush2.bf16.msra.mxu0 %v4437
    %6133 = vmatprep.mubr.bf16.mxu0 %v909
    %6134 = vmatmul.mubr.bf16.gmra.mxu0 %v908
    %v6135 = vpop.f32.mrf.mxu0
    %v6136 = vadd.f32 %v6096, %v6135
    %v6137 = vpop.f32.mrf.mxu0
    %v6138 = vpop.f32.mrf.mxu0
    %v6139 = vpop.f32.mrf.mxu0
    %6140 = vdwg.mxu0
    %6141 = vmatprep.subr.bf16.mxu0 0
    %6142 = vmatpush1.bf16.msra.mxu0 %v4452
    %6143 = vmatprep.subr.bf16.mxu0 0
    %6144 = vmatpush1.bf16.msra.mxu0 %v4451
    %6145 = vmatprep.subr.bf16.mxu0 0
    %6146 = vmatpush1.bf16.msra.mxu0 %v4450
    %6147 = vmatprep.subr.bf16.mxu0 0
    %6148 = vmatpush1.bf16.msra.mxu0 %v4449
    %6149 = vmatprep.subr.bf16.mxu0 0
    %6150 = vmatpush1.bf16.msra.mxu0 %v4448
    %6151 = vmatprep.subr.bf16.mxu0 0
    %6152 = vmatpush1.bf16.msra.mxu0 %v4447
    %6153 = vmatprep.subr.bf16.mxu0 0
    %6154 = vmatpush1.bf16.msra.mxu0 %v4446
    %6155 = vmatprep.subr.bf16.mxu0 0
    %6156 = vmatpush1.bf16.msra.mxu0 %v4445
    %6157 = vmatprep.subr.bf16.mxu0 0
    %6158 = vmatpush2.bf16.msra.mxu0 %v4460
    %6159 = vmatprep.subr.bf16.mxu0 0
    %6160 = vmatpush2.bf16.msra.mxu0 %v4459
    %6161 = vmatprep.subr.bf16.mxu0 0
    %6162 = vmatpush2.bf16.msra.mxu0 %v4458
    %6163 = vmatprep.subr.bf16.mxu0 0
    %6164 = vmatpush2.bf16.msra.mxu0 %v4457
    %6165 = vmatprep.subr.bf16.mxu0 0
    %6166 = vmatpush2.bf16.msra.mxu0 %v4456
    %6167 = vmatprep.subr.bf16.mxu0 0
    %6168 = vmatpush2.bf16.msra.mxu0 %v4455
    %6169 = vmatprep.subr.bf16.mxu0 0
    %6170 = vmatpush2.bf16.msra.mxu0 %v4454
    %6171 = vmatprep.subr.bf16.mxu0 0
    %6172 = vmatpush2.bf16.msra.mxu0 %v4453
    %6173 = vmatprep.mubr.bf16.mxu0 %v911
    %6174 = vmatmul.mubr.bf16.gmra.mxu0 %v910
    %v6175 = vpop.f32.mrf.mxu0
    %v6176 = vadd.f32 %v6136, %v6175
    %v6177 = vpop.f32.mrf.mxu0
    %v6178 = vpop.f32.mrf.mxu0
    %v6179 = vpop.f32.mrf.mxu0
    %6180 = vdwg.mxu0
    %6181 = vmatprep.subr.bf16.mxu0 0
    %6182 = vmatpush1.bf16.msra.mxu0 %v4468
    %6183 = vmatprep.subr.bf16.mxu0 0
    %6184 = vmatpush1.bf16.msra.mxu0 %v4467
    %6185 = vmatprep.subr.bf16.mxu0 0
    %6186 = vmatpush1.bf16.msra.mxu0 %v4466
    %6187 = vmatprep.subr.bf16.mxu0 0
    %6188 = vmatpush1.bf16.msra.mxu0 %v4465
    %6189 = vmatprep.subr.bf16.mxu0 0
    %6190 = vmatpush1.bf16.msra.mxu0 %v4464
    %6191 = vmatprep.subr.bf16.mxu0 0
    %6192 = vmatpush1.bf16.msra.mxu0 %v4463
    %6193 = vmatprep.subr.bf16.mxu0 0
    %6194 = vmatpush1.bf16.msra.mxu0 %v4462
    %6195 = vmatprep.subr.bf16.mxu0 0
    %6196 = vmatpush1.bf16.msra.mxu0 %v4461
    %6197 = vmatprep.subr.bf16.mxu0 0
    %6198 = vmatpush2.bf16.msra.mxu0 %v4476
    %6199 = vmatprep.subr.bf16.mxu0 0
    %6200 = vmatpush2.bf16.msra.mxu0 %v4475
    %6201 = vmatprep.subr.bf16.mxu0 0
    %6202 = vmatpush2.bf16.msra.mxu0 %v4474
    %6203 = vmatprep.subr.bf16.mxu0 0
    %6204 = vmatpush2.bf16.msra.mxu0 %v4473
    %6205 = vmatprep.subr.bf16.mxu0 0
    %6206 = vmatpush2.bf16.msra.mxu0 %v4472
    %6207 = vmatprep.subr.bf16.mxu0 0
    %6208 = vmatpush2.bf16.msra.mxu0 %v4471
    %6209 = vmatprep.subr.bf16.mxu0 0
    %6210 = vmatpush2.bf16.msra.mxu0 %v4470
    %6211 = vmatprep.subr.bf16.mxu0 0
    %6212 = vmatpush2.bf16.msra.mxu0 %v4469
    %6213 = vmatprep.mubr.bf16.mxu0 %v913
    %6214 = vmatmul.mubr.bf16.gmra.mxu0 %v912
    %v6215 = vpop.f32.mrf.mxu0
    %v6216 = vadd.f32 %v6176, %v6215
    %v6217 = vpop.f32.mrf.mxu0
    %v6218 = vpop.f32.mrf.mxu0
    %v6219 = vpop.f32.mrf.mxu0
    %6220 = vdwg.mxu0
    %6221 = vmatprep.subr.bf16.mxu0 0
    %6222 = vmatpush1.bf16.msra.mxu0 %v4484
    %6223 = vmatprep.subr.bf16.mxu0 0
    %6224 = vmatpush1.bf16.msra.mxu0 %v4483
    %6225 = vmatprep.subr.bf16.mxu0 0
    %6226 = vmatpush1.bf16.msra.mxu0 %v4482
    %6227 = vmatprep.subr.bf16.mxu0 0
    %6228 = vmatpush1.bf16.msra.mxu0 %v4481
    %6229 = vmatprep.subr.bf16.mxu0 0
    %6230 = vmatpush1.bf16.msra.mxu0 %v4480
    %6231 = vmatprep.subr.bf16.mxu0 0
    %6232 = vmatpush1.bf16.msra.mxu0 %v4479
    %6233 = vmatprep.subr.bf16.mxu0 0
    %6234 = vmatpush1.bf16.msra.mxu0 %v4478
    %6235 = vmatprep.subr.bf16.mxu0 0
    %6236 = vmatpush1.bf16.msra.mxu0 %v4477
    %6237 = vmatprep.subr.bf16.mxu0 0
    %6238 = vmatpush2.bf16.msra.mxu0 %v4492
    %6239 = vmatprep.subr.bf16.mxu0 0
    %6240 = vmatpush2.bf16.msra.mxu0 %v4491
    %6241 = vmatprep.subr.bf16.mxu0 0
    %6242 = vmatpush2.bf16.msra.mxu0 %v4490
    %6243 = vmatprep.subr.bf16.mxu0 0
    %6244 = vmatpush2.bf16.msra.mxu0 %v4489
    %6245 = vmatprep.subr.bf16.mxu0 0
    %6246 = vmatpush2.bf16.msra.mxu0 %v4488
    %6247 = vmatprep.subr.bf16.mxu0 0
    %6248 = vmatpush2.bf16.msra.mxu0 %v4487
    %6249 = vmatprep.subr.bf16.mxu0 0
    %6250 = vmatpush2.bf16.msra.mxu0 %v4486
    %6251 = vmatprep.subr.bf16.mxu0 0
    %6252 = vmatpush2.bf16.msra.mxu0 %v4485
    %6253 = vmatprep.mubr.bf16.mxu0 %v915
    %6254 = vmatmul.mubr.bf16.gmra.mxu0 %v914
    %v6255 = vpop.f32.mrf.mxu0
    %v6256 = vadd.f32 %v6216, %v6255
    %v6257 = vpop.f32.mrf.mxu0
    %v6258 = vpop.f32.mrf.mxu0
    %v6259 = vpop.f32.mrf.mxu0
    %6260 = vdwg.mxu0
    %6261 = vmatprep.subr.bf16.mxu0 0
    %6262 = vmatpush1.bf16.msra.mxu0 %v4500
    %6263 = vmatprep.subr.bf16.mxu0 0
    %6264 = vmatpush1.bf16.msra.mxu0 %v4499
    %6265 = vmatprep.subr.bf16.mxu0 0
    %6266 = vmatpush1.bf16.msra.mxu0 %v4498
    %6267 = vmatprep.subr.bf16.mxu0 0
    %6268 = vmatpush1.bf16.msra.mxu0 %v4497
    %6269 = vmatprep.subr.bf16.mxu0 0
    %6270 = vmatpush1.bf16.msra.mxu0 %v4496
    %6271 = vmatprep.subr.bf16.mxu0 0
    %6272 = vmatpush1.bf16.msra.mxu0 %v4495
    %6273 = vmatprep.subr.bf16.mxu0 0
    %6274 = vmatpush1.bf16.msra.mxu0 %v4494
    %6275 = vmatprep.subr.bf16.mxu0 0
    %6276 = vmatpush1.bf16.msra.mxu0 %v4493
    %6277 = vmatprep.subr.bf16.mxu0 0
    %6278 = vmatpush2.bf16.msra.mxu0 %v4508
    %6279 = vmatprep.subr.bf16.mxu0 0
    %6280 = vmatpush2.bf16.msra.mxu0 %v4507
    %6281 = vmatprep.subr.bf16.mxu0 0
    %6282 = vmatpush2.bf16.msra.mxu0 %v4506
    %6283 = vmatprep.subr.bf16.mxu0 0
    %6284 = vmatpush2.bf16.msra.mxu0 %v4505
    %6285 = vmatprep.subr.bf16.mxu0 0
    %6286 = vmatpush2.bf16.msra.mxu0 %v4504
    %6287 = vmatprep.subr.bf16.mxu0 0
    %6288 = vmatpush2.bf16.msra.mxu0 %v4503
    %6289 = vmatprep.subr.bf16.mxu0 0
    %6290 = vmatpush2.bf16.msra.mxu0 %v4502
    %6291 = vmatprep.subr.bf16.mxu0 0
    %6292 = vmatpush2.bf16.msra.mxu0 %v4501
    %6293 = vmatprep.mubr.bf16.mxu0 %v917
    %6294 = vmatmul.mubr.bf16.gmra.mxu0 %v916
    %v6295 = vpop.f32.mrf.mxu0
    %v6296 = vadd.f32 %v6256, %v6295
    %v6297 = vpop.f32.mrf.mxu0
    %v6298 = vpop.f32.mrf.mxu0
    %v6299 = vpop.f32.mrf.mxu0
    %6300 = vdwg.mxu0
    %v6301 = vmax.f32 %v6296, 0.0
    %v6302 = vpack.c.bf16 %v6301, %v6301
    %v6303 = vld [vmem:[#allocation8] sm:$0xf]
    %v6304 = vld [vmem:[#allocation8 + $0x4] sm:$0xf]
    %v6305 = vld [vmem:[#allocation8 + $0x8] sm:$0xf]
    %v6306 = vld [vmem:[#allocation8 + $0xc] sm:$0xf]
    %v6307 = vld [vmem:[#allocation8 + $0x10] sm:$0xf]
    %v6308 = vld [vmem:[#allocation8 + $0x14] sm:$0xf]
    %v6309 = vld [vmem:[#allocation8 + $0x18] sm:$0xf]
    %v6310 = vld [vmem:[#allocation8 + $0x1c] sm:$0xf]
    %v6311 = vld [vmem:[#allocation8 + $0x20] sm:$0xf]
    %v6312 = vld [vmem:[#allocation8 + $0x24] sm:$0xf]
    %v6313 = vld [vmem:[#allocation8 + $0x28] sm:$0xf]
    %v6314 = vld [vmem:[#allocation8 + $0x2c] sm:$0xf]
    %v6315 = vld [vmem:[#allocation8 + $0x30] sm:$0xf]
    %v6316 = vld [vmem:[#allocation8 + $0x34] sm:$0xf]
    %v6317 = vld [vmem:[#allocation8 + $0x38] sm:$0xf]
    %v6318 = vld [vmem:[#allocation8 + $0x3c] sm:$0xf]
    %v6319 = vld [vmem:[#allocation10] sm:$0x1]
    %v6321 = vlaneseq
    %v6322 = vshrl.u32 %v6321, 7
    %v6323 = vsub.s32 0, %v6322
    %v6324 = vrot.slane %v6319, %v6323
    %v6342 = vunpack.c.l.b16 %v6303
    %v6343 = vunpack.c.l.b16 %v6304
    %v6344 = vunpack.c.l.b16 %v6305
    %v6345 = vunpack.c.l.b16 %v6306
    %v6346 = vunpack.c.l.b16 %v6307
    %v6347 = vunpack.c.l.b16 %v6308
    %v6348 = vunpack.c.l.b16 %v6309
    %v6349 = vunpack.c.l.b16 %v6310
    %v6350 = vunpack.c.l.b16 %v6311
    %v6351 = vunpack.c.l.b16 %v6312
    %v6352 = vunpack.c.l.b16 %v6313
    %v6353 = vunpack.c.l.b16 %v6314
    %v6354 = vunpack.c.l.b16 %v6315
    %v6355 = vunpack.c.l.b16 %v6316
    %v6356 = vunpack.c.l.b16 %v6317
    %v6357 = vunpack.c.l.b16 %v6318
    %v6358 = vpack.c.b16 %v6343, %v6342
    %v6359 = vpack.c.b16 %v6345, %v6344
    %v6360 = vpack.c.b16 %v6347, %v6346
    %v6361 = vpack.c.b16 %v6349, %v6348
    %v6362 = vpack.c.b16 %v6351, %v6350
    %v6363 = vpack.c.b16 %v6353, %v6352
    %v6364 = vpack.c.b16 %v6355, %v6354
    %v6365 = vpack.c.b16 %v6357, %v6356
    %6374 = vmatprep.subr.bf16.mxu0 0
    %6375 = vmatpush1.bf16.msra.mxu0 %v6365
    %6376 = vmatprep.subr.bf16.mxu0 0
    %6377 = vmatpush1.bf16.msra.mxu0 %v6364
    %6378 = vmatprep.subr.bf16.mxu0 0
    %6379 = vmatpush1.bf16.msra.mxu0 %v6363
    %6380 = vmatprep.subr.bf16.mxu0 0
    %6381 = vmatpush1.bf16.msra.mxu0 %v6362
    %6382 = vmatprep.subr.bf16.mxu0 0
    %6383 = vmatpush1.bf16.msra.mxu0 %v6361
    %6384 = vmatprep.subr.bf16.mxu0 0
    %6385 = vmatpush1.bf16.msra.mxu0 %v6360
    %6386 = vmatprep.subr.bf16.mxu0 0
    %6387 = vmatpush1.bf16.msra.mxu0 %v6359
    %6388 = vmatprep.subr.bf16.mxu0 0
    %6389 = vmatpush1.bf16.msra.mxu0 %v6358
    %6390 = vmatprep.subr.bf16.mxu0 0
    %6391 = vmatpush2.bf16.msra.mxu0 0
    %6392 = vmatprep.subr.bf16.mxu0 0
    %6393 = vmatpush2.bf16.msra.mxu0 0
    %6394 = vmatprep.subr.bf16.mxu0 0
    %6395 = vmatpush2.bf16.msra.mxu0 0
    %6396 = vmatprep.subr.bf16.mxu0 0
    %6397 = vmatpush2.bf16.msra.mxu0 0
    %6398 = vmatprep.subr.bf16.mxu0 0
    %6399 = vmatpush2.bf16.msra.mxu0 0
    %6400 = vmatprep.subr.bf16.mxu0 0
    %6401 = vmatpush2.bf16.msra.mxu0 0
    %6402 = vmatprep.subr.bf16.mxu0 0
    %6403 = vmatpush2.bf16.msra.mxu0 0
    %6404 = vmatprep.subr.bf16.mxu0 0
    %6405 = vmatpush2.bf16.msra.mxu0 0
    %6406 = vmatprep.mubr.bf16.mxu0 0
    %6407 = vmatmul.mubr.bf16.gmra.mxu0 %v6302
    %v6408 = vpop.f32.mrf.mxu0
    %v6409 = vadd.f32 %v6324, %v6408
    %v6410 = vpop.f32.mrf.mxu0
    %v6411 = vpop.f32.mrf.mxu0
    %v6412 = vpop.f32.mrf.mxu0
    %6413 = vdwg.mxu0
    %6414 = vst [vmem:[#allocation11] sm:$0xff] %v6409
    // Predicated region
    $region42: #{tpu_custom_call.1} parent=1 // pred_check
      _
    $region43: #{tpu_custom_call.1} parent=1 // pred_check_branch
      %6416 = sbr.rel (0) target = $region45
    $region44: #{tpu_custom_call.1} parent=1 // pred_region
      %s6418 = ssub.s32 128, 32
      %6419 = vsyncadd [#allocation4], %s6418
      %s6420 = sshll.u32 [#allocation11], 4
      %s6421 = int_to_ptr.vmem [resolvable:$true] %s6420
      %6426 = dma.vmem_to_hbm [thread:$0]  %s6421, 32, %s5, [#allocation4], 32, 32, 2
    $region45: #{tpu_custom_call.1} parent=1 // pred_fallthru
      _
    // Predicated region
    $region46: #{tpu_custom_call.1} parent=1 // pred_check
      _
    $region47: #{tpu_custom_call.1} parent=1 // pred_check_branch
      %6428 = sbr.rel (0) target = $region49
    $region48: #{tpu_custom_call.1} parent=1 // pred_region
      %6429 = dma.done [#allocation4], 128
    $region49: #{tpu_custom_call.1} parent=1 // pred_fallthru
      _
    %6430 = vsyncpa [#allocation3], 1
    %6431 = vsyncpa [#allocation6], 1
    %6432 = vsyncpa [#allocation9], 1
    %6433 = vsyncpa [#allocation4], 1

</llo_original>
